<compile_context>
chip_gen: v7x
topology: tpu7x:2x2x1
jax: 0.10.0
libtpu: 0.0.40
codegen_flags: <defaults>
</compile_context>

<pallas_src>
import jax
import jax.numpy as jnp
from jax.experimental import pallas as pl
from jax.experimental.pallas import tpu as pltpu


def _ms_rb_kernel(x_ref, w1_ref, b1_ref, w2_ref, b2_ref, w4_ref, b4_ref,
                  o_ref, xp_ref):
    # x_ref : (1, C, H, W)   one batch element
    # w1/w2 : (C, 9*C)       im2col-flattened 3x3 weights (Cout, KH*KW*Cin)
    # w4    : (C, C)         1x1 conv weights
    # b*    : (C, 1)
    # o_ref : (1, C, H*W)
    # xp_ref: (C, H+4, W+4)  VMEM scratch for the zero-padded input
    C, H, W = x_ref.shape[1], x_ref.shape[2], x_ref.shape[3]
    HW = H * W
    P = 2  # halo = max(padding) over conv1 (1) and conv2 (2)

    x = x_ref[0]                                   # (C, H, W)

    # Zero-pad in VMEM (no HBM pad pass).
    xp_ref[...] = jnp.zeros_like(xp_ref)
    xp_ref[:, P:P + H, P:P + W] = x
    xp = xp_ref[...]                               # (C, H+4, W+4)

    def im2col(offsets):
        # Build the (9*C, H*W) patch matrix; taps are dh-major, dw, channel
        # innermost -- matches the (Cout, KH, KW, Cin) weight reshape on host.
        rows = []
        for dh in offsets:
            for dw in offsets:
                tap = xp[:, P + dh:P + dh + H, P + dw:P + dw + W]
                rows.append(tap.reshape(C, HW))
        return jnp.concatenate(rows, axis=0)

    p1 = im2col((-1, 0, 1))                        # conv1: dilation 1
    p2 = im2col((-2, 0, 2))                        # conv2: dilation 2

    # One MXU matmul per conv, spatial (H*W) on the lane axis.
    z1 = jnp.dot(w1_ref[...], p1, preferred_element_type=jnp.float32) + b1_ref[...]
    z2 = jnp.dot(w2_ref[...], p2, preferred_element_type=jnp.float32) + b2_ref[...]
    y1 = jnp.where(z1 > 0, z1, 0.01 * z1)          # LeakyReLU(0.01)
    y2 = jnp.where(z2 > 0, z2, 0.01 * z2)
    x3 = y1 + y2                                   # (C, H*W)

    z4 = jnp.dot(w4_ref[...], x3, preferred_element_type=jnp.float32) + b4_ref[...]
    out = z4 + x.reshape(C, HW)                    # residual add
    o_ref[...] = out.reshape(1, C, HW).astype(o_ref.dtype)


@jax.jit
def ms_rb_forward(x_nchw, params):
    """MS_RB.forward.  x_nchw: (N, C, H, W) -> (N, C, H, W)."""
    N, C, H, W = x_nchw.shape
    HW = H * W
    out_flat = pl.pallas_call(
        _ms_rb_kernel,
        out_shape=jax.ShapeDtypeStruct((N, C, HW), x_nchw.dtype),
        grid=(N,),
        in_specs=[
            pl.BlockSpec((1, C, H, W), lambda n: (n, 0, 0, 0)),
            pl.BlockSpec((C, 9 * C), lambda n: (0, 0)),
            pl.BlockSpec((C, 1), lambda n: (0, 0)),
            pl.BlockSpec((C, 9 * C), lambda n: (0, 0)),
            pl.BlockSpec((C, 1), lambda n: (0, 0)),
            pl.BlockSpec((C, C), lambda n: (0, 0)),
            pl.BlockSpec((C, 1), lambda n: (0, 0)),
        ],
        out_specs=pl.BlockSpec((1, C, HW), lambda n: (n, 0, 0)),
        scratch_shapes=[pltpu.VMEM((C, H + 4, W + 4), jnp.float32)],
        compiler_params=pltpu.CompilerParams(dimension_semantics=("parallel",)),
    )(x_nchw, params["w1"], params["b1"], params["w2"], params["b2"],
      params["w4"], params["b4"])
    return out_flat.reshape(N, C, H, W)


def init_raw_params(key, num_feats, dtype=jnp.float32):
    """Deterministic synthetic weights in the PyTorch OIHW layout."""
    C = num_feats
    ks = jax.random.split(key, 6)
    return {
        "w1": 0.1 * jax.random.normal(ks[0], (C, C, 3, 3), dtype),
        "b1": 0.1 * jax.random.normal(ks[1], (C,), dtype),
        "w2": 0.1 * jax.random.normal(ks[2], (C, C, 3, 3), dtype),
        "b2": 0.1 * jax.random.normal(ks[3], (C,), dtype),
        "w4": 0.1 * jax.random.normal(ks[4], (C, C, 1, 1), dtype),
        "b4": 0.1 * jax.random.normal(ks[5], (C,), dtype),
    }


def prepare_params(raw):
    """(Cout, Cin, KH, KW) -> (Cout, KH*KW*Cin), matching the kernel's
    dh-major / dw / channel-innermost im2col stacking."""
    C = raw["w1"].shape[0]
    return {
        "w1": jnp.transpose(raw["w1"], (0, 2, 3, 1)).reshape(C, 9 * C),
        "b1": raw["b1"].reshape(C, 1),
        "w2": jnp.transpose(raw["w2"], (0, 2, 3, 1)).reshape(C, 9 * C),
        "b2": raw["b2"].reshape(C, 1),
        "w4": raw["w4"].reshape(C, C),
        "b4": raw["b4"].reshape(C, 1),
    }


def ms_rb_reference(x, raw):
    """Pure-JAX reference (same semantics as the PyTorch module)."""
    def conv(v, w, b, pad, dil):
        y = jax.lax.conv_general_dilated(
            v, w, window_strides=(1, 1),
            padding=((pad, pad), (pad, pad)),
            rhs_dilation=(dil, dil),
            dimension_numbers=("NCHW", "OIHW", "NCHW"))
        return y + b[None, :, None, None]

    act = lambda v: jnp.where(v > 0, v, 0.01 * v)
    x1 = act(conv(x, raw["w1"], raw["b1"], 1, 1))
    x2 = act(conv(x, raw["w2"], raw["b2"], 2, 2))
    x3 = x1 + x2
    x4 = conv(x3, raw["w4"], raw["b4"], 0, 1)
    return x4 + x


if __name__ == "__main__":
    # Small shapes consistent with the module: N=2, num_feats=4, H=W=16.
    N, C, H, W = 2, 4, 16, 16
    key = jax.random.PRNGKey(0)
    kx, kp = jax.random.split(key)
    x = jax.random.normal(kx, (N, C, H, W), jnp.float32)

    raw = init_raw_params(kp, C)
    params = prepare_params(raw)

    out = ms_rb_forward(x, params)
    jax.block_until_ready(out)
    assert out.shape == (N, C, H, W)

    # Correctness vs. pure-JAX reference.  Loose tolerance because the kernel
    # uses default-precision f32 MXU matmuls (bf16 passes).
    ref = ms_rb_reference(x, raw)
    err = float(jnp.max(jnp.abs(out - ref)))
    assert err < 5e-2, f"max abs err vs reference: {err}"

    print("KERNEL_OK")
</pallas_src>

<mosaic_0001>
module attributes {stable_mosaic.version = 11 : i64} {
  func.func @_ms_rb_kernel(%arg0: i32, %arg1: memref<1x4x16x16xf32, #tpu.memory_space<vmem>>, %arg2: memref<4x36xf32, #tpu.memory_space<vmem>>, %arg3: memref<4x1xf32, #tpu.memory_space<vmem>>, %arg4: memref<4x36xf32, #tpu.memory_space<vmem>>, %arg5: memref<4x1xf32, #tpu.memory_space<vmem>>, %arg6: memref<4x4xf32, #tpu.memory_space<vmem>>, %arg7: memref<4x1xf32, #tpu.memory_space<vmem>>, %arg8: memref<1x4x256xf32, #tpu.memory_space<vmem>>, %arg9: memref<4x20x20xf32, #tpu.memory_space<vmem>>) attributes {dimension_semantics = [#tpu.dimension_semantics<parallel>], iteration_bounds = array<i64: 2>, scalar_prefetch = 0 : i64, scratch_operands = 1 : i64, tpu.core_type = #tpu.core_type<tc>, window_params = [{transform_indices = @transform_0, window_bounds = array<i64: 1, 4, 16, 16>}, {pipeline_mode = #tpu.pipeline_mode<synchronous>, transform_indices = @transform_1, window_bounds = array<i64: 4, 36>}, {pipeline_mode = #tpu.pipeline_mode<synchronous>, transform_indices = @transform_2, window_bounds = array<i64: 4, 1>}, {pipeline_mode = #tpu.pipeline_mode<synchronous>, transform_indices = @transform_3, window_bounds = array<i64: 4, 36>}, {pipeline_mode = #tpu.pipeline_mode<synchronous>, transform_indices = @transform_4, window_bounds = array<i64: 4, 1>}, {pipeline_mode = #tpu.pipeline_mode<synchronous>, transform_indices = @transform_5, window_bounds = array<i64: 4, 4>}, {pipeline_mode = #tpu.pipeline_mode<synchronous>, transform_indices = @transform_6, window_bounds = array<i64: 4, 1>}, {transform_indices = @transform_7, window_bounds = array<i64: 1, 4, 256>}]} {
    %c0 = arith.constant 0 : index
    %c0_0 = arith.constant 0 : index
    %c0_1 = arith.constant 0 : index
    %c0_2 = arith.constant 0 : index
    %0 = vector.load %arg1[%c0, %c0_0, %c0_1, %c0_2] : memref<1x4x16x16xf32, #tpu.memory_space<vmem>>, vector<1x4x16x16xf32>
    %1 = vector.shape_cast %0 : vector<1x4x16x16xf32> to vector<4x16x16xf32>
    %cst = arith.constant 0.000000e+00 : f32
    %2 = vector.broadcast %cst : f32 to vector<4x20x20xf32>
    %c0_3 = arith.constant 0 : index
    %c0_4 = arith.constant 0 : index
    %c0_5 = arith.constant 0 : index
    %3 = vector.load %arg9[%c0_3, %c0_4, %c0_5] : memref<4x20x20xf32, #tpu.memory_space<vmem>>, vector<4x20x20xf32>
    tpu.vector_store %arg9[%c0_3, %c0_4, %c0_5], %2 {strides = array<i32>} : memref<4x20x20xf32, #tpu.memory_space<vmem>>, vector<4x20x20xf32>,
    %c0_6 = arith.constant 0 : index
    %c2 = arith.constant 2 : index
    %c2_7 = arith.constant 2 : index
    %4 = vector.load %arg9[%c0_6, %c2, %c2_7] : memref<4x20x20xf32, #tpu.memory_space<vmem>>, vector<4x16x16xf32>
    tpu.vector_store %arg9[%c0_6, %c2, %c2_7], %1 {strides = array<i32>} : memref<4x20x20xf32, #tpu.memory_space<vmem>>, vector<4x16x16xf32>,
    %c0_8 = arith.constant 0 : index
    %c0_9 = arith.constant 0 : index
    %c0_10 = arith.constant 0 : index
    %5 = vector.load %arg9[%c0_8, %c0_9, %c0_10] : memref<4x20x20xf32, #tpu.memory_space<vmem>>, vector<4x20x20xf32>
    %6 = vector.extract_strided_slice %5 {offsets = [0, 1, 1], sizes = [4, 16, 16], strides = [1, 1, 1]} : vector<4x20x20xf32> to vector<4x16x16xf32>
    %7 = vector.shape_cast %6 : vector<4x16x16xf32> to vector<4x256xf32>
    %8 = vector.extract_strided_slice %5 {offsets = [0, 1, 2], sizes = [4, 16, 16], strides = [1, 1, 1]} : vector<4x20x20xf32> to vector<4x16x16xf32>
    %9 = vector.shape_cast %8 : vector<4x16x16xf32> to vector<4x256xf32>
    %10 = vector.extract_strided_slice %5 {offsets = [0, 1, 3], sizes = [4, 16, 16], strides = [1, 1, 1]} : vector<4x20x20xf32> to vector<4x16x16xf32>
    %11 = vector.shape_cast %10 : vector<4x16x16xf32> to vector<4x256xf32>
    %12 = vector.extract_strided_slice %5 {offsets = [0, 2, 1], sizes = [4, 16, 16], strides = [1, 1, 1]} : vector<4x20x20xf32> to vector<4x16x16xf32>
    %13 = vector.shape_cast %12 : vector<4x16x16xf32> to vector<4x256xf32>
    %14 = vector.extract_strided_slice %5 {offsets = [0, 2, 2], sizes = [4, 16, 16], strides = [1, 1, 1]} : vector<4x20x20xf32> to vector<4x16x16xf32>
    %15 = vector.shape_cast %14 : vector<4x16x16xf32> to vector<4x256xf32>
    %16 = vector.extract_strided_slice %5 {offsets = [0, 2, 3], sizes = [4, 16, 16], strides = [1, 1, 1]} : vector<4x20x20xf32> to vector<4x16x16xf32>
    %17 = vector.shape_cast %16 : vector<4x16x16xf32> to vector<4x256xf32>
    %18 = vector.extract_strided_slice %5 {offsets = [0, 3, 1], sizes = [4, 16, 16], strides = [1, 1, 1]} : vector<4x20x20xf32> to vector<4x16x16xf32>
    %19 = vector.shape_cast %18 : vector<4x16x16xf32> to vector<4x256xf32>
    %20 = vector.extract_strided_slice %5 {offsets = [0, 3, 2], sizes = [4, 16, 16], strides = [1, 1, 1]} : vector<4x20x20xf32> to vector<4x16x16xf32>
    %21 = vector.shape_cast %20 : vector<4x16x16xf32> to vector<4x256xf32>
    %22 = vector.extract_strided_slice %5 {offsets = [0, 3, 3], sizes = [4, 16, 16], strides = [1, 1, 1]} : vector<4x20x20xf32> to vector<4x16x16xf32>
    %23 = vector.shape_cast %22 : vector<4x16x16xf32> to vector<4x256xf32>
    %24 = tpu.concatenate %7, %9, %11, %13, %15, %17, %19, %21, %23 in 0 : vector<4x256xf32>, vector<4x256xf32>, vector<4x256xf32>, vector<4x256xf32>, vector<4x256xf32>, vector<4x256xf32>, vector<4x256xf32>, vector<4x256xf32>, vector<4x256xf32> -> vector<36x256xf32>
    %25 = vector.extract_strided_slice %5 {offsets = [0, 0, 0], sizes = [4, 16, 16], strides = [1, 1, 1]} : vector<4x20x20xf32> to vector<4x16x16xf32>
    %26 = vector.shape_cast %25 : vector<4x16x16xf32> to vector<4x256xf32>
    %27 = vector.extract_strided_slice %5 {offsets = [0, 0, 2], sizes = [4, 16, 16], strides = [1, 1, 1]} : vector<4x20x20xf32> to vector<4x16x16xf32>
    %28 = vector.shape_cast %27 : vector<4x16x16xf32> to vector<4x256xf32>
    %29 = vector.extract_strided_slice %5 {offsets = [0, 0, 4], sizes = [4, 16, 16], strides = [1, 1, 1]} : vector<4x20x20xf32> to vector<4x16x16xf32>
    %30 = vector.shape_cast %29 : vector<4x16x16xf32> to vector<4x256xf32>
    %31 = vector.extract_strided_slice %5 {offsets = [0, 2, 0], sizes = [4, 16, 16], strides = [1, 1, 1]} : vector<4x20x20xf32> to vector<4x16x16xf32>
    %32 = vector.shape_cast %31 : vector<4x16x16xf32> to vector<4x256xf32>
    %33 = vector.extract_strided_slice %5 {offsets = [0, 2, 2], sizes = [4, 16, 16], strides = [1, 1, 1]} : vector<4x20x20xf32> to vector<4x16x16xf32>
    %34 = vector.shape_cast %33 : vector<4x16x16xf32> to vector<4x256xf32>
    %35 = vector.extract_strided_slice %5 {offsets = [0, 2, 4], sizes = [4, 16, 16], strides = [1, 1, 1]} : vector<4x20x20xf32> to vector<4x16x16xf32>
    %36 = vector.shape_cast %35 : vector<4x16x16xf32> to vector<4x256xf32>
    %37 = vector.extract_strided_slice %5 {offsets = [0, 4, 0], sizes = [4, 16, 16], strides = [1, 1, 1]} : vector<4x20x20xf32> to vector<4x16x16xf32>
    %38 = vector.shape_cast %37 : vector<4x16x16xf32> to vector<4x256xf32>
    %39 = vector.extract_strided_slice %5 {offsets = [0, 4, 2], sizes = [4, 16, 16], strides = [1, 1, 1]} : vector<4x20x20xf32> to vector<4x16x16xf32>
    %40 = vector.shape_cast %39 : vector<4x16x16xf32> to vector<4x256xf32>
    %41 = vector.extract_strided_slice %5 {offsets = [0, 4, 4], sizes = [4, 16, 16], strides = [1, 1, 1]} : vector<4x20x20xf32> to vector<4x16x16xf32>
    %42 = vector.shape_cast %41 : vector<4x16x16xf32> to vector<4x256xf32>
    %43 = tpu.concatenate %26, %28, %30, %32, %34, %36, %38, %40, %42 in 0 : vector<4x256xf32>, vector<4x256xf32>, vector<4x256xf32>, vector<4x256xf32>, vector<4x256xf32>, vector<4x256xf32>, vector<4x256xf32>, vector<4x256xf32>, vector<4x256xf32> -> vector<36x256xf32>
    %c0_11 = arith.constant 0 : index
    %c0_12 = arith.constant 0 : index
    %44 = vector.load %arg2[%c0_11, %c0_12] : memref<4x36xf32, #tpu.memory_space<vmem>>, vector<4x36xf32>
    %cst_13 = arith.constant dense<0.000000e+00> : vector<4x256xf32>
    %45 = tpu.matmul %44, %24, %cst_13 {dimension_numbers = #tpu.dot_dimension_numbers<[1], [0], [0], [1], [0, 0, 1, 1], [], []>} : vector<4x36xf32>, vector<36x256xf32>, vector<4x256xf32> -> vector<4x256xf32>
    %c0_14 = arith.constant 0 : index
    %c0_15 = arith.constant 0 : index
    %46 = vector.load %arg3[%c0_14, %c0_15] : memref<4x1xf32, #tpu.memory_space<vmem>>, vector<4x1xf32>
    %47 = vector.broadcast %46 : vector<4x1xf32> to vector<4x256xf32>
    %48 = arith.addf %45, %47 : vector<4x256xf32>
    %c0_16 = arith.constant 0 : index
    %c0_17 = arith.constant 0 : index
    %49 = vector.load %arg4[%c0_16, %c0_17] : memref<4x36xf32, #tpu.memory_space<vmem>>, vector<4x36xf32>
    %cst_18 = arith.constant dense<0.000000e+00> : vector<4x256xf32>
    %50 = tpu.matmul %49, %43, %cst_18 {dimension_numbers = #tpu.dot_dimension_numbers<[1], [0], [0], [1], [0, 0, 1, 1], [], []>} : vector<4x36xf32>, vector<36x256xf32>, vector<4x256xf32> -> vector<4x256xf32>
    %c0_19 = arith.constant 0 : index
    %c0_20 = arith.constant 0 : index
    %51 = vector.load %arg5[%c0_19, %c0_20] : memref<4x1xf32, #tpu.memory_space<vmem>>, vector<4x1xf32>
    %52 = vector.broadcast %51 : vector<4x1xf32> to vector<4x256xf32>
    %53 = arith.addf %50, %52 : vector<4x256xf32>
    %cst_21 = arith.constant 0.000000e+00 : f32
    %54 = vector.broadcast %cst_21 : f32 to vector<4x256xf32>
    %55 = arith.cmpf ogt, %48, %54 : vector<4x256xf32>
    %cst_22 = arith.constant 0.00999999977 : f32
    %56 = vector.broadcast %cst_22 : f32 to vector<4x256xf32>
    %57 = arith.mulf %56, %48 : vector<4x256xf32>
    %58 = arith.select %55, %48, %57 : vector<4x256xi1>, vector<4x256xf32>
    %cst_23 = arith.constant 0.000000e+00 : f32
    %59 = vector.broadcast %cst_23 : f32 to vector<4x256xf32>
    %60 = arith.cmpf ogt, %53, %59 : vector<4x256xf32>
    %cst_24 = arith.constant 0.00999999977 : f32
    %61 = vector.broadcast %cst_24 : f32 to vector<4x256xf32>
    %62 = arith.mulf %61, %53 : vector<4x256xf32>
    %63 = arith.select %60, %53, %62 : vector<4x256xi1>, vector<4x256xf32>
    %64 = arith.addf %58, %63 : vector<4x256xf32>
    %c0_25 = arith.constant 0 : index
    %c0_26 = arith.constant 0 : index
    %65 = vector.load %arg6[%c0_25, %c0_26] : memref<4x4xf32, #tpu.memory_space<vmem>>, vector<4x4xf32>
    %cst_27 = arith.constant dense<0.000000e+00> : vector<4x256xf32>
    %66 = tpu.matmul %65, %64, %cst_27 {dimension_numbers = #tpu.dot_dimension_numbers<[1], [0], [0], [1], [0, 0, 1, 1], [], []>} : vector<4x4xf32>, vector<4x256xf32>, vector<4x256xf32> -> vector<4x256xf32>
    %c0_28 = arith.constant 0 : index
    %c0_29 = arith.constant 0 : index
    %67 = vector.load %arg7[%c0_28, %c0_29] : memref<4x1xf32, #tpu.memory_space<vmem>>, vector<4x1xf32>
    %68 = vector.broadcast %67 : vector<4x1xf32> to vector<4x256xf32>
    %69 = arith.addf %66, %68 : vector<4x256xf32>
    %70 = vector.shape_cast %1 : vector<4x16x16xf32> to vector<4x256xf32>
    %71 = arith.addf %69, %70 : vector<4x256xf32>
    %72 = vector.shape_cast %71 : vector<4x256xf32> to vector<1x4x256xf32>
    %c0_30 = arith.constant 0 : index
    %c0_31 = arith.constant 0 : index
    %c0_32 = arith.constant 0 : index
    %73 = vector.load %arg8[%c0_30, %c0_31, %c0_32] : memref<1x4x256xf32, #tpu.memory_space<vmem>>, vector<1x4x256xf32>
    tpu.vector_store %arg8[%c0_30, %c0_31, %c0_32], %72 {strides = array<i32>} : memref<1x4x256xf32, #tpu.memory_space<vmem>>, vector<1x4x256xf32>,
    return
  }
  func.func @transform_0(%arg0: i32) -> (i32, i32, i32, i32) {
    %c0_i32 = arith.constant 0 : i32
    %c0_i32_0 = arith.constant 0 : i32
    %c0_i32_1 = arith.constant 0 : i32
    %c0_i32_2 = arith.constant 0 : i32
    return %arg0, %c0_i32, %c0_i32_0, %c0_i32_1 : i32, i32, i32, i32
  }
  func.func @transform_1(%arg0: i32) -> (i32, i32) {
    %c0_i32 = arith.constant 0 : i32
    %c0_i32_0 = arith.constant 0 : i32
    %c0_i32_1 = arith.constant 0 : i32
    return %c0_i32, %c0_i32_0 : i32, i32
  }
  func.func @transform_2(%arg0: i32) -> (i32, i32) {
    %c0_i32 = arith.constant 0 : i32
    %c0_i32_0 = arith.constant 0 : i32
    %c0_i32_1 = arith.constant 0 : i32
    return %c0_i32, %c0_i32_0 : i32, i32
  }
  func.func @transform_3(%arg0: i32) -> (i32, i32) {
    %c0_i32 = arith.constant 0 : i32
    %c0_i32_0 = arith.constant 0 : i32
    %c0_i32_1 = arith.constant 0 : i32
    return %c0_i32, %c0_i32_0 : i32, i32
  }
  func.func @transform_4(%arg0: i32) -> (i32, i32) {
    %c0_i32 = arith.constant 0 : i32
    %c0_i32_0 = arith.constant 0 : i32
    %c0_i32_1 = arith.constant 0 : i32
    return %c0_i32, %c0_i32_0 : i32, i32
  }
  func.func @transform_5(%arg0: i32) -> (i32, i32) {
    %c0_i32 = arith.constant 0 : i32
    %c0_i32_0 = arith.constant 0 : i32
    %c0_i32_1 = arith.constant 0 : i32
    return %c0_i32, %c0_i32_0 : i32, i32
  }
  func.func @transform_6(%arg0: i32) -> (i32, i32) {
    %c0_i32 = arith.constant 0 : i32
    %c0_i32_0 = arith.constant 0 : i32
    %c0_i32_1 = arith.constant 0 : i32
    return %c0_i32, %c0_i32_0 : i32, i32
  }
  func.func @transform_7(%arg0: i32) -> (i32, i32, i32) {
    %c0_i32 = arith.constant 0 : i32
    %c0_i32_0 = arith.constant 0 : i32
    %c0_i32_1 = arith.constant 0 : i32
    return %arg0, %c0_i32, %c0_i32_0 : i32, i32, i32
  }
}

</mosaic_0001>

<llo_original>
// kernel: ms_rb_forward.1
$region0: #{ms_rb_forward.1}
  #allocation0 [shape = 'u32[]', space=smem, size = 0x4, offset = 0x4, fixed_abs, tag = 'smem constant byte address 0x4 - core index']
  #allocation1 [shape = 'u32[144,128]{1,0:T(1,128)}', space=vmem, size = 0x12000, scoped, tag = 'internal scratch']
  #allocation2 [shape = 'f32[4,20,20]{2,1,0:T(8,128)}', space=vmem, size = 0xc000, scoped, tag = 'scratch operand']
  %s0 = inlined_call_operand.hbm [shape: f32[2,4,16,16], index: 0, kind: input, shape index: {}]
  %s1 = inlined_call_operand.vmem [shape: f32[4,36], index: 1, kind: input, shape index: {}]
  %s2 = inlined_call_operand.vmem [shape: f32[4,1], index: 2, kind: input, shape index: {}]
  %s3 = inlined_call_operand.vmem [shape: f32[4,36], index: 3, kind: input, shape index: {}]
  %s4 = inlined_call_operand.vmem [shape: f32[4,1], index: 4, kind: input, shape index: {}]
  %s5 = inlined_call_operand.vmem [shape: f32[4,4], index: 5, kind: input, shape index: {}]
  %s6 = inlined_call_operand.vmem [shape: f32[4,1], index: 6, kind: input, shape index: {}]
  %s7 = inlined_call_operand.vmem [shape: f32[2,4,256], index: 7, kind: output, shape index: {}]
  %s8 = sld [smem:[#allocation0]]
  $region65: #{ms_rb_forward.1} parent=0
    _
  %s10 = ssub.s32 1, %s8
  %s11 = scalar_select 0, %s10, %s8
  $region1: #{ms_rb_forward.1} parent=0
    #allocation3 [shape = 'u8[65536]{0}', space=vmem, size = 0x10000, scoped, tag = 'input window, operand 0']
    #allocation4 [shape = 's32[2]{0}', space=sflag, size = 0x8, scoped, tag = 'scoped memory for ms_rb_forward.1']
    %12 = vsyncpa [#allocation4], 0
    %s13 = scalar_lea.sflag [#allocation4], 1
    %14 = vsyncpa %s13, 0
    loop: start=0, step=1, limit=4
    $region2: #{ms_rb_forward.1} parent=1 // loop_pre_header
      _
    $region3: #{ms_rb_forward.1} parent=1 // loop_header
      %s16 = sphi 0, %s20
      %p17 = scmp.ge.s32.totalorder %s16, 4
      %s26 = sphi 0, %s28
      %s29 = sphi 0, %s26
      %s30 = sphi 0, %s29
      %s46 = sphi 0, %s30
      %s50 = sphi 0, %s50
      %s52 = sphi 0, %s50
      %s53 = sphi 0, %s52
      %s67 = sphi 0, %s53
      %s71 = sphi 0, %s71
      %s73 = sphi 0, %s71
      %s74 = sphi 0, %s73
      %s88 = sphi 0, %s74
      %s92 = sphi 0, %s92
      %s94 = sphi 0, %s92
      %s95 = sphi 0, %s94
      %s109 = sphi 0, %s95
      %s113 = sphi 0, %s113
      %s115 = sphi 0, %s113
      %s116 = sphi 0, %s115
      %s130 = sphi 0, %s116
      %s134 = sphi 0, %s134
      %s136 = sphi 0, %s134
      %s137 = sphi 0, %s136
      %s151 = sphi 0, %s137
      %s155 = sphi 0, %s155
      %s157 = sphi 0, %s155
      %s158 = sphi 0, %s157
      %s172 = sphi 0, %s158
      %s178 = sphi 0, %s180
      %s181 = sphi 0, %s178
      %s182 = sphi 0, %s181
      %s198 = sphi 0, %s182
    $region4: #{ms_rb_forward.1} parent=1 // loop_header_branch
      %19 = sbr.rel (%p17) target = $region8
    $region5: #{ms_rb_forward.1} parent=1 // loop_body
      %s21 = ssub.s32 %s16, 1
      %s22 = ssub.s32 %s16, 2
      %s23 = sadd.s32 %s16, 1
      %s24 = ssub.s32 %s16, %s23
      %p25 = scmp.eq.s32.totalorder %s24, 0
      %s27 = sadd.s32 %s26, 1
      %s28 = scalar_select %p25, %s26, %s27
      %p31 = pneg %p25
      %p32 = scmp.eq.s32.totalorder %s16, 1
      %p33 = por %p31, %p32
      %p34 = scmp.ne.s32.totalorder %s26, %s29
      %p35 = scmp.eq.s32.totalorder %s16, 0
      %p36 = por %p34, %p35
      %p37 = scmp.ne.s32.totalorder %s26, %s29
      %p38 = scmp.eq.s32.totalorder %s21, 1
      %p39 = por %p37, %p38
      %p40 = scmp.ne.s32.totalorder %s29, %s30
      %p41 = scmp.eq.s32.totalorder %s21, 0
      %p42 = por %p40, %p41
      %p43 = scmp.ne.s32.totalorder %s29, %s30
      %p44 = scmp.eq.s32.totalorder %s22, 1
      %p45 = por %p43, %p44
      %p47 = scmp.ne.s32.totalorder %s30, %s46
      %p48 = scmp.eq.s32.totalorder %s22, 0
      %p49 = por %p47, %p48
      %s51 = sadd.s32 %s50, 1
      %p54 = scmp.eq.s32.totalorder %s16, 1
      %p55 = scmp.ne.s32.totalorder %s50, %s52
      %p56 = scmp.eq.s32.totalorder %s16, 0
      %p57 = por %p55, %p56
      %p58 = scmp.ne.s32.totalorder %s50, %s52
      %p59 = scmp.eq.s32.totalorder %s21, 1
      %p60 = por %p58, %p59
      %p61 = scmp.ne.s32.totalorder %s52, %s53
      %p62 = scmp.eq.s32.totalorder %s21, 0
      %p63 = por %p61, %p62
      %p64 = scmp.ne.s32.totalorder %s52, %s53
      %p65 = scmp.eq.s32.totalorder %s22, 1
      %p66 = por %p64, %p65
      %p68 = scmp.ne.s32.totalorder %s53, %s67
      %p69 = scmp.eq.s32.totalorder %s22, 0
      %p70 = por %p68, %p69
      %s72 = sadd.s32 %s71, 1
      %p75 = scmp.eq.s32.totalorder %s16, 1
      %p76 = scmp.ne.s32.totalorder %s71, %s73
      %p77 = scmp.eq.s32.totalorder %s16, 0
      %p78 = por %p76, %p77
      %p79 = scmp.ne.s32.totalorder %s71, %s73
      %p80 = scmp.eq.s32.totalorder %s21, 1
      %p81 = por %p79, %p80
      %p82 = scmp.ne.s32.totalorder %s73, %s74
      %p83 = scmp.eq.s32.totalorder %s21, 0
      %p84 = por %p82, %p83
      %p85 = scmp.ne.s32.totalorder %s73, %s74
      %p86 = scmp.eq.s32.totalorder %s22, 1
      %p87 = por %p85, %p86
      %p89 = scmp.ne.s32.totalorder %s74, %s88
      %p90 = scmp.eq.s32.totalorder %s22, 0
      %p91 = por %p89, %p90
      %s93 = sadd.s32 %s92, 1
      %p96 = scmp.eq.s32.totalorder %s16, 1
      %p97 = scmp.ne.s32.totalorder %s92, %s94
      %p98 = scmp.eq.s32.totalorder %s16, 0
      %p99 = por %p97, %p98
      %p100 = scmp.ne.s32.totalorder %s92, %s94
      %p101 = scmp.eq.s32.totalorder %s21, 1
      %p102 = por %p100, %p101
      %p103 = scmp.ne.s32.totalorder %s94, %s95
      %p104 = scmp.eq.s32.totalorder %s21, 0
      %p105 = por %p103, %p104
      %p106 = scmp.ne.s32.totalorder %s94, %s95
      %p107 = scmp.eq.s32.totalorder %s22, 1
      %p108 = por %p106, %p107
      %p110 = scmp.ne.s32.totalorder %s95, %s109
      %p111 = scmp.eq.s32.totalorder %s22, 0
      %p112 = por %p110, %p111
      %s114 = sadd.s32 %s113, 1
      %p117 = scmp.eq.s32.totalorder %s16, 1
      %p118 = scmp.ne.s32.totalorder %s113, %s115
      %p119 = scmp.eq.s32.totalorder %s16, 0
      %p120 = por %p118, %p119
      %p121 = scmp.ne.s32.totalorder %s113, %s115
      %p122 = scmp.eq.s32.totalorder %s21, 1
      %p123 = por %p121, %p122
      %p124 = scmp.ne.s32.totalorder %s115, %s116
      %p125 = scmp.eq.s32.totalorder %s21, 0
      %p126 = por %p124, %p125
      %p127 = scmp.ne.s32.totalorder %s115, %s116
      %p128 = scmp.eq.s32.totalorder %s22, 1
      %p129 = por %p127, %p128
      %p131 = scmp.ne.s32.totalorder %s116, %s130
      %p132 = scmp.eq.s32.totalorder %s22, 0
      %p133 = por %p131, %p132
      %s135 = sadd.s32 %s134, 1
      %p138 = scmp.eq.s32.totalorder %s16, 1
      %p139 = scmp.ne.s32.totalorder %s134, %s136
      %p140 = scmp.eq.s32.totalorder %s16, 0
      %p141 = por %p139, %p140
      %p142 = scmp.ne.s32.totalorder %s134, %s136
      %p143 = scmp.eq.s32.totalorder %s21, 1
      %p144 = por %p142, %p143
      %p145 = scmp.ne.s32.totalorder %s136, %s137
      %p146 = scmp.eq.s32.totalorder %s21, 0
      %p147 = por %p145, %p146
      %p148 = scmp.ne.s32.totalorder %s136, %s137
      %p149 = scmp.eq.s32.totalorder %s22, 1
      %p150 = por %p148, %p149
      %p152 = scmp.ne.s32.totalorder %s137, %s151
      %p153 = scmp.eq.s32.totalorder %s22, 0
      %p154 = por %p152, %p153
      %s156 = sadd.s32 %s155, 1
      %p159 = scmp.eq.s32.totalorder %s16, 1
      %p160 = scmp.ne.s32.totalorder %s155, %s157
      %p161 = scmp.eq.s32.totalorder %s16, 0
      %p162 = por %p160, %p161
      %p163 = scmp.ne.s32.totalorder %s155, %s157
      %p164 = scmp.eq.s32.totalorder %s21, 1
      %p165 = por %p163, %p164
      %p166 = scmp.ne.s32.totalorder %s157, %s158
      %p167 = scmp.eq.s32.totalorder %s21, 0
      %p168 = por %p166, %p167
      %p169 = scmp.ne.s32.totalorder %s157, %s158
      %p170 = scmp.eq.s32.totalorder %s22, 1
      %p171 = por %p169, %p170
      %p173 = scmp.ne.s32.totalorder %s158, %s172
      %p174 = scmp.eq.s32.totalorder %s22, 0
      %p175 = por %p173, %p174
      %s176 = ssub.s32 %s16, %s23
      %p177 = scmp.eq.s32.totalorder %s176, 0
      %s179 = sadd.s32 %s178, 1
      %s180 = scalar_select %p177, %s178, %s179
      %p183 = pneg %p177
      %p184 = scmp.eq.s32.totalorder %s16, 1
      %p185 = por %p183, %p184
      %p186 = scmp.ne.s32.totalorder %s178, %s181
      %p187 = scmp.eq.s32.totalorder %s16, 0
      %p188 = por %p186, %p187
      %p189 = scmp.ne.s32.totalorder %s178, %s181
      %p190 = scmp.eq.s32.totalorder %s21, 1
      %p191 = por %p189, %p190
      %p192 = scmp.ne.s32.totalorder %s181, %s182
      %p193 = scmp.eq.s32.totalorder %s21, 0
      %p194 = por %p192, %p193
      %p195 = scmp.ne.s32.totalorder %s181, %s182
      %p196 = scmp.eq.s32.totalorder %s22, 1
      %p197 = por %p195, %p196
      %p199 = scmp.ne.s32.totalorder %s182, %s198
      %p200 = scmp.eq.s32.totalorder %s22, 0
      %p201 = por %p199, %p200
      %p202 = scmp.le.s32.totalorder 1, %s16
      %p203 = scmp.lt.s32.totalorder %s16, 3
      %p204 = pnand %p202, %p203
      %p205 = pneg %p204
      // Predicated region
      $region9: #{ms_rb_forward.1} parent=5 // pred_check
        _
      $region10: #{ms_rb_forward.1} parent=5 // pred_check_branch
        %207 = sbr.rel (%p204) target = $region12
      $region11: #{ms_rb_forward.1} parent=5 // pred_region
        %s208 = ssub.s32 %s16, 1
        // Predicated region
        $region13: #{ms_rb_forward.1} parent=11 // pred_check
          %p209 = pneg %p63
        $region14: #{ms_rb_forward.1} parent=11 // pred_check_branch
          %211 = sbr.rel (%p209) target = $region16
        $region15: #{ms_rb_forward.1} parent=11 // pred_region
          _
        $region16: #{ms_rb_forward.1} parent=11 // pred_fallthru
          _
        // Predicated region
        $region17: #{ms_rb_forward.1} parent=11 // pred_check
          %p212 = pneg %p84
        $region18: #{ms_rb_forward.1} parent=11 // pred_check_branch
          %214 = sbr.rel (%p212) target = $region20
        $region19: #{ms_rb_forward.1} parent=11 // pred_region
          _
        $region20: #{ms_rb_forward.1} parent=11 // pred_fallthru
          _
        // Predicated region
        $region21: #{ms_rb_forward.1} parent=11 // pred_check
          %p215 = pneg %p105
        $region22: #{ms_rb_forward.1} parent=11 // pred_check_branch
          %217 = sbr.rel (%p215) target = $region24
        $region23: #{ms_rb_forward.1} parent=11 // pred_region
          _
        $region24: #{ms_rb_forward.1} parent=11 // pred_fallthru
          _
        // Predicated region
        $region25: #{ms_rb_forward.1} parent=11 // pred_check
          %p218 = pneg %p126
        $region26: #{ms_rb_forward.1} parent=11 // pred_check_branch
          %220 = sbr.rel (%p218) target = $region28
        $region27: #{ms_rb_forward.1} parent=11 // pred_region
          _
        $region28: #{ms_rb_forward.1} parent=11 // pred_fallthru
          _
        // Predicated region
        $region29: #{ms_rb_forward.1} parent=11 // pred_check
          %p221 = pneg %p147
        $region30: #{ms_rb_forward.1} parent=11 // pred_check_branch
          %223 = sbr.rel (%p221) target = $region32
        $region31: #{ms_rb_forward.1} parent=11 // pred_region
          _
        $region32: #{ms_rb_forward.1} parent=11 // pred_fallthru
          _
        // Predicated region
        $region33: #{ms_rb_forward.1} parent=11 // pred_check
          %p224 = pneg %p168
        $region34: #{ms_rb_forward.1} parent=11 // pred_check_branch
          %226 = sbr.rel (%p224) target = $region36
        $region35: #{ms_rb_forward.1} parent=11 // pred_region
          _
        $region36: #{ms_rb_forward.1} parent=11 // pred_fallthru
          _
      $region12: #{ms_rb_forward.1} parent=5 // pred_fallthru
        _
      %p227 = scmp.lt.s32.totalorder %s16, 2
      // Predicated region
      $region37: #{ms_rb_forward.1} parent=5 // pred_check
        %p228 = pneg %p227
      $region38: #{ms_rb_forward.1} parent=5 // pred_check_branch
        %230 = sbr.rel (%p228) target = $region40
      $region39: #{ms_rb_forward.1} parent=5 // pred_region
        // Predicated region
        $region41: #{ms_rb_forward.1} parent=39 // pred_check
          %p231 = pneg %p36
        $region42: #{ms_rb_forward.1} parent=39 // pred_check_branch
          %233 = sbr.rel (%p231) target = $region44
        $region43: #{ms_rb_forward.1} parent=39 // pred_region
          %s234 = sand.u32 %s26, 1
          %s235 = scalar_lea.sflag [#allocation4], %s234
          %s236 = sand.u32 %s26, 1
          %s237 = smul.addr %s236, 64
          %s238 = scalar_lea.vmem [#allocation3], %s237
          %s240 = ssub.s32 1024, 1024
          %241 = vsyncadd %s235, %s240
          %s242 = smul.addr %s16, 8
          %s243 = smul.addr %s242, 128
          %s244 = scalar_lea.hbm %s0, %s243
          %s245 = sshll.u32 %s238, 4
          %s246 = int_to_ptr.vmem [resolvable:$true] %s245
          %251 = dma.hbm_to_vmem [thread:$0]  %s244, 1024, %s246, %s235, 128, 128, 8
        $region44: #{ms_rb_forward.1} parent=39 // pred_fallthru
          _
      $region40: #{ms_rb_forward.1} parent=5 // pred_fallthru
        _
      %p252 = scmp.le.s32.totalorder 1, %s16
      %p253 = scmp.lt.s32.totalorder %s16, 3
      %p254 = pnand %p252, %p253
      %p255 = pneg %p254
      // Predicated region
      $region45: #{ms_rb_forward.1} parent=5 // pred_check
        _
      $region46: #{ms_rb_forward.1} parent=5 // pred_check_branch
        %257 = sbr.rel (%p254) target = $region48
      $region47: #{ms_rb_forward.1} parent=5 // pred_region
        %s258 = ssub.s32 %s16, 1
        %s259 = sand.u32 %s29, 1
        %s260 = scalar_lea.sflag [#allocation4], %s259
        %s261 = sand.u32 %s29, 1
        %s262 = smul.addr %s261, 64
        %s263 = scalar_lea.vmem [#allocation3], %s262
        // Predicated region
        $region49: #{ms_rb_forward.1} parent=47 // pred_check
          %p264 = pneg %p42
        $region50: #{ms_rb_forward.1} parent=47 // pred_check_branch
          %266 = sbr.rel (%p264) target = $region52
        $region51: #{ms_rb_forward.1} parent=47 // pred_region
          %267 = dma.done %s260, 1024
        $region52: #{ms_rb_forward.1} parent=47 // pred_fallthru
          _
        %s268 = sand.u32 %s29, 1
        %s269 = scalar_lea.sflag [#allocation4], %s268
        %s270 = sand.u32 %s29, 1
        %s271 = smul.addr %s270, 64
        %s272 = scalar_lea.vmem [#allocation3], %s271
        %p273 = pneg %p42
        %p274 = pneg %p39
        %p275 = pneg %p63
        %p276 = pneg %p60
        %p277 = pneg %p84
        %p278 = pneg %p81
        %p279 = pneg %p105
        %p280 = pneg %p102
        %p281 = pneg %p126
        %p282 = pneg %p123
        %p283 = pneg %p147
        %p284 = pneg %p144
        %p285 = pneg %p168
        %p286 = pneg %p165
        %p287 = pneg %p194
        %p288 = pneg %p191
        %p289 = scmp.lt.s32.totalorder %s21, 1
        %s290 = scalar_select %p289, %s21, 1
        %s291 = smul.addr %s290, 2
        %s292 = smul.addr %s291, 4
        %s293 = scalar_lea.vmem %s7, %s292
        %p294 = scmp.lt.s32.totalorder %s21, 1
        %s295 = scalar_select %p294, %s21, 1
        %s296 = smul.addr %s295, 2
        %s297 = smul.addr %s296, 4
        %s298 = scalar_lea.vmem %s7, %s297
        %v299 = vld [vmem:[%s263] sm:$0xff]
        %v300 = vld [vmem:[%s263 + $0x8] sm:$0xff]
        %v301 = vld [vmem:[%s263 + $0x10] sm:$0xff]
        %v302 = vld [vmem:[%s263 + $0x18] sm:$0xff]
        %v303 = vld [vmem:[%s263 + $0x20] sm:$0xff]
        %v304 = vld [vmem:[%s263 + $0x28] sm:$0xff]
        %v305 = vld [vmem:[%s263 + $0x30] sm:$0xff]
        %v306 = vld [vmem:[%s263 + $0x38] sm:$0xff]
        %vm307 = vcmask 162816
        %308 = vst.msk [vmem:[#allocation2] sm:$0xff] %vm307, 0.0
        %309 = vst.msk [vmem:[#allocation2 + $0x8] sm:$0xff] %vm307, 0.0
        %vm310 = vcmask 158720
        %311 = vst.msk [vmem:[#allocation2 + $0x10] sm:$0xf] %vm310, 0.0
        %312 = vst.msk [vmem:[#allocation2 + $0x18] sm:$0xff] %vm307, 0.0
        %313 = vst.msk [vmem:[#allocation2 + $0x20] sm:$0xff] %vm307, 0.0
        %314 = vst.msk [vmem:[#allocation2 + $0x28] sm:$0xf] %vm310, 0.0
        %315 = vst.msk [vmem:[#allocation2 + $0x30] sm:$0xff] %vm307, 0.0
        %316 = vst.msk [vmem:[#allocation2 + $0x38] sm:$0xff] %vm307, 0.0
        %317 = vst.msk [vmem:[#allocation2 + $0x40] sm:$0xf] %vm310, 0.0
        %318 = vst.msk [vmem:[#allocation2 + $0x48] sm:$0xff] %vm307, 0.0
        %319 = vst.msk [vmem:[#allocation2 + $0x50] sm:$0xff] %vm307, 0.0
        %320 = vst.msk [vmem:[#allocation2 + $0x58] sm:$0xf] %vm310, 0.0
        %329 = vrot.lane.b32.xlu0 %v299, 2
        %v330 = vpop.permute.xlu0 %329
        %331 = vrot.lane.b32.xlu0 %v300, 2
        %v332 = vpop.permute.xlu0 %331
        %333 = vrot.lane.b32.xlu0 %v301, 2
        %v334 = vpop.permute.xlu0 %333
        %335 = vrot.lane.b32.xlu0 %v302, 2
        %v336 = vpop.permute.xlu0 %335
        %337 = vrot.lane.b32.xlu0 %v303, 2
        %v338 = vpop.permute.xlu0 %337
        %339 = vrot.lane.b32.xlu0 %v304, 2
        %v340 = vpop.permute.xlu0 %339
        %341 = vrot.lane.b32.xlu0 %v305, 2
        %v342 = vpop.permute.xlu0 %341
        %343 = vrot.lane.b32.xlu0 %v306, 2
        %v344 = vpop.permute.xlu0 %343
        %vm353 = vcmask 146448
        %354 = vst.msk [vmem:[#allocation2 + $0x2] sm:$0xff] %vm353, %v330
        %355 = vst.msk [vmem:[#allocation2 + $0xa] sm:$0xff] %vm353, %v332
        %356 = vst.msk [vmem:[#allocation2 + $0x1a] sm:$0xff] %vm353, %v334
        %357 = vst.msk [vmem:[#allocation2 + $0x22] sm:$0xff] %vm353, %v336
        %358 = vst.msk [vmem:[#allocation2 + $0x32] sm:$0xff] %vm353, %v338
        %359 = vst.msk [vmem:[#allocation2 + $0x3a] sm:$0xff] %vm353, %v340
        %360 = vst.msk [vmem:[#allocation2 + $0x4a] sm:$0xff] %vm353, %v342
        %361 = vst.msk [vmem:[#allocation2 + $0x52] sm:$0xff] %vm353, %v344
        %v362 = vld [vmem:[#allocation2] sm:$0xff]
        %v363 = vld [vmem:[#allocation2 + $0x8] sm:$0xff]
        %v364 = vld [vmem:[#allocation2 + $0x10] sm:$0xf]
        %v365 = vld [vmem:[#allocation2 + $0x18] sm:$0xff]
        %v366 = vld [vmem:[#allocation2 + $0x20] sm:$0xff]
        %v367 = vld [vmem:[#allocation2 + $0x28] sm:$0xf]
        %v368 = vld [vmem:[#allocation2 + $0x30] sm:$0xff]
        %v369 = vld [vmem:[#allocation2 + $0x38] sm:$0xff]
        %v370 = vld [vmem:[#allocation2 + $0x40] sm:$0xf]
        %v371 = vld [vmem:[#allocation2 + $0x48] sm:$0xff]
        %v372 = vld [vmem:[#allocation2 + $0x50] sm:$0xff]
        %v373 = vld [vmem:[#allocation2 + $0x58] sm:$0xf]
        %vm386 = vcmask 1046528
        %v387 = vrot.slane %v362, 1
        %v388 = vrot.slane %v363, 1
        %v389 = vsel %vm386, %v387, %v388
        %v390 = vrot.slane %v364, 1
        %v391 = vsel %vm386, %v388, %v390
        %v392 = vrot.slane %v365, 1
        %v393 = vrot.slane %v366, 1
        %v394 = vsel %vm386, %v392, %v393
        %v395 = vrot.slane %v367, 1
        %v396 = vsel %vm386, %v393, %v395
        %v397 = vrot.slane %v368, 1
        %v398 = vrot.slane %v369, 1
        %v399 = vsel %vm386, %v397, %v398
        %v400 = vrot.slane %v370, 1
        %v401 = vsel %vm386, %v398, %v400
        %v402 = vrot.slane %v371, 1
        %v403 = vrot.slane %v372, 1
        %v404 = vsel %vm386, %v402, %v403
        %v405 = vrot.slane %v373, 1
        %v406 = vsel %vm386, %v403, %v405
        %407 = vrot.lane.b32.xlu0 %v389, 127
        %v408 = vpop.permute.xlu0 %407
        %409 = vrot.lane.b32.xlu0 %v391, 127
        %v410 = vpop.permute.xlu0 %409
        %411 = vrot.lane.b32.xlu0 %v394, 127
        %v412 = vpop.permute.xlu0 %411
        %413 = vrot.lane.b32.xlu0 %v396, 127
        %v414 = vpop.permute.xlu0 %413
        %415 = vrot.lane.b32.xlu0 %v399, 127
        %v416 = vpop.permute.xlu0 %415
        %417 = vrot.lane.b32.xlu0 %v401, 127
        %v418 = vpop.permute.xlu0 %417
        %419 = vrot.lane.b32.xlu0 %v404, 127
        %v420 = vpop.permute.xlu0 %419
        %421 = vrot.lane.b32.xlu0 %v406, 127
        %v422 = vpop.permute.xlu0 %421
        %v431 = vcombine.low %v408, %v416
        %v432 = vcombine.high %v408, %v416
        %v434 = vunpack.c.l.s4 1983009808
        %v435 = vunpack.c.0.s8 %v434
        %v436 = vlaneseq
        %v437 = vshrl.u32 %v436, 7
        %v438 = vsub.s32 %v435, %v437
        %v439 = vrot.slane %v431, %v438
        %v441 = vunpack.c.l.s4 1983009808
        %v442 = vunpack.c.0.s8 %v441
        %v443 = vlaneseq
        %v444 = vshrl.u32 %v443, 7
        %v445 = vsub.s32 %v442, %v444
        %v446 = vrot.slane %v432, %v445
        %v447 = vcombine.low %v412, %v420
        %v448 = vcombine.high %v412, %v420
        %v450 = vunpack.c.l.s4 1983009808
        %v451 = vunpack.c.0.s8 %v450
        %v452 = vlaneseq
        %v453 = vshrl.u32 %v452, 7
        %v454 = vsub.s32 %v451, %v453
        %v455 = vrot.slane %v447, %v454
        %v457 = vunpack.c.l.s4 1983009808
        %v458 = vunpack.c.0.s8 %v457
        %v459 = vlaneseq
        %v460 = vshrl.u32 %v459, 7
        %v461 = vsub.s32 %v458, %v460
        %v462 = vrot.slane %v448, %v461
        %v463 = vcombine.low %v439, %v455
        %v464 = vcombine.high %v439, %v455
        %v466 = vunpack.c.l.s4 1934713408
        %v467 = vunpack.c.0.s8 %v466
        %v468 = vlaneseq
        %v469 = vshrl.u32 %v468, 7
        %v470 = vsub.s32 %v467, %v469
        %v471 = vrot.slane %v463, %v470
        %v473 = vunpack.c.l.s4 1934713408
        %v474 = vunpack.c.0.s8 %v473
        %v475 = vlaneseq
        %v476 = vshrl.u32 %v475, 7
        %v477 = vsub.s32 %v474, %v476
        %v478 = vrot.slane %v464, %v477
        %v479 = vcombine.low %v446, %v462
        %v480 = vcombine.high %v446, %v462
        %v482 = vunpack.c.l.s4 1934713408
        %v483 = vunpack.c.0.s8 %v482
        %v484 = vlaneseq
        %v485 = vshrl.u32 %v484, 7
        %v486 = vsub.s32 %v483, %v485
        %v487 = vrot.slane %v479, %v486
        %v489 = vunpack.c.l.s4 1934713408
        %v490 = vunpack.c.0.s8 %v489
        %v491 = vlaneseq
        %v492 = vshrl.u32 %v491, 7
        %v493 = vsub.s32 %v490, %v492
        %v494 = vrot.slane %v480, %v493
        %v495 = vcombine.high %v471, 0.0
        %v496 = vcombine.high %v478, 0.0
        %v497 = vcombine.high %v487, 0.0
        %v498 = vcombine.high %v494, 0.0
        %v499 = vcombine.low %v410, %v418
        %v500 = vcombine.high %v410, %v418
        %v502 = vunpack.c.l.s4 1983009808
        %v503 = vunpack.c.0.s8 %v502
        %v504 = vlaneseq
        %v505 = vshrl.u32 %v504, 7
        %v506 = vsub.s32 %v503, %v505
        %v507 = vrot.slane %v499, %v506
        %v509 = vunpack.c.l.s4 1983009808
        %v510 = vunpack.c.0.s8 %v509
        %v511 = vlaneseq
        %v512 = vshrl.u32 %v511, 7
        %v513 = vsub.s32 %v510, %v512
        %v514 = vrot.slane %v500, %v513
        %v515 = vcombine.low %v414, %v422
        %v516 = vcombine.high %v414, %v422
        %v518 = vunpack.c.l.s4 1983009808
        %v519 = vunpack.c.0.s8 %v518
        %v520 = vlaneseq
        %v521 = vshrl.u32 %v520, 7
        %v522 = vsub.s32 %v519, %v521
        %v523 = vrot.slane %v515, %v522
        %v525 = vunpack.c.l.s4 1983009808
        %v526 = vunpack.c.0.s8 %v525
        %v527 = vlaneseq
        %v528 = vshrl.u32 %v527, 7
        %v529 = vsub.s32 %v526, %v528
        %v530 = vrot.slane %v516, %v529
        %v531 = vcombine.low %v507, %v523
        %v532 = vcombine.high %v507, %v523
        %v534 = vunpack.c.l.s4 1934713408
        %v535 = vunpack.c.0.s8 %v534
        %v536 = vlaneseq
        %v537 = vshrl.u32 %v536, 7
        %v538 = vsub.s32 %v535, %v537
        %v539 = vrot.slane %v531, %v538
        %v541 = vunpack.c.l.s4 1934713408
        %v542 = vunpack.c.0.s8 %v541
        %v543 = vlaneseq
        %v544 = vshrl.u32 %v543, 7
        %v545 = vsub.s32 %v542, %v544
        %v546 = vrot.slane %v532, %v545
        %v547 = vcombine.low %v514, %v530
        %v548 = vcombine.high %v514, %v530
        %v550 = vunpack.c.l.s4 1934713408
        %v551 = vunpack.c.0.s8 %v550
        %v552 = vlaneseq
        %v553 = vshrl.u32 %v552, 7
        %v554 = vsub.s32 %v551, %v553
        %v555 = vrot.slane %v547, %v554
        %v557 = vunpack.c.l.s4 1934713408
        %v558 = vunpack.c.0.s8 %v557
        %v559 = vlaneseq
        %v560 = vshrl.u32 %v559, 7
        %v561 = vsub.s32 %v558, %v560
        %v562 = vrot.slane %v548, %v561
        %v563 = vcombine.high %v539, 0.0
        %v564 = vcombine.high %v546, 0.0
        %v565 = vcombine.high %v555, 0.0
        %v566 = vcombine.high %v562, 0.0
        %568 = vrot.lane.b32.xlu0 %v495, 16
        %v569 = vpop.permute.xlu0 %568
        %572 = vrot.lane.b32.xlu0 %v478, 32
        %v573 = vpop.permute.xlu0 %572
        %576 = vrot.lane.b32.xlu0 %v496, 48
        %v577 = vpop.permute.xlu0 %576
        %580 = vrot.lane.b32.xlu0 %v487, 64
        %v581 = vpop.permute.xlu0 %580
        %584 = vrot.lane.b32.xlu0 %v497, 80
        %v585 = vpop.permute.xlu0 %584
        %588 = vrot.lane.b32.xlu0 %v494, 96
        %v589 = vpop.permute.xlu0 %588
        %592 = vrot.lane.b32.xlu0 %v498, 112
        %v593 = vpop.permute.xlu0 %592
        %596 = vrot.lane.b32.xlu0 %v563, 16
        %v597 = vpop.permute.xlu0 %596
        %600 = vrot.lane.b32.xlu0 %v546, 32
        %v601 = vpop.permute.xlu0 %600
        %604 = vrot.lane.b32.xlu0 %v564, 48
        %v605 = vpop.permute.xlu0 %604
        %608 = vrot.lane.b32.xlu0 %v555, 64
        %v609 = vpop.permute.xlu0 %608
        %612 = vrot.lane.b32.xlu0 %v565, 80
        %v613 = vpop.permute.xlu0 %612
        %616 = vrot.lane.b32.xlu0 %v562, 96
        %v617 = vpop.permute.xlu0 %616
        %620 = vrot.lane.b32.xlu0 %v566, 112
        %v621 = vpop.permute.xlu0 %620
        %vm623 = vcmask 130048
        %v624 = vsel %vm623, %v471, %v569
        %vm625 = vcmask 261120
        %v626 = vsel %vm625, %v624, %v573
        %vm627 = vcmask 392192
        %v628 = vsel %vm627, %v626, %v577
        %vm629 = vcmask 523264
        %v630 = vsel %vm629, %v628, %v581
        %vm631 = vcmask 654336
        %v632 = vsel %vm631, %v630, %v585
        %vm633 = vcmask 785408
        %v634 = vsel %vm633, %v632, %v589
        %vm635 = vcmask 916480
        %v636 = vsel %vm635, %v634, %v593
        %v637 = vsel %vm623, %v539, %v597
        %v638 = vsel %vm625, %v637, %v601
        %v639 = vsel %vm627, %v638, %v605
        %v640 = vsel %vm629, %v639, %v609
        %v641 = vsel %vm631, %v640, %v613
        %v642 = vsel %vm633, %v641, %v617
        %v643 = vsel %vm635, %v642, %v621
        %644 = vrot.lane.b32.xlu0 %v389, 126
        %v645 = vpop.permute.xlu0 %644
        %646 = vrot.lane.b32.xlu0 %v391, 126
        %v647 = vpop.permute.xlu0 %646
        %648 = vrot.lane.b32.xlu0 %v394, 126
        %v649 = vpop.permute.xlu0 %648
        %650 = vrot.lane.b32.xlu0 %v396, 126
        %v651 = vpop.permute.xlu0 %650
        %652 = vrot.lane.b32.xlu0 %v399, 126
        %v653 = vpop.permute.xlu0 %652
        %654 = vrot.lane.b32.xlu0 %v401, 126
        %v655 = vpop.permute.xlu0 %654
        %656 = vrot.lane.b32.xlu0 %v404, 126
        %v657 = vpop.permute.xlu0 %656
        %658 = vrot.lane.b32.xlu0 %v406, 126
        %v659 = vpop.permute.xlu0 %658
        %v668 = vcombine.low %v645, %v653
        %v669 = vcombine.high %v645, %v653
        %v671 = vunpack.c.l.s4 1983009808
        %v672 = vunpack.c.0.s8 %v671
        %v673 = vlaneseq
        %v674 = vshrl.u32 %v673, 7
        %v675 = vsub.s32 %v672, %v674
        %v676 = vrot.slane %v668, %v675
        %v678 = vunpack.c.l.s4 1983009808
        %v679 = vunpack.c.0.s8 %v678
        %v680 = vlaneseq
        %v681 = vshrl.u32 %v680, 7
        %v682 = vsub.s32 %v679, %v681
        %v683 = vrot.slane %v669, %v682
        %v684 = vcombine.low %v649, %v657
        %v685 = vcombine.high %v649, %v657
        %v687 = vunpack.c.l.s4 1983009808
        %v688 = vunpack.c.0.s8 %v687
        %v689 = vlaneseq
        %v690 = vshrl.u32 %v689, 7
        %v691 = vsub.s32 %v688, %v690
        %v692 = vrot.slane %v684, %v691
        %v694 = vunpack.c.l.s4 1983009808
        %v695 = vunpack.c.0.s8 %v694
        %v696 = vlaneseq
        %v697 = vshrl.u32 %v696, 7
        %v698 = vsub.s32 %v695, %v697
        %v699 = vrot.slane %v685, %v698
        %v700 = vcombine.low %v676, %v692
        %v701 = vcombine.high %v676, %v692
        %v703 = vunpack.c.l.s4 1934713408
        %v704 = vunpack.c.0.s8 %v703
        %v705 = vlaneseq
        %v706 = vshrl.u32 %v705, 7
        %v707 = vsub.s32 %v704, %v706
        %v708 = vrot.slane %v700, %v707
        %v710 = vunpack.c.l.s4 1934713408
        %v711 = vunpack.c.0.s8 %v710
        %v712 = vlaneseq
        %v713 = vshrl.u32 %v712, 7
        %v714 = vsub.s32 %v711, %v713
        %v715 = vrot.slane %v701, %v714
        %v716 = vcombine.low %v683, %v699
        %v717 = vcombine.high %v683, %v699
        %v719 = vunpack.c.l.s4 1934713408
        %v720 = vunpack.c.0.s8 %v719
        %v721 = vlaneseq
        %v722 = vshrl.u32 %v721, 7
        %v723 = vsub.s32 %v720, %v722
        %v724 = vrot.slane %v716, %v723
        %v726 = vunpack.c.l.s4 1934713408
        %v727 = vunpack.c.0.s8 %v726
        %v728 = vlaneseq
        %v729 = vshrl.u32 %v728, 7
        %v730 = vsub.s32 %v727, %v729
        %v731 = vrot.slane %v717, %v730
        %v732 = vcombine.high %v708, 0.0
        %v733 = vcombine.high %v715, 0.0
        %v734 = vcombine.high %v724, 0.0
        %v735 = vcombine.high %v731, 0.0
        %v736 = vcombine.low %v647, %v655
        %v737 = vcombine.high %v647, %v655
        %v739 = vunpack.c.l.s4 1983009808
        %v740 = vunpack.c.0.s8 %v739
        %v741 = vlaneseq
        %v742 = vshrl.u32 %v741, 7
        %v743 = vsub.s32 %v740, %v742
        %v744 = vrot.slane %v736, %v743
        %v746 = vunpack.c.l.s4 1983009808
        %v747 = vunpack.c.0.s8 %v746
        %v748 = vlaneseq
        %v749 = vshrl.u32 %v748, 7
        %v750 = vsub.s32 %v747, %v749
        %v751 = vrot.slane %v737, %v750
        %v752 = vcombine.low %v651, %v659
        %v753 = vcombine.high %v651, %v659
        %v755 = vunpack.c.l.s4 1983009808
        %v756 = vunpack.c.0.s8 %v755
        %v757 = vlaneseq
        %v758 = vshrl.u32 %v757, 7
        %v759 = vsub.s32 %v756, %v758
        %v760 = vrot.slane %v752, %v759
        %v762 = vunpack.c.l.s4 1983009808
        %v763 = vunpack.c.0.s8 %v762
        %v764 = vlaneseq
        %v765 = vshrl.u32 %v764, 7
        %v766 = vsub.s32 %v763, %v765
        %v767 = vrot.slane %v753, %v766
        %v768 = vcombine.low %v744, %v760
        %v769 = vcombine.high %v744, %v760
        %v771 = vunpack.c.l.s4 1934713408
        %v772 = vunpack.c.0.s8 %v771
        %v773 = vlaneseq
        %v774 = vshrl.u32 %v773, 7
        %v775 = vsub.s32 %v772, %v774
        %v776 = vrot.slane %v768, %v775
        %v778 = vunpack.c.l.s4 1934713408
        %v779 = vunpack.c.0.s8 %v778
        %v780 = vlaneseq
        %v781 = vshrl.u32 %v780, 7
        %v782 = vsub.s32 %v779, %v781
        %v783 = vrot.slane %v769, %v782
        %v784 = vcombine.low %v751, %v767
        %v785 = vcombine.high %v751, %v767
        %v787 = vunpack.c.l.s4 1934713408
        %v788 = vunpack.c.0.s8 %v787
        %v789 = vlaneseq
        %v790 = vshrl.u32 %v789, 7
        %v791 = vsub.s32 %v788, %v790
        %v792 = vrot.slane %v784, %v791
        %v794 = vunpack.c.l.s4 1934713408
        %v795 = vunpack.c.0.s8 %v794
        %v796 = vlaneseq
        %v797 = vshrl.u32 %v796, 7
        %v798 = vsub.s32 %v795, %v797
        %v799 = vrot.slane %v785, %v798
        %v800 = vcombine.high %v776, 0.0
        %v801 = vcombine.high %v783, 0.0
        %v802 = vcombine.high %v792, 0.0
        %v803 = vcombine.high %v799, 0.0
        %805 = vrot.lane.b32.xlu0 %v732, 16
        %v806 = vpop.permute.xlu0 %805
        %809 = vrot.lane.b32.xlu0 %v715, 32
        %v810 = vpop.permute.xlu0 %809
        %813 = vrot.lane.b32.xlu0 %v733, 48
        %v814 = vpop.permute.xlu0 %813
        %817 = vrot.lane.b32.xlu0 %v724, 64
        %v818 = vpop.permute.xlu0 %817
        %821 = vrot.lane.b32.xlu0 %v734, 80
        %v822 = vpop.permute.xlu0 %821
        %825 = vrot.lane.b32.xlu0 %v731, 96
        %v826 = vpop.permute.xlu0 %825
        %829 = vrot.lane.b32.xlu0 %v735, 112
        %v830 = vpop.permute.xlu0 %829
        %833 = vrot.lane.b32.xlu0 %v800, 16
        %v834 = vpop.permute.xlu0 %833
        %837 = vrot.lane.b32.xlu0 %v783, 32
        %v838 = vpop.permute.xlu0 %837
        %841 = vrot.lane.b32.xlu0 %v801, 48
        %v842 = vpop.permute.xlu0 %841
        %845 = vrot.lane.b32.xlu0 %v792, 64
        %v846 = vpop.permute.xlu0 %845
        %849 = vrot.lane.b32.xlu0 %v802, 80
        %v850 = vpop.permute.xlu0 %849
        %853 = vrot.lane.b32.xlu0 %v799, 96
        %v854 = vpop.permute.xlu0 %853
        %857 = vrot.lane.b32.xlu0 %v803, 112
        %v858 = vpop.permute.xlu0 %857
        %v860 = vsel %vm623, %v708, %v806
        %v861 = vsel %vm625, %v860, %v810
        %v862 = vsel %vm627, %v861, %v814
        %v863 = vsel %vm629, %v862, %v818
        %v864 = vsel %vm631, %v863, %v822
        %v865 = vsel %vm633, %v864, %v826
        %v866 = vsel %vm635, %v865, %v830
        %v867 = vsel %vm623, %v776, %v834
        %v868 = vsel %vm625, %v867, %v838
        %v869 = vsel %vm627, %v868, %v842
        %v870 = vsel %vm629, %v869, %v846
        %v871 = vsel %vm631, %v870, %v850
        %v872 = vsel %vm633, %v871, %v854
        %v873 = vsel %vm635, %v872, %v858
        %874 = vrot.lane.b32.xlu0 %v389, 125
        %v875 = vpop.permute.xlu0 %874
        %876 = vrot.lane.b32.xlu0 %v391, 125
        %v877 = vpop.permute.xlu0 %876
        %878 = vrot.lane.b32.xlu0 %v394, 125
        %v879 = vpop.permute.xlu0 %878
        %880 = vrot.lane.b32.xlu0 %v396, 125
        %v881 = vpop.permute.xlu0 %880
        %882 = vrot.lane.b32.xlu0 %v399, 125
        %v883 = vpop.permute.xlu0 %882
        %884 = vrot.lane.b32.xlu0 %v401, 125
        %v885 = vpop.permute.xlu0 %884
        %886 = vrot.lane.b32.xlu0 %v404, 125
        %v887 = vpop.permute.xlu0 %886
        %888 = vrot.lane.b32.xlu0 %v406, 125
        %v889 = vpop.permute.xlu0 %888
        %v898 = vcombine.low %v875, %v883
        %v899 = vcombine.high %v875, %v883
        %v901 = vunpack.c.l.s4 1983009808
        %v902 = vunpack.c.0.s8 %v901
        %v903 = vlaneseq
        %v904 = vshrl.u32 %v903, 7
        %v905 = vsub.s32 %v902, %v904
        %v906 = vrot.slane %v898, %v905
        %v908 = vunpack.c.l.s4 1983009808
        %v909 = vunpack.c.0.s8 %v908
        %v910 = vlaneseq
        %v911 = vshrl.u32 %v910, 7
        %v912 = vsub.s32 %v909, %v911
        %v913 = vrot.slane %v899, %v912
        %v914 = vcombine.low %v879, %v887
        %v915 = vcombine.high %v879, %v887
        %v917 = vunpack.c.l.s4 1983009808
        %v918 = vunpack.c.0.s8 %v917
        %v919 = vlaneseq
        %v920 = vshrl.u32 %v919, 7
        %v921 = vsub.s32 %v918, %v920
        %v922 = vrot.slane %v914, %v921
        %v924 = vunpack.c.l.s4 1983009808
        %v925 = vunpack.c.0.s8 %v924
        %v926 = vlaneseq
        %v927 = vshrl.u32 %v926, 7
        %v928 = vsub.s32 %v925, %v927
        %v929 = vrot.slane %v915, %v928
        %v930 = vcombine.low %v906, %v922
        %v931 = vcombine.high %v906, %v922
        %v933 = vunpack.c.l.s4 1934713408
        %v934 = vunpack.c.0.s8 %v933
        %v935 = vlaneseq
        %v936 = vshrl.u32 %v935, 7
        %v937 = vsub.s32 %v934, %v936
        %v938 = vrot.slane %v930, %v937
        %v940 = vunpack.c.l.s4 1934713408
        %v941 = vunpack.c.0.s8 %v940
        %v942 = vlaneseq
        %v943 = vshrl.u32 %v942, 7
        %v944 = vsub.s32 %v941, %v943
        %v945 = vrot.slane %v931, %v944
        %v946 = vcombine.low %v913, %v929
        %v947 = vcombine.high %v913, %v929
        %v949 = vunpack.c.l.s4 1934713408
        %v950 = vunpack.c.0.s8 %v949
        %v951 = vlaneseq
        %v952 = vshrl.u32 %v951, 7
        %v953 = vsub.s32 %v950, %v952
        %v954 = vrot.slane %v946, %v953
        %v956 = vunpack.c.l.s4 1934713408
        %v957 = vunpack.c.0.s8 %v956
        %v958 = vlaneseq
        %v959 = vshrl.u32 %v958, 7
        %v960 = vsub.s32 %v957, %v959
        %v961 = vrot.slane %v947, %v960
        %v962 = vcombine.high %v938, 0.0
        %v963 = vcombine.high %v945, 0.0
        %v964 = vcombine.high %v954, 0.0
        %v965 = vcombine.high %v961, 0.0
        %v966 = vcombine.low %v877, %v885
        %v967 = vcombine.high %v877, %v885
        %v969 = vunpack.c.l.s4 1983009808
        %v970 = vunpack.c.0.s8 %v969
        %v971 = vlaneseq
        %v972 = vshrl.u32 %v971, 7
        %v973 = vsub.s32 %v970, %v972
        %v974 = vrot.slane %v966, %v973
        %v976 = vunpack.c.l.s4 1983009808
        %v977 = vunpack.c.0.s8 %v976
        %v978 = vlaneseq
        %v979 = vshrl.u32 %v978, 7
        %v980 = vsub.s32 %v977, %v979
        %v981 = vrot.slane %v967, %v980
        %v982 = vcombine.low %v881, %v889
        %v983 = vcombine.high %v881, %v889
        %v985 = vunpack.c.l.s4 1983009808
        %v986 = vunpack.c.0.s8 %v985
        %v987 = vlaneseq
        %v988 = vshrl.u32 %v987, 7
        %v989 = vsub.s32 %v986, %v988
        %v990 = vrot.slane %v982, %v989
        %v992 = vunpack.c.l.s4 1983009808
        %v993 = vunpack.c.0.s8 %v992
        %v994 = vlaneseq
        %v995 = vshrl.u32 %v994, 7
        %v996 = vsub.s32 %v993, %v995
        %v997 = vrot.slane %v983, %v996
        %v998 = vcombine.low %v974, %v990
        %v999 = vcombine.high %v974, %v990
        %v1001 = vunpack.c.l.s4 1934713408
        %v1002 = vunpack.c.0.s8 %v1001
        %v1003 = vlaneseq
        %v1004 = vshrl.u32 %v1003, 7
        %v1005 = vsub.s32 %v1002, %v1004
        %v1006 = vrot.slane %v998, %v1005
        %v1008 = vunpack.c.l.s4 1934713408
        %v1009 = vunpack.c.0.s8 %v1008
        %v1010 = vlaneseq
        %v1011 = vshrl.u32 %v1010, 7
        %v1012 = vsub.s32 %v1009, %v1011
        %v1013 = vrot.slane %v999, %v1012
        %v1014 = vcombine.low %v981, %v997
        %v1015 = vcombine.high %v981, %v997
        %v1017 = vunpack.c.l.s4 1934713408
        %v1018 = vunpack.c.0.s8 %v1017
        %v1019 = vlaneseq
        %v1020 = vshrl.u32 %v1019, 7
        %v1021 = vsub.s32 %v1018, %v1020
        %v1022 = vrot.slane %v1014, %v1021
        %v1024 = vunpack.c.l.s4 1934713408
        %v1025 = vunpack.c.0.s8 %v1024
        %v1026 = vlaneseq
        %v1027 = vshrl.u32 %v1026, 7
        %v1028 = vsub.s32 %v1025, %v1027
        %v1029 = vrot.slane %v1015, %v1028
        %v1030 = vcombine.high %v1006, 0.0
        %v1031 = vcombine.high %v1013, 0.0
        %v1032 = vcombine.high %v1022, 0.0
        %v1033 = vcombine.high %v1029, 0.0
        %1035 = vrot.lane.b32.xlu0 %v962, 16
        %v1036 = vpop.permute.xlu0 %1035
        %1039 = vrot.lane.b32.xlu0 %v945, 32
        %v1040 = vpop.permute.xlu0 %1039
        %1043 = vrot.lane.b32.xlu0 %v963, 48
        %v1044 = vpop.permute.xlu0 %1043
        %1047 = vrot.lane.b32.xlu0 %v954, 64
        %v1048 = vpop.permute.xlu0 %1047
        %1051 = vrot.lane.b32.xlu0 %v964, 80
        %v1052 = vpop.permute.xlu0 %1051
        %1055 = vrot.lane.b32.xlu0 %v961, 96
        %v1056 = vpop.permute.xlu0 %1055
        %1059 = vrot.lane.b32.xlu0 %v965, 112
        %v1060 = vpop.permute.xlu0 %1059
        %1063 = vrot.lane.b32.xlu0 %v1030, 16
        %v1064 = vpop.permute.xlu0 %1063
        %1067 = vrot.lane.b32.xlu0 %v1013, 32
        %v1068 = vpop.permute.xlu0 %1067
        %1071 = vrot.lane.b32.xlu0 %v1031, 48
        %v1072 = vpop.permute.xlu0 %1071
        %1075 = vrot.lane.b32.xlu0 %v1022, 64
        %v1076 = vpop.permute.xlu0 %1075
        %1079 = vrot.lane.b32.xlu0 %v1032, 80
        %v1080 = vpop.permute.xlu0 %1079
        %1083 = vrot.lane.b32.xlu0 %v1029, 96
        %v1084 = vpop.permute.xlu0 %1083
        %1087 = vrot.lane.b32.xlu0 %v1033, 112
        %v1088 = vpop.permute.xlu0 %1087
        %v1090 = vsel %vm623, %v938, %v1036
        %v1091 = vsel %vm625, %v1090, %v1040
        %v1092 = vsel %vm627, %v1091, %v1044
        %v1093 = vsel %vm629, %v1092, %v1048
        %v1094 = vsel %vm631, %v1093, %v1052
        %v1095 = vsel %vm633, %v1094, %v1056
        %v1096 = vsel %vm635, %v1095, %v1060
        %v1097 = vsel %vm623, %v1006, %v1064
        %v1098 = vsel %vm625, %v1097, %v1068
        %v1099 = vsel %vm627, %v1098, %v1072
        %v1100 = vsel %vm629, %v1099, %v1076
        %v1101 = vsel %vm631, %v1100, %v1080
        %v1102 = vsel %vm633, %v1101, %v1084
        %v1103 = vsel %vm635, %v1102, %v1088
        %vm1104 = vcmask 1045504
        %v1105 = vrot.slane %v362, 2
        %v1106 = vrot.slane %v363, 2
        %v1107 = vsel %vm1104, %v1105, %v1106
        %v1108 = vrot.slane %v364, 2
        %v1109 = vsel %vm1104, %v1106, %v1108
        %v1110 = vrot.slane %v365, 2
        %v1111 = vrot.slane %v366, 2
        %v1112 = vsel %vm1104, %v1110, %v1111
        %v1113 = vrot.slane %v367, 2
        %v1114 = vsel %vm1104, %v1111, %v1113
        %v1115 = vrot.slane %v368, 2
        %v1116 = vrot.slane %v369, 2
        %v1117 = vsel %vm1104, %v1115, %v1116
        %v1118 = vrot.slane %v370, 2
        %v1119 = vsel %vm1104, %v1116, %v1118
        %v1120 = vrot.slane %v371, 2
        %v1121 = vrot.slane %v372, 2
        %v1122 = vsel %vm1104, %v1120, %v1121
        %v1123 = vrot.slane %v373, 2
        %v1124 = vsel %vm1104, %v1121, %v1123
        %1125 = vrot.lane.b32.xlu0 %v1107, 127
        %v1126 = vpop.permute.xlu0 %1125
        %1127 = vrot.lane.b32.xlu0 %v1109, 127
        %v1128 = vpop.permute.xlu0 %1127
        %1129 = vrot.lane.b32.xlu0 %v1112, 127
        %v1130 = vpop.permute.xlu0 %1129
        %1131 = vrot.lane.b32.xlu0 %v1114, 127
        %v1132 = vpop.permute.xlu0 %1131
        %1133 = vrot.lane.b32.xlu0 %v1117, 127
        %v1134 = vpop.permute.xlu0 %1133
        %1135 = vrot.lane.b32.xlu0 %v1119, 127
        %v1136 = vpop.permute.xlu0 %1135
        %1137 = vrot.lane.b32.xlu0 %v1122, 127
        %v1138 = vpop.permute.xlu0 %1137
        %1139 = vrot.lane.b32.xlu0 %v1124, 127
        %v1140 = vpop.permute.xlu0 %1139
        %v1149 = vcombine.low %v1126, %v1134
        %v1150 = vcombine.high %v1126, %v1134
        %v1152 = vunpack.c.l.s4 1983009808
        %v1153 = vunpack.c.0.s8 %v1152
        %v1154 = vlaneseq
        %v1155 = vshrl.u32 %v1154, 7
        %v1156 = vsub.s32 %v1153, %v1155
        %v1157 = vrot.slane %v1149, %v1156
        %v1159 = vunpack.c.l.s4 1983009808
        %v1160 = vunpack.c.0.s8 %v1159
        %v1161 = vlaneseq
        %v1162 = vshrl.u32 %v1161, 7
        %v1163 = vsub.s32 %v1160, %v1162
        %v1164 = vrot.slane %v1150, %v1163
        %v1165 = vcombine.low %v1130, %v1138
        %v1166 = vcombine.high %v1130, %v1138
        %v1168 = vunpack.c.l.s4 1983009808
        %v1169 = vunpack.c.0.s8 %v1168
        %v1170 = vlaneseq
        %v1171 = vshrl.u32 %v1170, 7
        %v1172 = vsub.s32 %v1169, %v1171
        %v1173 = vrot.slane %v1165, %v1172
        %v1175 = vunpack.c.l.s4 1983009808
        %v1176 = vunpack.c.0.s8 %v1175
        %v1177 = vlaneseq
        %v1178 = vshrl.u32 %v1177, 7
        %v1179 = vsub.s32 %v1176, %v1178
        %v1180 = vrot.slane %v1166, %v1179
        %v1181 = vcombine.low %v1157, %v1173
        %v1182 = vcombine.high %v1157, %v1173
        %v1184 = vunpack.c.l.s4 1934713408
        %v1185 = vunpack.c.0.s8 %v1184
        %v1186 = vlaneseq
        %v1187 = vshrl.u32 %v1186, 7
        %v1188 = vsub.s32 %v1185, %v1187
        %v1189 = vrot.slane %v1181, %v1188
        %v1191 = vunpack.c.l.s4 1934713408
        %v1192 = vunpack.c.0.s8 %v1191
        %v1193 = vlaneseq
        %v1194 = vshrl.u32 %v1193, 7
        %v1195 = vsub.s32 %v1192, %v1194
        %v1196 = vrot.slane %v1182, %v1195
        %v1197 = vcombine.low %v1164, %v1180
        %v1198 = vcombine.high %v1164, %v1180
        %v1200 = vunpack.c.l.s4 1934713408
        %v1201 = vunpack.c.0.s8 %v1200
        %v1202 = vlaneseq
        %v1203 = vshrl.u32 %v1202, 7
        %v1204 = vsub.s32 %v1201, %v1203
        %v1205 = vrot.slane %v1197, %v1204
        %v1207 = vunpack.c.l.s4 1934713408
        %v1208 = vunpack.c.0.s8 %v1207
        %v1209 = vlaneseq
        %v1210 = vshrl.u32 %v1209, 7
        %v1211 = vsub.s32 %v1208, %v1210
        %v1212 = vrot.slane %v1198, %v1211
        %v1213 = vcombine.high %v1189, 0.0
        %v1214 = vcombine.high %v1196, 0.0
        %v1215 = vcombine.high %v1205, 0.0
        %v1216 = vcombine.high %v1212, 0.0
        %v1217 = vcombine.low %v1128, %v1136
        %v1218 = vcombine.high %v1128, %v1136
        %v1220 = vunpack.c.l.s4 1983009808
        %v1221 = vunpack.c.0.s8 %v1220
        %v1222 = vlaneseq
        %v1223 = vshrl.u32 %v1222, 7
        %v1224 = vsub.s32 %v1221, %v1223
        %v1225 = vrot.slane %v1217, %v1224
        %v1227 = vunpack.c.l.s4 1983009808
        %v1228 = vunpack.c.0.s8 %v1227
        %v1229 = vlaneseq
        %v1230 = vshrl.u32 %v1229, 7
        %v1231 = vsub.s32 %v1228, %v1230
        %v1232 = vrot.slane %v1218, %v1231
        %v1233 = vcombine.low %v1132, %v1140
        %v1234 = vcombine.high %v1132, %v1140
        %v1236 = vunpack.c.l.s4 1983009808
        %v1237 = vunpack.c.0.s8 %v1236
        %v1238 = vlaneseq
        %v1239 = vshrl.u32 %v1238, 7
        %v1240 = vsub.s32 %v1237, %v1239
        %v1241 = vrot.slane %v1233, %v1240
        %v1243 = vunpack.c.l.s4 1983009808
        %v1244 = vunpack.c.0.s8 %v1243
        %v1245 = vlaneseq
        %v1246 = vshrl.u32 %v1245, 7
        %v1247 = vsub.s32 %v1244, %v1246
        %v1248 = vrot.slane %v1234, %v1247
        %v1249 = vcombine.low %v1225, %v1241
        %v1250 = vcombine.high %v1225, %v1241
        %v1252 = vunpack.c.l.s4 1934713408
        %v1253 = vunpack.c.0.s8 %v1252
        %v1254 = vlaneseq
        %v1255 = vshrl.u32 %v1254, 7
        %v1256 = vsub.s32 %v1253, %v1255
        %v1257 = vrot.slane %v1249, %v1256
        %v1259 = vunpack.c.l.s4 1934713408
        %v1260 = vunpack.c.0.s8 %v1259
        %v1261 = vlaneseq
        %v1262 = vshrl.u32 %v1261, 7
        %v1263 = vsub.s32 %v1260, %v1262
        %v1264 = vrot.slane %v1250, %v1263
        %v1265 = vcombine.low %v1232, %v1248
        %v1266 = vcombine.high %v1232, %v1248
        %v1268 = vunpack.c.l.s4 1934713408
        %v1269 = vunpack.c.0.s8 %v1268
        %v1270 = vlaneseq
        %v1271 = vshrl.u32 %v1270, 7
        %v1272 = vsub.s32 %v1269, %v1271
        %v1273 = vrot.slane %v1265, %v1272
        %v1275 = vunpack.c.l.s4 1934713408
        %v1276 = vunpack.c.0.s8 %v1275
        %v1277 = vlaneseq
        %v1278 = vshrl.u32 %v1277, 7
        %v1279 = vsub.s32 %v1276, %v1278
        %v1280 = vrot.slane %v1266, %v1279
        %v1281 = vcombine.high %v1257, 0.0
        %v1282 = vcombine.high %v1264, 0.0
        %v1283 = vcombine.high %v1273, 0.0
        %v1284 = vcombine.high %v1280, 0.0
        %1286 = vrot.lane.b32.xlu0 %v1213, 16
        %v1287 = vpop.permute.xlu0 %1286
        %1290 = vrot.lane.b32.xlu0 %v1196, 32
        %v1291 = vpop.permute.xlu0 %1290
        %1294 = vrot.lane.b32.xlu0 %v1214, 48
        %v1295 = vpop.permute.xlu0 %1294
        %1298 = vrot.lane.b32.xlu0 %v1205, 64
        %v1299 = vpop.permute.xlu0 %1298
        %1302 = vrot.lane.b32.xlu0 %v1215, 80
        %v1303 = vpop.permute.xlu0 %1302
        %1306 = vrot.lane.b32.xlu0 %v1212, 96
        %v1307 = vpop.permute.xlu0 %1306
        %1310 = vrot.lane.b32.xlu0 %v1216, 112
        %v1311 = vpop.permute.xlu0 %1310
        %1314 = vrot.lane.b32.xlu0 %v1281, 16
        %v1315 = vpop.permute.xlu0 %1314
        %1318 = vrot.lane.b32.xlu0 %v1264, 32
        %v1319 = vpop.permute.xlu0 %1318
        %1322 = vrot.lane.b32.xlu0 %v1282, 48
        %v1323 = vpop.permute.xlu0 %1322
        %1326 = vrot.lane.b32.xlu0 %v1273, 64
        %v1327 = vpop.permute.xlu0 %1326
        %1330 = vrot.lane.b32.xlu0 %v1283, 80
        %v1331 = vpop.permute.xlu0 %1330
        %1334 = vrot.lane.b32.xlu0 %v1280, 96
        %v1335 = vpop.permute.xlu0 %1334
        %1338 = vrot.lane.b32.xlu0 %v1284, 112
        %v1339 = vpop.permute.xlu0 %1338
        %v1341 = vsel %vm623, %v1189, %v1287
        %v1342 = vsel %vm625, %v1341, %v1291
        %v1343 = vsel %vm627, %v1342, %v1295
        %v1344 = vsel %vm629, %v1343, %v1299
        %v1345 = vsel %vm631, %v1344, %v1303
        %v1346 = vsel %vm633, %v1345, %v1307
        %v1347 = vsel %vm635, %v1346, %v1311
        %v1348 = vsel %vm623, %v1257, %v1315
        %v1349 = vsel %vm625, %v1348, %v1319
        %v1350 = vsel %vm627, %v1349, %v1323
        %v1351 = vsel %vm629, %v1350, %v1327
        %v1352 = vsel %vm631, %v1351, %v1331
        %v1353 = vsel %vm633, %v1352, %v1335
        %v1354 = vsel %vm635, %v1353, %v1339
        %1355 = vrot.lane.b32.xlu0 %v1107, 126
        %v1356 = vpop.permute.xlu0 %1355
        %1357 = vrot.lane.b32.xlu0 %v1109, 126
        %v1358 = vpop.permute.xlu0 %1357
        %1359 = vrot.lane.b32.xlu0 %v1112, 126
        %v1360 = vpop.permute.xlu0 %1359
        %1361 = vrot.lane.b32.xlu0 %v1114, 126
        %v1362 = vpop.permute.xlu0 %1361
        %1363 = vrot.lane.b32.xlu0 %v1117, 126
        %v1364 = vpop.permute.xlu0 %1363
        %1365 = vrot.lane.b32.xlu0 %v1119, 126
        %v1366 = vpop.permute.xlu0 %1365
        %1367 = vrot.lane.b32.xlu0 %v1122, 126
        %v1368 = vpop.permute.xlu0 %1367
        %1369 = vrot.lane.b32.xlu0 %v1124, 126
        %v1370 = vpop.permute.xlu0 %1369
        %v1379 = vcombine.low %v1356, %v1364
        %v1380 = vcombine.high %v1356, %v1364
        %v1382 = vunpack.c.l.s4 1983009808
        %v1383 = vunpack.c.0.s8 %v1382
        %v1384 = vlaneseq
        %v1385 = vshrl.u32 %v1384, 7
        %v1386 = vsub.s32 %v1383, %v1385
        %v1387 = vrot.slane %v1379, %v1386
        %v1389 = vunpack.c.l.s4 1983009808
        %v1390 = vunpack.c.0.s8 %v1389
        %v1391 = vlaneseq
        %v1392 = vshrl.u32 %v1391, 7
        %v1393 = vsub.s32 %v1390, %v1392
        %v1394 = vrot.slane %v1380, %v1393
        %v1395 = vcombine.low %v1360, %v1368
        %v1396 = vcombine.high %v1360, %v1368
        %v1398 = vunpack.c.l.s4 1983009808
        %v1399 = vunpack.c.0.s8 %v1398
        %v1400 = vlaneseq
        %v1401 = vshrl.u32 %v1400, 7
        %v1402 = vsub.s32 %v1399, %v1401
        %v1403 = vrot.slane %v1395, %v1402
        %v1405 = vunpack.c.l.s4 1983009808
        %v1406 = vunpack.c.0.s8 %v1405
        %v1407 = vlaneseq
        %v1408 = vshrl.u32 %v1407, 7
        %v1409 = vsub.s32 %v1406, %v1408
        %v1410 = vrot.slane %v1396, %v1409
        %v1411 = vcombine.low %v1387, %v1403
        %v1412 = vcombine.high %v1387, %v1403
        %v1414 = vunpack.c.l.s4 1934713408
        %v1415 = vunpack.c.0.s8 %v1414
        %v1416 = vlaneseq
        %v1417 = vshrl.u32 %v1416, 7
        %v1418 = vsub.s32 %v1415, %v1417
        %v1419 = vrot.slane %v1411, %v1418
        %v1421 = vunpack.c.l.s4 1934713408
        %v1422 = vunpack.c.0.s8 %v1421
        %v1423 = vlaneseq
        %v1424 = vshrl.u32 %v1423, 7
        %v1425 = vsub.s32 %v1422, %v1424
        %v1426 = vrot.slane %v1412, %v1425
        %v1427 = vcombine.low %v1394, %v1410
        %v1428 = vcombine.high %v1394, %v1410
        %v1430 = vunpack.c.l.s4 1934713408
        %v1431 = vunpack.c.0.s8 %v1430
        %v1432 = vlaneseq
        %v1433 = vshrl.u32 %v1432, 7
        %v1434 = vsub.s32 %v1431, %v1433
        %v1435 = vrot.slane %v1427, %v1434
        %v1437 = vunpack.c.l.s4 1934713408
        %v1438 = vunpack.c.0.s8 %v1437
        %v1439 = vlaneseq
        %v1440 = vshrl.u32 %v1439, 7
        %v1441 = vsub.s32 %v1438, %v1440
        %v1442 = vrot.slane %v1428, %v1441
        %v1443 = vcombine.high %v1419, 0.0
        %v1444 = vcombine.high %v1426, 0.0
        %v1445 = vcombine.high %v1435, 0.0
        %v1446 = vcombine.high %v1442, 0.0
        %v1447 = vcombine.low %v1358, %v1366
        %v1448 = vcombine.high %v1358, %v1366
        %v1450 = vunpack.c.l.s4 1983009808
        %v1451 = vunpack.c.0.s8 %v1450
        %v1452 = vlaneseq
        %v1453 = vshrl.u32 %v1452, 7
        %v1454 = vsub.s32 %v1451, %v1453
        %v1455 = vrot.slane %v1447, %v1454
        %v1457 = vunpack.c.l.s4 1983009808
        %v1458 = vunpack.c.0.s8 %v1457
        %v1459 = vlaneseq
        %v1460 = vshrl.u32 %v1459, 7
        %v1461 = vsub.s32 %v1458, %v1460
        %v1462 = vrot.slane %v1448, %v1461
        %v1463 = vcombine.low %v1362, %v1370
        %v1464 = vcombine.high %v1362, %v1370
        %v1466 = vunpack.c.l.s4 1983009808
        %v1467 = vunpack.c.0.s8 %v1466
        %v1468 = vlaneseq
        %v1469 = vshrl.u32 %v1468, 7
        %v1470 = vsub.s32 %v1467, %v1469
        %v1471 = vrot.slane %v1463, %v1470
        %v1473 = vunpack.c.l.s4 1983009808
        %v1474 = vunpack.c.0.s8 %v1473
        %v1475 = vlaneseq
        %v1476 = vshrl.u32 %v1475, 7
        %v1477 = vsub.s32 %v1474, %v1476
        %v1478 = vrot.slane %v1464, %v1477
        %v1479 = vcombine.low %v1455, %v1471
        %v1480 = vcombine.high %v1455, %v1471
        %v1482 = vunpack.c.l.s4 1934713408
        %v1483 = vunpack.c.0.s8 %v1482
        %v1484 = vlaneseq
        %v1485 = vshrl.u32 %v1484, 7
        %v1486 = vsub.s32 %v1483, %v1485
        %v1487 = vrot.slane %v1479, %v1486
        %v1489 = vunpack.c.l.s4 1934713408
        %v1490 = vunpack.c.0.s8 %v1489
        %v1491 = vlaneseq
        %v1492 = vshrl.u32 %v1491, 7
        %v1493 = vsub.s32 %v1490, %v1492
        %v1494 = vrot.slane %v1480, %v1493
        %v1495 = vcombine.low %v1462, %v1478
        %v1496 = vcombine.high %v1462, %v1478
        %v1498 = vunpack.c.l.s4 1934713408
        %v1499 = vunpack.c.0.s8 %v1498
        %v1500 = vlaneseq
        %v1501 = vshrl.u32 %v1500, 7
        %v1502 = vsub.s32 %v1499, %v1501
        %v1503 = vrot.slane %v1495, %v1502
        %v1505 = vunpack.c.l.s4 1934713408
        %v1506 = vunpack.c.0.s8 %v1505
        %v1507 = vlaneseq
        %v1508 = vshrl.u32 %v1507, 7
        %v1509 = vsub.s32 %v1506, %v1508
        %v1510 = vrot.slane %v1496, %v1509
        %v1511 = vcombine.high %v1487, 0.0
        %v1512 = vcombine.high %v1494, 0.0
        %v1513 = vcombine.high %v1503, 0.0
        %v1514 = vcombine.high %v1510, 0.0
        %1516 = vrot.lane.b32.xlu0 %v1443, 16
        %v1517 = vpop.permute.xlu0 %1516
        %1520 = vrot.lane.b32.xlu0 %v1426, 32
        %v1521 = vpop.permute.xlu0 %1520
        %1524 = vrot.lane.b32.xlu0 %v1444, 48
        %v1525 = vpop.permute.xlu0 %1524
        %1528 = vrot.lane.b32.xlu0 %v1435, 64
        %v1529 = vpop.permute.xlu0 %1528
        %1532 = vrot.lane.b32.xlu0 %v1445, 80
        %v1533 = vpop.permute.xlu0 %1532
        %1536 = vrot.lane.b32.xlu0 %v1442, 96
        %v1537 = vpop.permute.xlu0 %1536
        %1540 = vrot.lane.b32.xlu0 %v1446, 112
        %v1541 = vpop.permute.xlu0 %1540
        %1544 = vrot.lane.b32.xlu0 %v1511, 16
        %v1545 = vpop.permute.xlu0 %1544
        %1548 = vrot.lane.b32.xlu0 %v1494, 32
        %v1549 = vpop.permute.xlu0 %1548
        %1552 = vrot.lane.b32.xlu0 %v1512, 48
        %v1553 = vpop.permute.xlu0 %1552
        %1556 = vrot.lane.b32.xlu0 %v1503, 64
        %v1557 = vpop.permute.xlu0 %1556
        %1560 = vrot.lane.b32.xlu0 %v1513, 80
        %v1561 = vpop.permute.xlu0 %1560
        %1564 = vrot.lane.b32.xlu0 %v1510, 96
        %v1565 = vpop.permute.xlu0 %1564
        %1568 = vrot.lane.b32.xlu0 %v1514, 112
        %v1569 = vpop.permute.xlu0 %1568
        %v1571 = vsel %vm623, %v1419, %v1517
        %v1572 = vsel %vm625, %v1571, %v1521
        %v1573 = vsel %vm627, %v1572, %v1525
        %v1574 = vsel %vm629, %v1573, %v1529
        %v1575 = vsel %vm631, %v1574, %v1533
        %v1576 = vsel %vm633, %v1575, %v1537
        %v1577 = vsel %vm635, %v1576, %v1541
        %v1578 = vsel %vm623, %v1487, %v1545
        %v1579 = vsel %vm625, %v1578, %v1549
        %v1580 = vsel %vm627, %v1579, %v1553
        %v1581 = vsel %vm629, %v1580, %v1557
        %v1582 = vsel %vm631, %v1581, %v1561
        %v1583 = vsel %vm633, %v1582, %v1565
        %v1584 = vsel %vm635, %v1583, %v1569
        %1585 = vrot.lane.b32.xlu0 %v1107, 125
        %v1586 = vpop.permute.xlu0 %1585
        %1587 = vrot.lane.b32.xlu0 %v1109, 125
        %v1588 = vpop.permute.xlu0 %1587
        %1589 = vrot.lane.b32.xlu0 %v1112, 125
        %v1590 = vpop.permute.xlu0 %1589
        %1591 = vrot.lane.b32.xlu0 %v1114, 125
        %v1592 = vpop.permute.xlu0 %1591
        %1593 = vrot.lane.b32.xlu0 %v1117, 125
        %v1594 = vpop.permute.xlu0 %1593
        %1595 = vrot.lane.b32.xlu0 %v1119, 125
        %v1596 = vpop.permute.xlu0 %1595
        %1597 = vrot.lane.b32.xlu0 %v1122, 125
        %v1598 = vpop.permute.xlu0 %1597
        %1599 = vrot.lane.b32.xlu0 %v1124, 125
        %v1600 = vpop.permute.xlu0 %1599
        %v1609 = vcombine.low %v1586, %v1594
        %v1610 = vcombine.high %v1586, %v1594
        %v1612 = vunpack.c.l.s4 1983009808
        %v1613 = vunpack.c.0.s8 %v1612
        %v1614 = vlaneseq
        %v1615 = vshrl.u32 %v1614, 7
        %v1616 = vsub.s32 %v1613, %v1615
        %v1617 = vrot.slane %v1609, %v1616
        %v1619 = vunpack.c.l.s4 1983009808
        %v1620 = vunpack.c.0.s8 %v1619
        %v1621 = vlaneseq
        %v1622 = vshrl.u32 %v1621, 7
        %v1623 = vsub.s32 %v1620, %v1622
        %v1624 = vrot.slane %v1610, %v1623
        %v1625 = vcombine.low %v1590, %v1598
        %v1626 = vcombine.high %v1590, %v1598
        %v1628 = vunpack.c.l.s4 1983009808
        %v1629 = vunpack.c.0.s8 %v1628
        %v1630 = vlaneseq
        %v1631 = vshrl.u32 %v1630, 7
        %v1632 = vsub.s32 %v1629, %v1631
        %v1633 = vrot.slane %v1625, %v1632
        %v1635 = vunpack.c.l.s4 1983009808
        %v1636 = vunpack.c.0.s8 %v1635
        %v1637 = vlaneseq
        %v1638 = vshrl.u32 %v1637, 7
        %v1639 = vsub.s32 %v1636, %v1638
        %v1640 = vrot.slane %v1626, %v1639
        %v1641 = vcombine.low %v1617, %v1633
        %v1642 = vcombine.high %v1617, %v1633
        %v1644 = vunpack.c.l.s4 1934713408
        %v1645 = vunpack.c.0.s8 %v1644
        %v1646 = vlaneseq
        %v1647 = vshrl.u32 %v1646, 7
        %v1648 = vsub.s32 %v1645, %v1647
        %v1649 = vrot.slane %v1641, %v1648
        %v1651 = vunpack.c.l.s4 1934713408
        %v1652 = vunpack.c.0.s8 %v1651
        %v1653 = vlaneseq
        %v1654 = vshrl.u32 %v1653, 7
        %v1655 = vsub.s32 %v1652, %v1654
        %v1656 = vrot.slane %v1642, %v1655
        %v1657 = vcombine.low %v1624, %v1640
        %v1658 = vcombine.high %v1624, %v1640
        %v1660 = vunpack.c.l.s4 1934713408
        %v1661 = vunpack.c.0.s8 %v1660
        %v1662 = vlaneseq
        %v1663 = vshrl.u32 %v1662, 7
        %v1664 = vsub.s32 %v1661, %v1663
        %v1665 = vrot.slane %v1657, %v1664
        %v1667 = vunpack.c.l.s4 1934713408
        %v1668 = vunpack.c.0.s8 %v1667
        %v1669 = vlaneseq
        %v1670 = vshrl.u32 %v1669, 7
        %v1671 = vsub.s32 %v1668, %v1670
        %v1672 = vrot.slane %v1658, %v1671
        %v1673 = vcombine.high %v1649, 0.0
        %v1674 = vcombine.high %v1656, 0.0
        %v1675 = vcombine.high %v1665, 0.0
        %v1676 = vcombine.high %v1672, 0.0
        %v1677 = vcombine.low %v1588, %v1596
        %v1678 = vcombine.high %v1588, %v1596
        %v1680 = vunpack.c.l.s4 1983009808
        %v1681 = vunpack.c.0.s8 %v1680
        %v1682 = vlaneseq
        %v1683 = vshrl.u32 %v1682, 7
        %v1684 = vsub.s32 %v1681, %v1683
        %v1685 = vrot.slane %v1677, %v1684
        %v1687 = vunpack.c.l.s4 1983009808
        %v1688 = vunpack.c.0.s8 %v1687
        %v1689 = vlaneseq
        %v1690 = vshrl.u32 %v1689, 7
        %v1691 = vsub.s32 %v1688, %v1690
        %v1692 = vrot.slane %v1678, %v1691
        %v1693 = vcombine.low %v1592, %v1600
        %v1694 = vcombine.high %v1592, %v1600
        %v1696 = vunpack.c.l.s4 1983009808
        %v1697 = vunpack.c.0.s8 %v1696
        %v1698 = vlaneseq
        %v1699 = vshrl.u32 %v1698, 7
        %v1700 = vsub.s32 %v1697, %v1699
        %v1701 = vrot.slane %v1693, %v1700
        %v1703 = vunpack.c.l.s4 1983009808
        %v1704 = vunpack.c.0.s8 %v1703
        %v1705 = vlaneseq
        %v1706 = vshrl.u32 %v1705, 7
        %v1707 = vsub.s32 %v1704, %v1706
        %v1708 = vrot.slane %v1694, %v1707
        %v1709 = vcombine.low %v1685, %v1701
        %v1710 = vcombine.high %v1685, %v1701
        %v1712 = vunpack.c.l.s4 1934713408
        %v1713 = vunpack.c.0.s8 %v1712
        %v1714 = vlaneseq
        %v1715 = vshrl.u32 %v1714, 7
        %v1716 = vsub.s32 %v1713, %v1715
        %v1717 = vrot.slane %v1709, %v1716
        %v1719 = vunpack.c.l.s4 1934713408
        %v1720 = vunpack.c.0.s8 %v1719
        %v1721 = vlaneseq
        %v1722 = vshrl.u32 %v1721, 7
        %v1723 = vsub.s32 %v1720, %v1722
        %v1724 = vrot.slane %v1710, %v1723
        %v1725 = vcombine.low %v1692, %v1708
        %v1726 = vcombine.high %v1692, %v1708
        %v1728 = vunpack.c.l.s4 1934713408
        %v1729 = vunpack.c.0.s8 %v1728
        %v1730 = vlaneseq
        %v1731 = vshrl.u32 %v1730, 7
        %v1732 = vsub.s32 %v1729, %v1731
        %v1733 = vrot.slane %v1725, %v1732
        %v1735 = vunpack.c.l.s4 1934713408
        %v1736 = vunpack.c.0.s8 %v1735
        %v1737 = vlaneseq
        %v1738 = vshrl.u32 %v1737, 7
        %v1739 = vsub.s32 %v1736, %v1738
        %v1740 = vrot.slane %v1726, %v1739
        %v1741 = vcombine.high %v1717, 0.0
        %v1742 = vcombine.high %v1724, 0.0
        %v1743 = vcombine.high %v1733, 0.0
        %v1744 = vcombine.high %v1740, 0.0
        %1746 = vrot.lane.b32.xlu0 %v1673, 16
        %v1747 = vpop.permute.xlu0 %1746
        %1750 = vrot.lane.b32.xlu0 %v1656, 32
        %v1751 = vpop.permute.xlu0 %1750
        %1754 = vrot.lane.b32.xlu0 %v1674, 48
        %v1755 = vpop.permute.xlu0 %1754
        %1758 = vrot.lane.b32.xlu0 %v1665, 64
        %v1759 = vpop.permute.xlu0 %1758
        %1762 = vrot.lane.b32.xlu0 %v1675, 80
        %v1763 = vpop.permute.xlu0 %1762
        %1766 = vrot.lane.b32.xlu0 %v1672, 96
        %v1767 = vpop.permute.xlu0 %1766
        %1770 = vrot.lane.b32.xlu0 %v1676, 112
        %v1771 = vpop.permute.xlu0 %1770
        %1774 = vrot.lane.b32.xlu0 %v1741, 16
        %v1775 = vpop.permute.xlu0 %1774
        %1778 = vrot.lane.b32.xlu0 %v1724, 32
        %v1779 = vpop.permute.xlu0 %1778
        %1782 = vrot.lane.b32.xlu0 %v1742, 48
        %v1783 = vpop.permute.xlu0 %1782
        %1786 = vrot.lane.b32.xlu0 %v1733, 64
        %v1787 = vpop.permute.xlu0 %1786
        %1790 = vrot.lane.b32.xlu0 %v1743, 80
        %v1791 = vpop.permute.xlu0 %1790
        %1794 = vrot.lane.b32.xlu0 %v1740, 96
        %v1795 = vpop.permute.xlu0 %1794
        %1798 = vrot.lane.b32.xlu0 %v1744, 112
        %v1799 = vpop.permute.xlu0 %1798
        %v1801 = vsel %vm623, %v1649, %v1747
        %v1802 = vsel %vm625, %v1801, %v1751
        %v1803 = vsel %vm627, %v1802, %v1755
        %v1804 = vsel %vm629, %v1803, %v1759
        %v1805 = vsel %vm631, %v1804, %v1763
        %v1806 = vsel %vm633, %v1805, %v1767
        %v1807 = vsel %vm635, %v1806, %v1771
        %v1808 = vsel %vm623, %v1717, %v1775
        %v1809 = vsel %vm625, %v1808, %v1779
        %v1810 = vsel %vm627, %v1809, %v1783
        %v1811 = vsel %vm629, %v1810, %v1787
        %v1812 = vsel %vm631, %v1811, %v1791
        %v1813 = vsel %vm633, %v1812, %v1795
        %v1814 = vsel %vm635, %v1813, %v1799
        %vm1815 = vcmask 1044480
        %v1816 = vrot.slane %v362, 3
        %v1817 = vrot.slane %v363, 3
        %v1818 = vsel %vm1815, %v1816, %v1817
        %v1819 = vrot.slane %v364, 3
        %v1820 = vsel %vm1815, %v1817, %v1819
        %v1821 = vrot.slane %v365, 3
        %v1822 = vrot.slane %v366, 3
        %v1823 = vsel %vm1815, %v1821, %v1822
        %v1824 = vrot.slane %v367, 3
        %v1825 = vsel %vm1815, %v1822, %v1824
        %v1826 = vrot.slane %v368, 3
        %v1827 = vrot.slane %v369, 3
        %v1828 = vsel %vm1815, %v1826, %v1827
        %v1829 = vrot.slane %v370, 3
        %v1830 = vsel %vm1815, %v1827, %v1829
        %v1831 = vrot.slane %v371, 3
        %v1832 = vrot.slane %v372, 3
        %v1833 = vsel %vm1815, %v1831, %v1832
        %v1834 = vrot.slane %v373, 3
        %v1835 = vsel %vm1815, %v1832, %v1834
        %1836 = vrot.lane.b32.xlu0 %v1818, 127
        %v1837 = vpop.permute.xlu0 %1836
        %1838 = vrot.lane.b32.xlu0 %v1820, 127
        %v1839 = vpop.permute.xlu0 %1838
        %1840 = vrot.lane.b32.xlu0 %v1823, 127
        %v1841 = vpop.permute.xlu0 %1840
        %1842 = vrot.lane.b32.xlu0 %v1825, 127
        %v1843 = vpop.permute.xlu0 %1842
        %1844 = vrot.lane.b32.xlu0 %v1828, 127
        %v1845 = vpop.permute.xlu0 %1844
        %1846 = vrot.lane.b32.xlu0 %v1830, 127
        %v1847 = vpop.permute.xlu0 %1846
        %1848 = vrot.lane.b32.xlu0 %v1833, 127
        %v1849 = vpop.permute.xlu0 %1848
        %1850 = vrot.lane.b32.xlu0 %v1835, 127
        %v1851 = vpop.permute.xlu0 %1850
        %v1860 = vcombine.low %v1837, %v1845
        %v1861 = vcombine.high %v1837, %v1845
        %v1863 = vunpack.c.l.s4 1983009808
        %v1864 = vunpack.c.0.s8 %v1863
        %v1865 = vlaneseq
        %v1866 = vshrl.u32 %v1865, 7
        %v1867 = vsub.s32 %v1864, %v1866
        %v1868 = vrot.slane %v1860, %v1867
        %v1870 = vunpack.c.l.s4 1983009808
        %v1871 = vunpack.c.0.s8 %v1870
        %v1872 = vlaneseq
        %v1873 = vshrl.u32 %v1872, 7
        %v1874 = vsub.s32 %v1871, %v1873
        %v1875 = vrot.slane %v1861, %v1874
        %v1876 = vcombine.low %v1841, %v1849
        %v1877 = vcombine.high %v1841, %v1849
        %v1879 = vunpack.c.l.s4 1983009808
        %v1880 = vunpack.c.0.s8 %v1879
        %v1881 = vlaneseq
        %v1882 = vshrl.u32 %v1881, 7
        %v1883 = vsub.s32 %v1880, %v1882
        %v1884 = vrot.slane %v1876, %v1883
        %v1886 = vunpack.c.l.s4 1983009808
        %v1887 = vunpack.c.0.s8 %v1886
        %v1888 = vlaneseq
        %v1889 = vshrl.u32 %v1888, 7
        %v1890 = vsub.s32 %v1887, %v1889
        %v1891 = vrot.slane %v1877, %v1890
        %v1892 = vcombine.low %v1868, %v1884
        %v1893 = vcombine.high %v1868, %v1884
        %v1895 = vunpack.c.l.s4 1934713408
        %v1896 = vunpack.c.0.s8 %v1895
        %v1897 = vlaneseq
        %v1898 = vshrl.u32 %v1897, 7
        %v1899 = vsub.s32 %v1896, %v1898
        %v1900 = vrot.slane %v1892, %v1899
        %v1902 = vunpack.c.l.s4 1934713408
        %v1903 = vunpack.c.0.s8 %v1902
        %v1904 = vlaneseq
        %v1905 = vshrl.u32 %v1904, 7
        %v1906 = vsub.s32 %v1903, %v1905
        %v1907 = vrot.slane %v1893, %v1906
        %v1908 = vcombine.low %v1875, %v1891
        %v1909 = vcombine.high %v1875, %v1891
        %v1911 = vunpack.c.l.s4 1934713408
        %v1912 = vunpack.c.0.s8 %v1911
        %v1913 = vlaneseq
        %v1914 = vshrl.u32 %v1913, 7
        %v1915 = vsub.s32 %v1912, %v1914
        %v1916 = vrot.slane %v1908, %v1915
        %v1918 = vunpack.c.l.s4 1934713408
        %v1919 = vunpack.c.0.s8 %v1918
        %v1920 = vlaneseq
        %v1921 = vshrl.u32 %v1920, 7
        %v1922 = vsub.s32 %v1919, %v1921
        %v1923 = vrot.slane %v1909, %v1922
        %v1924 = vcombine.high %v1900, 0.0
        %v1925 = vcombine.high %v1907, 0.0
        %v1926 = vcombine.high %v1916, 0.0
        %v1927 = vcombine.high %v1923, 0.0
        %v1928 = vcombine.low %v1839, %v1847
        %v1929 = vcombine.high %v1839, %v1847
        %v1931 = vunpack.c.l.s4 1983009808
        %v1932 = vunpack.c.0.s8 %v1931
        %v1933 = vlaneseq
        %v1934 = vshrl.u32 %v1933, 7
        %v1935 = vsub.s32 %v1932, %v1934
        %v1936 = vrot.slane %v1928, %v1935
        %v1938 = vunpack.c.l.s4 1983009808
        %v1939 = vunpack.c.0.s8 %v1938
        %v1940 = vlaneseq
        %v1941 = vshrl.u32 %v1940, 7
        %v1942 = vsub.s32 %v1939, %v1941
        %v1943 = vrot.slane %v1929, %v1942
        %v1944 = vcombine.low %v1843, %v1851
        %v1945 = vcombine.high %v1843, %v1851
        %v1947 = vunpack.c.l.s4 1983009808
        %v1948 = vunpack.c.0.s8 %v1947
        %v1949 = vlaneseq
        %v1950 = vshrl.u32 %v1949, 7
        %v1951 = vsub.s32 %v1948, %v1950
        %v1952 = vrot.slane %v1944, %v1951
        %v1954 = vunpack.c.l.s4 1983009808
        %v1955 = vunpack.c.0.s8 %v1954
        %v1956 = vlaneseq
        %v1957 = vshrl.u32 %v1956, 7
        %v1958 = vsub.s32 %v1955, %v1957
        %v1959 = vrot.slane %v1945, %v1958
        %v1960 = vcombine.low %v1936, %v1952
        %v1961 = vcombine.high %v1936, %v1952
        %v1963 = vunpack.c.l.s4 1934713408
        %v1964 = vunpack.c.0.s8 %v1963
        %v1965 = vlaneseq
        %v1966 = vshrl.u32 %v1965, 7
        %v1967 = vsub.s32 %v1964, %v1966
        %v1968 = vrot.slane %v1960, %v1967
        %v1970 = vunpack.c.l.s4 1934713408
        %v1971 = vunpack.c.0.s8 %v1970
        %v1972 = vlaneseq
        %v1973 = vshrl.u32 %v1972, 7
        %v1974 = vsub.s32 %v1971, %v1973
        %v1975 = vrot.slane %v1961, %v1974
        %v1976 = vcombine.low %v1943, %v1959
        %v1977 = vcombine.high %v1943, %v1959
        %v1979 = vunpack.c.l.s4 1934713408
        %v1980 = vunpack.c.0.s8 %v1979
        %v1981 = vlaneseq
        %v1982 = vshrl.u32 %v1981, 7
        %v1983 = vsub.s32 %v1980, %v1982
        %v1984 = vrot.slane %v1976, %v1983
        %v1986 = vunpack.c.l.s4 1934713408
        %v1987 = vunpack.c.0.s8 %v1986
        %v1988 = vlaneseq
        %v1989 = vshrl.u32 %v1988, 7
        %v1990 = vsub.s32 %v1987, %v1989
        %v1991 = vrot.slane %v1977, %v1990
        %v1992 = vcombine.high %v1968, 0.0
        %v1993 = vcombine.high %v1975, 0.0
        %v1994 = vcombine.high %v1984, 0.0
        %v1995 = vcombine.high %v1991, 0.0
        %1997 = vrot.lane.b32.xlu0 %v1924, 16
        %v1998 = vpop.permute.xlu0 %1997
        %2001 = vrot.lane.b32.xlu0 %v1907, 32
        %v2002 = vpop.permute.xlu0 %2001
        %2005 = vrot.lane.b32.xlu0 %v1925, 48
        %v2006 = vpop.permute.xlu0 %2005
        %2009 = vrot.lane.b32.xlu0 %v1916, 64
        %v2010 = vpop.permute.xlu0 %2009
        %2013 = vrot.lane.b32.xlu0 %v1926, 80
        %v2014 = vpop.permute.xlu0 %2013
        %2017 = vrot.lane.b32.xlu0 %v1923, 96
        %v2018 = vpop.permute.xlu0 %2017
        %2021 = vrot.lane.b32.xlu0 %v1927, 112
        %v2022 = vpop.permute.xlu0 %2021
        %2025 = vrot.lane.b32.xlu0 %v1992, 16
        %v2026 = vpop.permute.xlu0 %2025
        %2029 = vrot.lane.b32.xlu0 %v1975, 32
        %v2030 = vpop.permute.xlu0 %2029
        %2033 = vrot.lane.b32.xlu0 %v1993, 48
        %v2034 = vpop.permute.xlu0 %2033
        %2037 = vrot.lane.b32.xlu0 %v1984, 64
        %v2038 = vpop.permute.xlu0 %2037
        %2041 = vrot.lane.b32.xlu0 %v1994, 80
        %v2042 = vpop.permute.xlu0 %2041
        %2045 = vrot.lane.b32.xlu0 %v1991, 96
        %v2046 = vpop.permute.xlu0 %2045
        %2049 = vrot.lane.b32.xlu0 %v1995, 112
        %v2050 = vpop.permute.xlu0 %2049
        %v2052 = vsel %vm623, %v1900, %v1998
        %v2053 = vsel %vm625, %v2052, %v2002
        %v2054 = vsel %vm627, %v2053, %v2006
        %v2055 = vsel %vm629, %v2054, %v2010
        %v2056 = vsel %vm631, %v2055, %v2014
        %v2057 = vsel %vm633, %v2056, %v2018
        %v2058 = vsel %vm635, %v2057, %v2022
        %v2059 = vsel %vm623, %v1968, %v2026
        %v2060 = vsel %vm625, %v2059, %v2030
        %v2061 = vsel %vm627, %v2060, %v2034
        %v2062 = vsel %vm629, %v2061, %v2038
        %v2063 = vsel %vm631, %v2062, %v2042
        %v2064 = vsel %vm633, %v2063, %v2046
        %v2065 = vsel %vm635, %v2064, %v2050
        %2066 = vrot.lane.b32.xlu0 %v1818, 126
        %v2067 = vpop.permute.xlu0 %2066
        %2068 = vrot.lane.b32.xlu0 %v1820, 126
        %v2069 = vpop.permute.xlu0 %2068
        %2070 = vrot.lane.b32.xlu0 %v1823, 126
        %v2071 = vpop.permute.xlu0 %2070
        %2072 = vrot.lane.b32.xlu0 %v1825, 126
        %v2073 = vpop.permute.xlu0 %2072
        %2074 = vrot.lane.b32.xlu0 %v1828, 126
        %v2075 = vpop.permute.xlu0 %2074
        %2076 = vrot.lane.b32.xlu0 %v1830, 126
        %v2077 = vpop.permute.xlu0 %2076
        %2078 = vrot.lane.b32.xlu0 %v1833, 126
        %v2079 = vpop.permute.xlu0 %2078
        %2080 = vrot.lane.b32.xlu0 %v1835, 126
        %v2081 = vpop.permute.xlu0 %2080
        %v2090 = vcombine.low %v2067, %v2075
        %v2091 = vcombine.high %v2067, %v2075
        %v2093 = vunpack.c.l.s4 1983009808
        %v2094 = vunpack.c.0.s8 %v2093
        %v2095 = vlaneseq
        %v2096 = vshrl.u32 %v2095, 7
        %v2097 = vsub.s32 %v2094, %v2096
        %v2098 = vrot.slane %v2090, %v2097
        %v2100 = vunpack.c.l.s4 1983009808
        %v2101 = vunpack.c.0.s8 %v2100
        %v2102 = vlaneseq
        %v2103 = vshrl.u32 %v2102, 7
        %v2104 = vsub.s32 %v2101, %v2103
        %v2105 = vrot.slane %v2091, %v2104
        %v2106 = vcombine.low %v2071, %v2079
        %v2107 = vcombine.high %v2071, %v2079
        %v2109 = vunpack.c.l.s4 1983009808
        %v2110 = vunpack.c.0.s8 %v2109
        %v2111 = vlaneseq
        %v2112 = vshrl.u32 %v2111, 7
        %v2113 = vsub.s32 %v2110, %v2112
        %v2114 = vrot.slane %v2106, %v2113
        %v2116 = vunpack.c.l.s4 1983009808
        %v2117 = vunpack.c.0.s8 %v2116
        %v2118 = vlaneseq
        %v2119 = vshrl.u32 %v2118, 7
        %v2120 = vsub.s32 %v2117, %v2119
        %v2121 = vrot.slane %v2107, %v2120
        %v2122 = vcombine.low %v2098, %v2114
        %v2123 = vcombine.high %v2098, %v2114
        %v2125 = vunpack.c.l.s4 1934713408
        %v2126 = vunpack.c.0.s8 %v2125
        %v2127 = vlaneseq
        %v2128 = vshrl.u32 %v2127, 7
        %v2129 = vsub.s32 %v2126, %v2128
        %v2130 = vrot.slane %v2122, %v2129
        %v2132 = vunpack.c.l.s4 1934713408
        %v2133 = vunpack.c.0.s8 %v2132
        %v2134 = vlaneseq
        %v2135 = vshrl.u32 %v2134, 7
        %v2136 = vsub.s32 %v2133, %v2135
        %v2137 = vrot.slane %v2123, %v2136
        %v2138 = vcombine.low %v2105, %v2121
        %v2139 = vcombine.high %v2105, %v2121
        %v2141 = vunpack.c.l.s4 1934713408
        %v2142 = vunpack.c.0.s8 %v2141
        %v2143 = vlaneseq
        %v2144 = vshrl.u32 %v2143, 7
        %v2145 = vsub.s32 %v2142, %v2144
        %v2146 = vrot.slane %v2138, %v2145
        %v2148 = vunpack.c.l.s4 1934713408
        %v2149 = vunpack.c.0.s8 %v2148
        %v2150 = vlaneseq
        %v2151 = vshrl.u32 %v2150, 7
        %v2152 = vsub.s32 %v2149, %v2151
        %v2153 = vrot.slane %v2139, %v2152
        %v2154 = vcombine.high %v2130, 0.0
        %v2155 = vcombine.high %v2137, 0.0
        %v2156 = vcombine.high %v2146, 0.0
        %v2157 = vcombine.high %v2153, 0.0
        %v2158 = vcombine.low %v2069, %v2077
        %v2159 = vcombine.high %v2069, %v2077
        %v2161 = vunpack.c.l.s4 1983009808
        %v2162 = vunpack.c.0.s8 %v2161
        %v2163 = vlaneseq
        %v2164 = vshrl.u32 %v2163, 7
        %v2165 = vsub.s32 %v2162, %v2164
        %v2166 = vrot.slane %v2158, %v2165
        %v2168 = vunpack.c.l.s4 1983009808
        %v2169 = vunpack.c.0.s8 %v2168
        %v2170 = vlaneseq
        %v2171 = vshrl.u32 %v2170, 7
        %v2172 = vsub.s32 %v2169, %v2171
        %v2173 = vrot.slane %v2159, %v2172
        %v2174 = vcombine.low %v2073, %v2081
        %v2175 = vcombine.high %v2073, %v2081
        %v2177 = vunpack.c.l.s4 1983009808
        %v2178 = vunpack.c.0.s8 %v2177
        %v2179 = vlaneseq
        %v2180 = vshrl.u32 %v2179, 7
        %v2181 = vsub.s32 %v2178, %v2180
        %v2182 = vrot.slane %v2174, %v2181
        %v2184 = vunpack.c.l.s4 1983009808
        %v2185 = vunpack.c.0.s8 %v2184
        %v2186 = vlaneseq
        %v2187 = vshrl.u32 %v2186, 7
        %v2188 = vsub.s32 %v2185, %v2187
        %v2189 = vrot.slane %v2175, %v2188
        %v2190 = vcombine.low %v2166, %v2182
        %v2191 = vcombine.high %v2166, %v2182
        %v2193 = vunpack.c.l.s4 1934713408
        %v2194 = vunpack.c.0.s8 %v2193
        %v2195 = vlaneseq
        %v2196 = vshrl.u32 %v2195, 7
        %v2197 = vsub.s32 %v2194, %v2196
        %v2198 = vrot.slane %v2190, %v2197
        %v2200 = vunpack.c.l.s4 1934713408
        %v2201 = vunpack.c.0.s8 %v2200
        %v2202 = vlaneseq
        %v2203 = vshrl.u32 %v2202, 7
        %v2204 = vsub.s32 %v2201, %v2203
        %v2205 = vrot.slane %v2191, %v2204
        %v2206 = vcombine.low %v2173, %v2189
        %v2207 = vcombine.high %v2173, %v2189
        %v2209 = vunpack.c.l.s4 1934713408
        %v2210 = vunpack.c.0.s8 %v2209
        %v2211 = vlaneseq
        %v2212 = vshrl.u32 %v2211, 7
        %v2213 = vsub.s32 %v2210, %v2212
        %v2214 = vrot.slane %v2206, %v2213
        %v2216 = vunpack.c.l.s4 1934713408
        %v2217 = vunpack.c.0.s8 %v2216
        %v2218 = vlaneseq
        %v2219 = vshrl.u32 %v2218, 7
        %v2220 = vsub.s32 %v2217, %v2219
        %v2221 = vrot.slane %v2207, %v2220
        %v2222 = vcombine.high %v2198, 0.0
        %v2223 = vcombine.high %v2205, 0.0
        %v2224 = vcombine.high %v2214, 0.0
        %v2225 = vcombine.high %v2221, 0.0
        %2227 = vrot.lane.b32.xlu0 %v2154, 16
        %v2228 = vpop.permute.xlu0 %2227
        %2231 = vrot.lane.b32.xlu0 %v2137, 32
        %v2232 = vpop.permute.xlu0 %2231
        %2235 = vrot.lane.b32.xlu0 %v2155, 48
        %v2236 = vpop.permute.xlu0 %2235
        %2239 = vrot.lane.b32.xlu0 %v2146, 64
        %v2240 = vpop.permute.xlu0 %2239
        %2243 = vrot.lane.b32.xlu0 %v2156, 80
        %v2244 = vpop.permute.xlu0 %2243
        %2247 = vrot.lane.b32.xlu0 %v2153, 96
        %v2248 = vpop.permute.xlu0 %2247
        %2251 = vrot.lane.b32.xlu0 %v2157, 112
        %v2252 = vpop.permute.xlu0 %2251
        %2255 = vrot.lane.b32.xlu0 %v2222, 16
        %v2256 = vpop.permute.xlu0 %2255
        %2259 = vrot.lane.b32.xlu0 %v2205, 32
        %v2260 = vpop.permute.xlu0 %2259
        %2263 = vrot.lane.b32.xlu0 %v2223, 48
        %v2264 = vpop.permute.xlu0 %2263
        %2267 = vrot.lane.b32.xlu0 %v2214, 64
        %v2268 = vpop.permute.xlu0 %2267
        %2271 = vrot.lane.b32.xlu0 %v2224, 80
        %v2272 = vpop.permute.xlu0 %2271
        %2275 = vrot.lane.b32.xlu0 %v2221, 96
        %v2276 = vpop.permute.xlu0 %2275
        %2279 = vrot.lane.b32.xlu0 %v2225, 112
        %v2280 = vpop.permute.xlu0 %2279
        %v2282 = vsel %vm623, %v2130, %v2228
        %v2283 = vsel %vm625, %v2282, %v2232
        %v2284 = vsel %vm627, %v2283, %v2236
        %v2285 = vsel %vm629, %v2284, %v2240
        %v2286 = vsel %vm631, %v2285, %v2244
        %v2287 = vsel %vm633, %v2286, %v2248
        %v2288 = vsel %vm635, %v2287, %v2252
        %v2289 = vsel %vm623, %v2198, %v2256
        %v2290 = vsel %vm625, %v2289, %v2260
        %v2291 = vsel %vm627, %v2290, %v2264
        %v2292 = vsel %vm629, %v2291, %v2268
        %v2293 = vsel %vm631, %v2292, %v2272
        %v2294 = vsel %vm633, %v2293, %v2276
        %v2295 = vsel %vm635, %v2294, %v2280
        %2296 = vrot.lane.b32.xlu0 %v1818, 125
        %v2297 = vpop.permute.xlu0 %2296
        %2298 = vrot.lane.b32.xlu0 %v1820, 125
        %v2299 = vpop.permute.xlu0 %2298
        %2300 = vrot.lane.b32.xlu0 %v1823, 125
        %v2301 = vpop.permute.xlu0 %2300
        %2302 = vrot.lane.b32.xlu0 %v1825, 125
        %v2303 = vpop.permute.xlu0 %2302
        %2304 = vrot.lane.b32.xlu0 %v1828, 125
        %v2305 = vpop.permute.xlu0 %2304
        %2306 = vrot.lane.b32.xlu0 %v1830, 125
        %v2307 = vpop.permute.xlu0 %2306
        %2308 = vrot.lane.b32.xlu0 %v1833, 125
        %v2309 = vpop.permute.xlu0 %2308
        %2310 = vrot.lane.b32.xlu0 %v1835, 125
        %v2311 = vpop.permute.xlu0 %2310
        %v2320 = vcombine.low %v2297, %v2305
        %v2321 = vcombine.high %v2297, %v2305
        %v2323 = vunpack.c.l.s4 1983009808
        %v2324 = vunpack.c.0.s8 %v2323
        %v2325 = vlaneseq
        %v2326 = vshrl.u32 %v2325, 7
        %v2327 = vsub.s32 %v2324, %v2326
        %v2328 = vrot.slane %v2320, %v2327
        %v2330 = vunpack.c.l.s4 1983009808
        %v2331 = vunpack.c.0.s8 %v2330
        %v2332 = vlaneseq
        %v2333 = vshrl.u32 %v2332, 7
        %v2334 = vsub.s32 %v2331, %v2333
        %v2335 = vrot.slane %v2321, %v2334
        %v2336 = vcombine.low %v2301, %v2309
        %v2337 = vcombine.high %v2301, %v2309
        %v2339 = vunpack.c.l.s4 1983009808
        %v2340 = vunpack.c.0.s8 %v2339
        %v2341 = vlaneseq
        %v2342 = vshrl.u32 %v2341, 7
        %v2343 = vsub.s32 %v2340, %v2342
        %v2344 = vrot.slane %v2336, %v2343
        %v2346 = vunpack.c.l.s4 1983009808
        %v2347 = vunpack.c.0.s8 %v2346
        %v2348 = vlaneseq
        %v2349 = vshrl.u32 %v2348, 7
        %v2350 = vsub.s32 %v2347, %v2349
        %v2351 = vrot.slane %v2337, %v2350
        %v2352 = vcombine.low %v2328, %v2344
        %v2353 = vcombine.high %v2328, %v2344
        %v2355 = vunpack.c.l.s4 1934713408
        %v2356 = vunpack.c.0.s8 %v2355
        %v2357 = vlaneseq
        %v2358 = vshrl.u32 %v2357, 7
        %v2359 = vsub.s32 %v2356, %v2358
        %v2360 = vrot.slane %v2352, %v2359
        %v2362 = vunpack.c.l.s4 1934713408
        %v2363 = vunpack.c.0.s8 %v2362
        %v2364 = vlaneseq
        %v2365 = vshrl.u32 %v2364, 7
        %v2366 = vsub.s32 %v2363, %v2365
        %v2367 = vrot.slane %v2353, %v2366
        %v2368 = vcombine.low %v2335, %v2351
        %v2369 = vcombine.high %v2335, %v2351
        %v2371 = vunpack.c.l.s4 1934713408
        %v2372 = vunpack.c.0.s8 %v2371
        %v2373 = vlaneseq
        %v2374 = vshrl.u32 %v2373, 7
        %v2375 = vsub.s32 %v2372, %v2374
        %v2376 = vrot.slane %v2368, %v2375
        %v2378 = vunpack.c.l.s4 1934713408
        %v2379 = vunpack.c.0.s8 %v2378
        %v2380 = vlaneseq
        %v2381 = vshrl.u32 %v2380, 7
        %v2382 = vsub.s32 %v2379, %v2381
        %v2383 = vrot.slane %v2369, %v2382
        %v2384 = vcombine.high %v2360, 0.0
        %v2385 = vcombine.high %v2367, 0.0
        %v2386 = vcombine.high %v2376, 0.0
        %v2387 = vcombine.high %v2383, 0.0
        %v2388 = vcombine.low %v2299, %v2307
        %v2389 = vcombine.high %v2299, %v2307
        %v2391 = vunpack.c.l.s4 1983009808
        %v2392 = vunpack.c.0.s8 %v2391
        %v2393 = vlaneseq
        %v2394 = vshrl.u32 %v2393, 7
        %v2395 = vsub.s32 %v2392, %v2394
        %v2396 = vrot.slane %v2388, %v2395
        %v2398 = vunpack.c.l.s4 1983009808
        %v2399 = vunpack.c.0.s8 %v2398
        %v2400 = vlaneseq
        %v2401 = vshrl.u32 %v2400, 7
        %v2402 = vsub.s32 %v2399, %v2401
        %v2403 = vrot.slane %v2389, %v2402
        %v2404 = vcombine.low %v2303, %v2311
        %v2405 = vcombine.high %v2303, %v2311
        %v2407 = vunpack.c.l.s4 1983009808
        %v2408 = vunpack.c.0.s8 %v2407
        %v2409 = vlaneseq
        %v2410 = vshrl.u32 %v2409, 7
        %v2411 = vsub.s32 %v2408, %v2410
        %v2412 = vrot.slane %v2404, %v2411
        %v2414 = vunpack.c.l.s4 1983009808
        %v2415 = vunpack.c.0.s8 %v2414
        %v2416 = vlaneseq
        %v2417 = vshrl.u32 %v2416, 7
        %v2418 = vsub.s32 %v2415, %v2417
        %v2419 = vrot.slane %v2405, %v2418
        %v2420 = vcombine.low %v2396, %v2412
        %v2421 = vcombine.high %v2396, %v2412
        %v2423 = vunpack.c.l.s4 1934713408
        %v2424 = vunpack.c.0.s8 %v2423
        %v2425 = vlaneseq
        %v2426 = vshrl.u32 %v2425, 7
        %v2427 = vsub.s32 %v2424, %v2426
        %v2428 = vrot.slane %v2420, %v2427
        %v2430 = vunpack.c.l.s4 1934713408
        %v2431 = vunpack.c.0.s8 %v2430
        %v2432 = vlaneseq
        %v2433 = vshrl.u32 %v2432, 7
        %v2434 = vsub.s32 %v2431, %v2433
        %v2435 = vrot.slane %v2421, %v2434
        %v2436 = vcombine.low %v2403, %v2419
        %v2437 = vcombine.high %v2403, %v2419
        %v2439 = vunpack.c.l.s4 1934713408
        %v2440 = vunpack.c.0.s8 %v2439
        %v2441 = vlaneseq
        %v2442 = vshrl.u32 %v2441, 7
        %v2443 = vsub.s32 %v2440, %v2442
        %v2444 = vrot.slane %v2436, %v2443
        %v2446 = vunpack.c.l.s4 1934713408
        %v2447 = vunpack.c.0.s8 %v2446
        %v2448 = vlaneseq
        %v2449 = vshrl.u32 %v2448, 7
        %v2450 = vsub.s32 %v2447, %v2449
        %v2451 = vrot.slane %v2437, %v2450
        %v2452 = vcombine.high %v2428, 0.0
        %v2453 = vcombine.high %v2435, 0.0
        %v2454 = vcombine.high %v2444, 0.0
        %v2455 = vcombine.high %v2451, 0.0
        %2457 = vrot.lane.b32.xlu0 %v2384, 16
        %v2458 = vpop.permute.xlu0 %2457
        %2461 = vrot.lane.b32.xlu0 %v2367, 32
        %v2462 = vpop.permute.xlu0 %2461
        %2465 = vrot.lane.b32.xlu0 %v2385, 48
        %v2466 = vpop.permute.xlu0 %2465
        %2469 = vrot.lane.b32.xlu0 %v2376, 64
        %v2470 = vpop.permute.xlu0 %2469
        %2473 = vrot.lane.b32.xlu0 %v2386, 80
        %v2474 = vpop.permute.xlu0 %2473
        %2477 = vrot.lane.b32.xlu0 %v2383, 96
        %v2478 = vpop.permute.xlu0 %2477
        %2481 = vrot.lane.b32.xlu0 %v2387, 112
        %v2482 = vpop.permute.xlu0 %2481
        %2485 = vrot.lane.b32.xlu0 %v2452, 16
        %v2486 = vpop.permute.xlu0 %2485
        %2489 = vrot.lane.b32.xlu0 %v2435, 32
        %v2490 = vpop.permute.xlu0 %2489
        %2493 = vrot.lane.b32.xlu0 %v2453, 48
        %v2494 = vpop.permute.xlu0 %2493
        %2497 = vrot.lane.b32.xlu0 %v2444, 64
        %v2498 = vpop.permute.xlu0 %2497
        %2501 = vrot.lane.b32.xlu0 %v2454, 80
        %v2502 = vpop.permute.xlu0 %2501
        %2505 = vrot.lane.b32.xlu0 %v2451, 96
        %v2506 = vpop.permute.xlu0 %2505
        %2509 = vrot.lane.b32.xlu0 %v2455, 112
        %v2510 = vpop.permute.xlu0 %2509
        %v2512 = vsel %vm623, %v2360, %v2458
        %v2513 = vsel %vm625, %v2512, %v2462
        %v2514 = vsel %vm627, %v2513, %v2466
        %v2515 = vsel %vm629, %v2514, %v2470
        %v2516 = vsel %vm631, %v2515, %v2474
        %v2517 = vsel %vm633, %v2516, %v2478
        %v2518 = vsel %vm635, %v2517, %v2482
        %v2519 = vsel %vm623, %v2428, %v2486
        %v2520 = vsel %vm625, %v2519, %v2490
        %v2521 = vsel %vm627, %v2520, %v2494
        %v2522 = vsel %vm629, %v2521, %v2498
        %v2523 = vsel %vm631, %v2522, %v2502
        %v2524 = vsel %vm633, %v2523, %v2506
        %v2525 = vsel %vm635, %v2524, %v2510
        %v2528 = vrot.slane %v866, 4
        %v2529 = vrot.slane %v873, 4
        %v2534 = vrot.slane %v1347, 4
        %v2535 = vrot.slane %v1354, 4
        %v2540 = vrot.slane %v1807, 4
        %v2541 = vrot.slane %v1814, 4
        %v2546 = vrot.slane %v2288, 4
        %v2547 = vrot.slane %v2295, 4
        %vm2550 = vcmask 1043456
        %v2551 = vsel %vm2550, %v636, %v2528
        %v2552 = vsel %vm2550, %v643, %v2529
        %v2553 = vsel %vm2550, %v1096, %v2534
        %v2554 = vsel %vm2550, %v1103, %v2535
        %v2555 = vsel %vm2550, %v1577, %v2540
        %v2556 = vsel %vm2550, %v1584, %v2541
        %v2557 = vsel %vm2550, %v2058, %v2546
        %v2558 = vsel %vm2550, %v2065, %v2547
        %v2559 = vcombine.low %v362, %v368
        %v2560 = vcombine.high %v362, %v368
        %v2562 = vunpack.c.l.s4 1983009808
        %v2563 = vunpack.c.0.s8 %v2562
        %v2564 = vlaneseq
        %v2565 = vshrl.u32 %v2564, 7
        %v2566 = vsub.s32 %v2563, %v2565
        %v2567 = vrot.slane %v2559, %v2566
        %v2569 = vunpack.c.l.s4 1983009808
        %v2570 = vunpack.c.0.s8 %v2569
        %v2571 = vlaneseq
        %v2572 = vshrl.u32 %v2571, 7
        %v2573 = vsub.s32 %v2570, %v2572
        %v2574 = vrot.slane %v2560, %v2573
        %v2575 = vcombine.low %v365, %v371
        %v2576 = vcombine.high %v365, %v371
        %v2578 = vunpack.c.l.s4 1983009808
        %v2579 = vunpack.c.0.s8 %v2578
        %v2580 = vlaneseq
        %v2581 = vshrl.u32 %v2580, 7
        %v2582 = vsub.s32 %v2579, %v2581
        %v2583 = vrot.slane %v2575, %v2582
        %v2585 = vunpack.c.l.s4 1983009808
        %v2586 = vunpack.c.0.s8 %v2585
        %v2587 = vlaneseq
        %v2588 = vshrl.u32 %v2587, 7
        %v2589 = vsub.s32 %v2586, %v2588
        %v2590 = vrot.slane %v2576, %v2589
        %v2591 = vcombine.low %v2567, %v2583
        %v2592 = vcombine.high %v2567, %v2583
        %v2594 = vunpack.c.l.s4 1934713408
        %v2595 = vunpack.c.0.s8 %v2594
        %v2596 = vlaneseq
        %v2597 = vshrl.u32 %v2596, 7
        %v2598 = vsub.s32 %v2595, %v2597
        %v2599 = vrot.slane %v2591, %v2598
        %v2601 = vunpack.c.l.s4 1934713408
        %v2602 = vunpack.c.0.s8 %v2601
        %v2603 = vlaneseq
        %v2604 = vshrl.u32 %v2603, 7
        %v2605 = vsub.s32 %v2602, %v2604
        %v2606 = vrot.slane %v2592, %v2605
        %v2607 = vcombine.low %v2574, %v2590
        %v2608 = vcombine.high %v2574, %v2590
        %v2610 = vunpack.c.l.s4 1934713408
        %v2611 = vunpack.c.0.s8 %v2610
        %v2612 = vlaneseq
        %v2613 = vshrl.u32 %v2612, 7
        %v2614 = vsub.s32 %v2611, %v2613
        %v2615 = vrot.slane %v2607, %v2614
        %v2617 = vunpack.c.l.s4 1934713408
        %v2618 = vunpack.c.0.s8 %v2617
        %v2619 = vlaneseq
        %v2620 = vshrl.u32 %v2619, 7
        %v2621 = vsub.s32 %v2618, %v2620
        %v2622 = vrot.slane %v2608, %v2621
        %v2623 = vcombine.high %v2599, 0.0
        %v2624 = vcombine.high %v2606, 0.0
        %v2625 = vcombine.high %v2615, 0.0
        %v2626 = vcombine.high %v2622, 0.0
        %v2627 = vcombine.low %v363, %v369
        %v2628 = vcombine.high %v363, %v369
        %v2630 = vunpack.c.l.s4 1983009808
        %v2631 = vunpack.c.0.s8 %v2630
        %v2632 = vlaneseq
        %v2633 = vshrl.u32 %v2632, 7
        %v2634 = vsub.s32 %v2631, %v2633
        %v2635 = vrot.slane %v2627, %v2634
        %v2637 = vunpack.c.l.s4 1983009808
        %v2638 = vunpack.c.0.s8 %v2637
        %v2639 = vlaneseq
        %v2640 = vshrl.u32 %v2639, 7
        %v2641 = vsub.s32 %v2638, %v2640
        %v2642 = vrot.slane %v2628, %v2641
        %v2643 = vcombine.low %v366, %v372
        %v2644 = vcombine.high %v366, %v372
        %v2646 = vunpack.c.l.s4 1983009808
        %v2647 = vunpack.c.0.s8 %v2646
        %v2648 = vlaneseq
        %v2649 = vshrl.u32 %v2648, 7
        %v2650 = vsub.s32 %v2647, %v2649
        %v2651 = vrot.slane %v2643, %v2650
        %v2653 = vunpack.c.l.s4 1983009808
        %v2654 = vunpack.c.0.s8 %v2653
        %v2655 = vlaneseq
        %v2656 = vshrl.u32 %v2655, 7
        %v2657 = vsub.s32 %v2654, %v2656
        %v2658 = vrot.slane %v2644, %v2657
        %v2659 = vcombine.low %v2635, %v2651
        %v2660 = vcombine.high %v2635, %v2651
        %v2662 = vunpack.c.l.s4 1934713408
        %v2663 = vunpack.c.0.s8 %v2662
        %v2664 = vlaneseq
        %v2665 = vshrl.u32 %v2664, 7
        %v2666 = vsub.s32 %v2663, %v2665
        %v2667 = vrot.slane %v2659, %v2666
        %v2669 = vunpack.c.l.s4 1934713408
        %v2670 = vunpack.c.0.s8 %v2669
        %v2671 = vlaneseq
        %v2672 = vshrl.u32 %v2671, 7
        %v2673 = vsub.s32 %v2670, %v2672
        %v2674 = vrot.slane %v2660, %v2673
        %v2675 = vcombine.low %v2642, %v2658
        %v2676 = vcombine.high %v2642, %v2658
        %v2678 = vunpack.c.l.s4 1934713408
        %v2679 = vunpack.c.0.s8 %v2678
        %v2680 = vlaneseq
        %v2681 = vshrl.u32 %v2680, 7
        %v2682 = vsub.s32 %v2679, %v2681
        %v2683 = vrot.slane %v2675, %v2682
        %v2685 = vunpack.c.l.s4 1934713408
        %v2686 = vunpack.c.0.s8 %v2685
        %v2687 = vlaneseq
        %v2688 = vshrl.u32 %v2687, 7
        %v2689 = vsub.s32 %v2686, %v2688
        %v2690 = vrot.slane %v2676, %v2689
        %v2691 = vcombine.high %v2667, 0.0
        %v2692 = vcombine.high %v2674, 0.0
        %v2693 = vcombine.high %v2683, 0.0
        %v2694 = vcombine.high %v2690, 0.0
        %2696 = vrot.lane.b32.xlu0 %v2623, 16
        %v2697 = vpop.permute.xlu0 %2696
        %2700 = vrot.lane.b32.xlu0 %v2606, 32
        %v2701 = vpop.permute.xlu0 %2700
        %2704 = vrot.lane.b32.xlu0 %v2624, 48
        %v2705 = vpop.permute.xlu0 %2704
        %2708 = vrot.lane.b32.xlu0 %v2615, 64
        %v2709 = vpop.permute.xlu0 %2708
        %2712 = vrot.lane.b32.xlu0 %v2625, 80
        %v2713 = vpop.permute.xlu0 %2712
        %2716 = vrot.lane.b32.xlu0 %v2622, 96
        %v2717 = vpop.permute.xlu0 %2716
        %2720 = vrot.lane.b32.xlu0 %v2626, 112
        %v2721 = vpop.permute.xlu0 %2720
        %2724 = vrot.lane.b32.xlu0 %v2691, 16
        %v2725 = vpop.permute.xlu0 %2724
        %2728 = vrot.lane.b32.xlu0 %v2674, 32
        %v2729 = vpop.permute.xlu0 %2728
        %2732 = vrot.lane.b32.xlu0 %v2692, 48
        %v2733 = vpop.permute.xlu0 %2732
        %2736 = vrot.lane.b32.xlu0 %v2683, 64
        %v2737 = vpop.permute.xlu0 %2736
        %2740 = vrot.lane.b32.xlu0 %v2693, 80
        %v2741 = vpop.permute.xlu0 %2740
        %2744 = vrot.lane.b32.xlu0 %v2690, 96
        %v2745 = vpop.permute.xlu0 %2744
        %2748 = vrot.lane.b32.xlu0 %v2694, 112
        %v2749 = vpop.permute.xlu0 %2748
        %v2751 = vsel %vm623, %v2599, %v2697
        %v2752 = vsel %vm625, %v2751, %v2701
        %v2753 = vsel %vm627, %v2752, %v2705
        %v2754 = vsel %vm629, %v2753, %v2709
        %v2755 = vsel %vm631, %v2754, %v2713
        %v2756 = vsel %vm633, %v2755, %v2717
        %v2757 = vsel %vm635, %v2756, %v2721
        %v2758 = vsel %vm623, %v2667, %v2725
        %v2759 = vsel %vm625, %v2758, %v2729
        %v2760 = vsel %vm627, %v2759, %v2733
        %v2761 = vsel %vm629, %v2760, %v2737
        %v2762 = vsel %vm631, %v2761, %v2741
        %v2763 = vsel %vm633, %v2762, %v2745
        %v2764 = vsel %vm635, %v2763, %v2749
        %2765 = vrot.lane.b32.xlu0 %v362, 126
        %v2766 = vpop.permute.xlu0 %2765
        %2767 = vrot.lane.b32.xlu0 %v363, 126
        %v2768 = vpop.permute.xlu0 %2767
        %2769 = vrot.lane.b32.xlu0 %v365, 126
        %v2770 = vpop.permute.xlu0 %2769
        %2771 = vrot.lane.b32.xlu0 %v366, 126
        %v2772 = vpop.permute.xlu0 %2771
        %2773 = vrot.lane.b32.xlu0 %v368, 126
        %v2774 = vpop.permute.xlu0 %2773
        %2775 = vrot.lane.b32.xlu0 %v369, 126
        %v2776 = vpop.permute.xlu0 %2775
        %2777 = vrot.lane.b32.xlu0 %v371, 126
        %v2778 = vpop.permute.xlu0 %2777
        %2779 = vrot.lane.b32.xlu0 %v372, 126
        %v2780 = vpop.permute.xlu0 %2779
        %v2789 = vcombine.low %v2766, %v2774
        %v2790 = vcombine.high %v2766, %v2774
        %v2792 = vunpack.c.l.s4 1983009808
        %v2793 = vunpack.c.0.s8 %v2792
        %v2794 = vlaneseq
        %v2795 = vshrl.u32 %v2794, 7
        %v2796 = vsub.s32 %v2793, %v2795
        %v2797 = vrot.slane %v2789, %v2796
        %v2799 = vunpack.c.l.s4 1983009808
        %v2800 = vunpack.c.0.s8 %v2799
        %v2801 = vlaneseq
        %v2802 = vshrl.u32 %v2801, 7
        %v2803 = vsub.s32 %v2800, %v2802
        %v2804 = vrot.slane %v2790, %v2803
        %v2805 = vcombine.low %v2770, %v2778
        %v2806 = vcombine.high %v2770, %v2778
        %v2808 = vunpack.c.l.s4 1983009808
        %v2809 = vunpack.c.0.s8 %v2808
        %v2810 = vlaneseq
        %v2811 = vshrl.u32 %v2810, 7
        %v2812 = vsub.s32 %v2809, %v2811
        %v2813 = vrot.slane %v2805, %v2812
        %v2815 = vunpack.c.l.s4 1983009808
        %v2816 = vunpack.c.0.s8 %v2815
        %v2817 = vlaneseq
        %v2818 = vshrl.u32 %v2817, 7
        %v2819 = vsub.s32 %v2816, %v2818
        %v2820 = vrot.slane %v2806, %v2819
        %v2821 = vcombine.low %v2797, %v2813
        %v2822 = vcombine.high %v2797, %v2813
        %v2824 = vunpack.c.l.s4 1934713408
        %v2825 = vunpack.c.0.s8 %v2824
        %v2826 = vlaneseq
        %v2827 = vshrl.u32 %v2826, 7
        %v2828 = vsub.s32 %v2825, %v2827
        %v2829 = vrot.slane %v2821, %v2828
        %v2831 = vunpack.c.l.s4 1934713408
        %v2832 = vunpack.c.0.s8 %v2831
        %v2833 = vlaneseq
        %v2834 = vshrl.u32 %v2833, 7
        %v2835 = vsub.s32 %v2832, %v2834
        %v2836 = vrot.slane %v2822, %v2835
        %v2837 = vcombine.low %v2804, %v2820
        %v2838 = vcombine.high %v2804, %v2820
        %v2840 = vunpack.c.l.s4 1934713408
        %v2841 = vunpack.c.0.s8 %v2840
        %v2842 = vlaneseq
        %v2843 = vshrl.u32 %v2842, 7
        %v2844 = vsub.s32 %v2841, %v2843
        %v2845 = vrot.slane %v2837, %v2844
        %v2847 = vunpack.c.l.s4 1934713408
        %v2848 = vunpack.c.0.s8 %v2847
        %v2849 = vlaneseq
        %v2850 = vshrl.u32 %v2849, 7
        %v2851 = vsub.s32 %v2848, %v2850
        %v2852 = vrot.slane %v2838, %v2851
        %v2853 = vcombine.high %v2829, 0.0
        %v2854 = vcombine.high %v2836, 0.0
        %v2855 = vcombine.high %v2845, 0.0
        %v2856 = vcombine.high %v2852, 0.0
        %v2857 = vcombine.low %v2768, %v2776
        %v2858 = vcombine.high %v2768, %v2776
        %v2860 = vunpack.c.l.s4 1983009808
        %v2861 = vunpack.c.0.s8 %v2860
        %v2862 = vlaneseq
        %v2863 = vshrl.u32 %v2862, 7
        %v2864 = vsub.s32 %v2861, %v2863
        %v2865 = vrot.slane %v2857, %v2864
        %v2867 = vunpack.c.l.s4 1983009808
        %v2868 = vunpack.c.0.s8 %v2867
        %v2869 = vlaneseq
        %v2870 = vshrl.u32 %v2869, 7
        %v2871 = vsub.s32 %v2868, %v2870
        %v2872 = vrot.slane %v2858, %v2871
        %v2873 = vcombine.low %v2772, %v2780
        %v2874 = vcombine.high %v2772, %v2780
        %v2876 = vunpack.c.l.s4 1983009808
        %v2877 = vunpack.c.0.s8 %v2876
        %v2878 = vlaneseq
        %v2879 = vshrl.u32 %v2878, 7
        %v2880 = vsub.s32 %v2877, %v2879
        %v2881 = vrot.slane %v2873, %v2880
        %v2883 = vunpack.c.l.s4 1983009808
        %v2884 = vunpack.c.0.s8 %v2883
        %v2885 = vlaneseq
        %v2886 = vshrl.u32 %v2885, 7
        %v2887 = vsub.s32 %v2884, %v2886
        %v2888 = vrot.slane %v2874, %v2887
        %v2889 = vcombine.low %v2865, %v2881
        %v2890 = vcombine.high %v2865, %v2881
        %v2892 = vunpack.c.l.s4 1934713408
        %v2893 = vunpack.c.0.s8 %v2892
        %v2894 = vlaneseq
        %v2895 = vshrl.u32 %v2894, 7
        %v2896 = vsub.s32 %v2893, %v2895
        %v2897 = vrot.slane %v2889, %v2896
        %v2899 = vunpack.c.l.s4 1934713408
        %v2900 = vunpack.c.0.s8 %v2899
        %v2901 = vlaneseq
        %v2902 = vshrl.u32 %v2901, 7
        %v2903 = vsub.s32 %v2900, %v2902
        %v2904 = vrot.slane %v2890, %v2903
        %v2905 = vcombine.low %v2872, %v2888
        %v2906 = vcombine.high %v2872, %v2888
        %v2908 = vunpack.c.l.s4 1934713408
        %v2909 = vunpack.c.0.s8 %v2908
        %v2910 = vlaneseq
        %v2911 = vshrl.u32 %v2910, 7
        %v2912 = vsub.s32 %v2909, %v2911
        %v2913 = vrot.slane %v2905, %v2912
        %v2915 = vunpack.c.l.s4 1934713408
        %v2916 = vunpack.c.0.s8 %v2915
        %v2917 = vlaneseq
        %v2918 = vshrl.u32 %v2917, 7
        %v2919 = vsub.s32 %v2916, %v2918
        %v2920 = vrot.slane %v2906, %v2919
        %v2921 = vcombine.high %v2897, 0.0
        %v2922 = vcombine.high %v2904, 0.0
        %v2923 = vcombine.high %v2913, 0.0
        %v2924 = vcombine.high %v2920, 0.0
        %2926 = vrot.lane.b32.xlu0 %v2853, 16
        %v2927 = vpop.permute.xlu0 %2926
        %2930 = vrot.lane.b32.xlu0 %v2836, 32
        %v2931 = vpop.permute.xlu0 %2930
        %2934 = vrot.lane.b32.xlu0 %v2854, 48
        %v2935 = vpop.permute.xlu0 %2934
        %2938 = vrot.lane.b32.xlu0 %v2845, 64
        %v2939 = vpop.permute.xlu0 %2938
        %2942 = vrot.lane.b32.xlu0 %v2855, 80
        %v2943 = vpop.permute.xlu0 %2942
        %2946 = vrot.lane.b32.xlu0 %v2852, 96
        %v2947 = vpop.permute.xlu0 %2946
        %2950 = vrot.lane.b32.xlu0 %v2856, 112
        %v2951 = vpop.permute.xlu0 %2950
        %2954 = vrot.lane.b32.xlu0 %v2921, 16
        %v2955 = vpop.permute.xlu0 %2954
        %2958 = vrot.lane.b32.xlu0 %v2904, 32
        %v2959 = vpop.permute.xlu0 %2958
        %2962 = vrot.lane.b32.xlu0 %v2922, 48
        %v2963 = vpop.permute.xlu0 %2962
        %2966 = vrot.lane.b32.xlu0 %v2913, 64
        %v2967 = vpop.permute.xlu0 %2966
        %2970 = vrot.lane.b32.xlu0 %v2923, 80
        %v2971 = vpop.permute.xlu0 %2970
        %2974 = vrot.lane.b32.xlu0 %v2920, 96
        %v2975 = vpop.permute.xlu0 %2974
        %2978 = vrot.lane.b32.xlu0 %v2924, 112
        %v2979 = vpop.permute.xlu0 %2978
        %v2981 = vsel %vm623, %v2829, %v2927
        %v2982 = vsel %vm625, %v2981, %v2931
        %v2983 = vsel %vm627, %v2982, %v2935
        %v2984 = vsel %vm629, %v2983, %v2939
        %v2985 = vsel %vm631, %v2984, %v2943
        %v2986 = vsel %vm633, %v2985, %v2947
        %v2987 = vsel %vm635, %v2986, %v2951
        %v2988 = vsel %vm623, %v2897, %v2955
        %v2989 = vsel %vm625, %v2988, %v2959
        %v2990 = vsel %vm627, %v2989, %v2963
        %v2991 = vsel %vm629, %v2990, %v2967
        %v2992 = vsel %vm631, %v2991, %v2971
        %v2993 = vsel %vm633, %v2992, %v2975
        %v2994 = vsel %vm635, %v2993, %v2979
        %2995 = vrot.lane.b32.xlu0 %v362, 124
        %v2996 = vpop.permute.xlu0 %2995
        %2997 = vrot.lane.b32.xlu0 %v363, 124
        %v2998 = vpop.permute.xlu0 %2997
        %2999 = vrot.lane.b32.xlu0 %v365, 124
        %v3000 = vpop.permute.xlu0 %2999
        %3001 = vrot.lane.b32.xlu0 %v366, 124
        %v3002 = vpop.permute.xlu0 %3001
        %3003 = vrot.lane.b32.xlu0 %v368, 124
        %v3004 = vpop.permute.xlu0 %3003
        %3005 = vrot.lane.b32.xlu0 %v369, 124
        %v3006 = vpop.permute.xlu0 %3005
        %3007 = vrot.lane.b32.xlu0 %v371, 124
        %v3008 = vpop.permute.xlu0 %3007
        %3009 = vrot.lane.b32.xlu0 %v372, 124
        %v3010 = vpop.permute.xlu0 %3009
        %v3019 = vcombine.low %v2996, %v3004
        %v3020 = vcombine.high %v2996, %v3004
        %v3022 = vunpack.c.l.s4 1983009808
        %v3023 = vunpack.c.0.s8 %v3022
        %v3024 = vlaneseq
        %v3025 = vshrl.u32 %v3024, 7
        %v3026 = vsub.s32 %v3023, %v3025
        %v3027 = vrot.slane %v3019, %v3026
        %v3029 = vunpack.c.l.s4 1983009808
        %v3030 = vunpack.c.0.s8 %v3029
        %v3031 = vlaneseq
        %v3032 = vshrl.u32 %v3031, 7
        %v3033 = vsub.s32 %v3030, %v3032
        %v3034 = vrot.slane %v3020, %v3033
        %v3035 = vcombine.low %v3000, %v3008
        %v3036 = vcombine.high %v3000, %v3008
        %v3038 = vunpack.c.l.s4 1983009808
        %v3039 = vunpack.c.0.s8 %v3038
        %v3040 = vlaneseq
        %v3041 = vshrl.u32 %v3040, 7
        %v3042 = vsub.s32 %v3039, %v3041
        %v3043 = vrot.slane %v3035, %v3042
        %v3045 = vunpack.c.l.s4 1983009808
        %v3046 = vunpack.c.0.s8 %v3045
        %v3047 = vlaneseq
        %v3048 = vshrl.u32 %v3047, 7
        %v3049 = vsub.s32 %v3046, %v3048
        %v3050 = vrot.slane %v3036, %v3049
        %v3051 = vcombine.low %v3027, %v3043
        %v3052 = vcombine.high %v3027, %v3043
        %v3054 = vunpack.c.l.s4 1934713408
        %v3055 = vunpack.c.0.s8 %v3054
        %v3056 = vlaneseq
        %v3057 = vshrl.u32 %v3056, 7
        %v3058 = vsub.s32 %v3055, %v3057
        %v3059 = vrot.slane %v3051, %v3058
        %v3061 = vunpack.c.l.s4 1934713408
        %v3062 = vunpack.c.0.s8 %v3061
        %v3063 = vlaneseq
        %v3064 = vshrl.u32 %v3063, 7
        %v3065 = vsub.s32 %v3062, %v3064
        %v3066 = vrot.slane %v3052, %v3065
        %v3067 = vcombine.low %v3034, %v3050
        %v3068 = vcombine.high %v3034, %v3050
        %v3070 = vunpack.c.l.s4 1934713408
        %v3071 = vunpack.c.0.s8 %v3070
        %v3072 = vlaneseq
        %v3073 = vshrl.u32 %v3072, 7
        %v3074 = vsub.s32 %v3071, %v3073
        %v3075 = vrot.slane %v3067, %v3074
        %v3077 = vunpack.c.l.s4 1934713408
        %v3078 = vunpack.c.0.s8 %v3077
        %v3079 = vlaneseq
        %v3080 = vshrl.u32 %v3079, 7
        %v3081 = vsub.s32 %v3078, %v3080
        %v3082 = vrot.slane %v3068, %v3081
        %v3083 = vcombine.high %v3059, 0.0
        %v3084 = vcombine.high %v3066, 0.0
        %v3085 = vcombine.high %v3075, 0.0
        %v3086 = vcombine.high %v3082, 0.0
        %v3087 = vcombine.low %v2998, %v3006
        %v3088 = vcombine.high %v2998, %v3006
        %v3090 = vunpack.c.l.s4 1983009808
        %v3091 = vunpack.c.0.s8 %v3090
        %v3092 = vlaneseq
        %v3093 = vshrl.u32 %v3092, 7
        %v3094 = vsub.s32 %v3091, %v3093
        %v3095 = vrot.slane %v3087, %v3094
        %v3097 = vunpack.c.l.s4 1983009808
        %v3098 = vunpack.c.0.s8 %v3097
        %v3099 = vlaneseq
        %v3100 = vshrl.u32 %v3099, 7
        %v3101 = vsub.s32 %v3098, %v3100
        %v3102 = vrot.slane %v3088, %v3101
        %v3103 = vcombine.low %v3002, %v3010
        %v3104 = vcombine.high %v3002, %v3010
        %v3106 = vunpack.c.l.s4 1983009808
        %v3107 = vunpack.c.0.s8 %v3106
        %v3108 = vlaneseq
        %v3109 = vshrl.u32 %v3108, 7
        %v3110 = vsub.s32 %v3107, %v3109
        %v3111 = vrot.slane %v3103, %v3110
        %v3113 = vunpack.c.l.s4 1983009808
        %v3114 = vunpack.c.0.s8 %v3113
        %v3115 = vlaneseq
        %v3116 = vshrl.u32 %v3115, 7
        %v3117 = vsub.s32 %v3114, %v3116
        %v3118 = vrot.slane %v3104, %v3117
        %v3119 = vcombine.low %v3095, %v3111
        %v3120 = vcombine.high %v3095, %v3111
        %v3122 = vunpack.c.l.s4 1934713408
        %v3123 = vunpack.c.0.s8 %v3122
        %v3124 = vlaneseq
        %v3125 = vshrl.u32 %v3124, 7
        %v3126 = vsub.s32 %v3123, %v3125
        %v3127 = vrot.slane %v3119, %v3126
        %v3129 = vunpack.c.l.s4 1934713408
        %v3130 = vunpack.c.0.s8 %v3129
        %v3131 = vlaneseq
        %v3132 = vshrl.u32 %v3131, 7
        %v3133 = vsub.s32 %v3130, %v3132
        %v3134 = vrot.slane %v3120, %v3133
        %v3135 = vcombine.low %v3102, %v3118
        %v3136 = vcombine.high %v3102, %v3118
        %v3138 = vunpack.c.l.s4 1934713408
        %v3139 = vunpack.c.0.s8 %v3138
        %v3140 = vlaneseq
        %v3141 = vshrl.u32 %v3140, 7
        %v3142 = vsub.s32 %v3139, %v3141
        %v3143 = vrot.slane %v3135, %v3142
        %v3145 = vunpack.c.l.s4 1934713408
        %v3146 = vunpack.c.0.s8 %v3145
        %v3147 = vlaneseq
        %v3148 = vshrl.u32 %v3147, 7
        %v3149 = vsub.s32 %v3146, %v3148
        %v3150 = vrot.slane %v3136, %v3149
        %v3151 = vcombine.high %v3127, 0.0
        %v3152 = vcombine.high %v3134, 0.0
        %v3153 = vcombine.high %v3143, 0.0
        %v3154 = vcombine.high %v3150, 0.0
        %3156 = vrot.lane.b32.xlu0 %v3083, 16
        %v3157 = vpop.permute.xlu0 %3156
        %3160 = vrot.lane.b32.xlu0 %v3066, 32
        %v3161 = vpop.permute.xlu0 %3160
        %3164 = vrot.lane.b32.xlu0 %v3084, 48
        %v3165 = vpop.permute.xlu0 %3164
        %3168 = vrot.lane.b32.xlu0 %v3075, 64
        %v3169 = vpop.permute.xlu0 %3168
        %3172 = vrot.lane.b32.xlu0 %v3085, 80
        %v3173 = vpop.permute.xlu0 %3172
        %3176 = vrot.lane.b32.xlu0 %v3082, 96
        %v3177 = vpop.permute.xlu0 %3176
        %3180 = vrot.lane.b32.xlu0 %v3086, 112
        %v3181 = vpop.permute.xlu0 %3180
        %3184 = vrot.lane.b32.xlu0 %v3151, 16
        %v3185 = vpop.permute.xlu0 %3184
        %3188 = vrot.lane.b32.xlu0 %v3134, 32
        %v3189 = vpop.permute.xlu0 %3188
        %3192 = vrot.lane.b32.xlu0 %v3152, 48
        %v3193 = vpop.permute.xlu0 %3192
        %3196 = vrot.lane.b32.xlu0 %v3143, 64
        %v3197 = vpop.permute.xlu0 %3196
        %3200 = vrot.lane.b32.xlu0 %v3153, 80
        %v3201 = vpop.permute.xlu0 %3200
        %3204 = vrot.lane.b32.xlu0 %v3150, 96
        %v3205 = vpop.permute.xlu0 %3204
        %3208 = vrot.lane.b32.xlu0 %v3154, 112
        %v3209 = vpop.permute.xlu0 %3208
        %v3211 = vsel %vm623, %v3059, %v3157
        %v3212 = vsel %vm625, %v3211, %v3161
        %v3213 = vsel %vm627, %v3212, %v3165
        %v3214 = vsel %vm629, %v3213, %v3169
        %v3215 = vsel %vm631, %v3214, %v3173
        %v3216 = vsel %vm633, %v3215, %v3177
        %v3217 = vsel %vm635, %v3216, %v3181
        %v3218 = vsel %vm623, %v3127, %v3185
        %v3219 = vsel %vm625, %v3218, %v3189
        %v3220 = vsel %vm627, %v3219, %v3193
        %v3221 = vsel %vm629, %v3220, %v3197
        %v3222 = vsel %vm631, %v3221, %v3201
        %v3223 = vsel %vm633, %v3222, %v3205
        %v3224 = vsel %vm635, %v3223, %v3209
        %v3233 = vcombine.low %v1107, %v1117
        %v3234 = vcombine.high %v1107, %v1117
        %v3236 = vunpack.c.l.s4 1983009808
        %v3237 = vunpack.c.0.s8 %v3236
        %v3238 = vlaneseq
        %v3239 = vshrl.u32 %v3238, 7
        %v3240 = vsub.s32 %v3237, %v3239
        %v3241 = vrot.slane %v3233, %v3240
        %v3243 = vunpack.c.l.s4 1983009808
        %v3244 = vunpack.c.0.s8 %v3243
        %v3245 = vlaneseq
        %v3246 = vshrl.u32 %v3245, 7
        %v3247 = vsub.s32 %v3244, %v3246
        %v3248 = vrot.slane %v3234, %v3247
        %v3249 = vcombine.low %v1112, %v1122
        %v3250 = vcombine.high %v1112, %v1122
        %v3252 = vunpack.c.l.s4 1983009808
        %v3253 = vunpack.c.0.s8 %v3252
        %v3254 = vlaneseq
        %v3255 = vshrl.u32 %v3254, 7
        %v3256 = vsub.s32 %v3253, %v3255
        %v3257 = vrot.slane %v3249, %v3256
        %v3259 = vunpack.c.l.s4 1983009808
        %v3260 = vunpack.c.0.s8 %v3259
        %v3261 = vlaneseq
        %v3262 = vshrl.u32 %v3261, 7
        %v3263 = vsub.s32 %v3260, %v3262
        %v3264 = vrot.slane %v3250, %v3263
        %v3265 = vcombine.low %v3241, %v3257
        %v3266 = vcombine.high %v3241, %v3257
        %v3268 = vunpack.c.l.s4 1934713408
        %v3269 = vunpack.c.0.s8 %v3268
        %v3270 = vlaneseq
        %v3271 = vshrl.u32 %v3270, 7
        %v3272 = vsub.s32 %v3269, %v3271
        %v3273 = vrot.slane %v3265, %v3272
        %v3275 = vunpack.c.l.s4 1934713408
        %v3276 = vunpack.c.0.s8 %v3275
        %v3277 = vlaneseq
        %v3278 = vshrl.u32 %v3277, 7
        %v3279 = vsub.s32 %v3276, %v3278
        %v3280 = vrot.slane %v3266, %v3279
        %v3281 = vcombine.low %v3248, %v3264
        %v3282 = vcombine.high %v3248, %v3264
        %v3284 = vunpack.c.l.s4 1934713408
        %v3285 = vunpack.c.0.s8 %v3284
        %v3286 = vlaneseq
        %v3287 = vshrl.u32 %v3286, 7
        %v3288 = vsub.s32 %v3285, %v3287
        %v3289 = vrot.slane %v3281, %v3288
        %v3291 = vunpack.c.l.s4 1934713408
        %v3292 = vunpack.c.0.s8 %v3291
        %v3293 = vlaneseq
        %v3294 = vshrl.u32 %v3293, 7
        %v3295 = vsub.s32 %v3292, %v3294
        %v3296 = vrot.slane %v3282, %v3295
        %v3297 = vcombine.high %v3273, 0.0
        %v3298 = vcombine.high %v3280, 0.0
        %v3299 = vcombine.high %v3289, 0.0
        %v3300 = vcombine.high %v3296, 0.0
        %v3301 = vcombine.low %v1109, %v1119
        %v3302 = vcombine.high %v1109, %v1119
        %v3304 = vunpack.c.l.s4 1983009808
        %v3305 = vunpack.c.0.s8 %v3304
        %v3306 = vlaneseq
        %v3307 = vshrl.u32 %v3306, 7
        %v3308 = vsub.s32 %v3305, %v3307
        %v3309 = vrot.slane %v3301, %v3308
        %v3311 = vunpack.c.l.s4 1983009808
        %v3312 = vunpack.c.0.s8 %v3311
        %v3313 = vlaneseq
        %v3314 = vshrl.u32 %v3313, 7
        %v3315 = vsub.s32 %v3312, %v3314
        %v3316 = vrot.slane %v3302, %v3315
        %v3317 = vcombine.low %v1114, %v1124
        %v3318 = vcombine.high %v1114, %v1124
        %v3320 = vunpack.c.l.s4 1983009808
        %v3321 = vunpack.c.0.s8 %v3320
        %v3322 = vlaneseq
        %v3323 = vshrl.u32 %v3322, 7
        %v3324 = vsub.s32 %v3321, %v3323
        %v3325 = vrot.slane %v3317, %v3324
        %v3327 = vunpack.c.l.s4 1983009808
        %v3328 = vunpack.c.0.s8 %v3327
        %v3329 = vlaneseq
        %v3330 = vshrl.u32 %v3329, 7
        %v3331 = vsub.s32 %v3328, %v3330
        %v3332 = vrot.slane %v3318, %v3331
        %v3333 = vcombine.low %v3309, %v3325
        %v3334 = vcombine.high %v3309, %v3325
        %v3336 = vunpack.c.l.s4 1934713408
        %v3337 = vunpack.c.0.s8 %v3336
        %v3338 = vlaneseq
        %v3339 = vshrl.u32 %v3338, 7
        %v3340 = vsub.s32 %v3337, %v3339
        %v3341 = vrot.slane %v3333, %v3340
        %v3343 = vunpack.c.l.s4 1934713408
        %v3344 = vunpack.c.0.s8 %v3343
        %v3345 = vlaneseq
        %v3346 = vshrl.u32 %v3345, 7
        %v3347 = vsub.s32 %v3344, %v3346
        %v3348 = vrot.slane %v3334, %v3347
        %v3349 = vcombine.low %v3316, %v3332
        %v3350 = vcombine.high %v3316, %v3332
        %v3352 = vunpack.c.l.s4 1934713408
        %v3353 = vunpack.c.0.s8 %v3352
        %v3354 = vlaneseq
        %v3355 = vshrl.u32 %v3354, 7
        %v3356 = vsub.s32 %v3353, %v3355
        %v3357 = vrot.slane %v3349, %v3356
        %v3359 = vunpack.c.l.s4 1934713408
        %v3360 = vunpack.c.0.s8 %v3359
        %v3361 = vlaneseq
        %v3362 = vshrl.u32 %v3361, 7
        %v3363 = vsub.s32 %v3360, %v3362
        %v3364 = vrot.slane %v3350, %v3363
        %v3365 = vcombine.high %v3341, 0.0
        %v3366 = vcombine.high %v3348, 0.0
        %v3367 = vcombine.high %v3357, 0.0
        %v3368 = vcombine.high %v3364, 0.0
        %3370 = vrot.lane.b32.xlu0 %v3297, 16
        %v3371 = vpop.permute.xlu0 %3370
        %3374 = vrot.lane.b32.xlu0 %v3280, 32
        %v3375 = vpop.permute.xlu0 %3374
        %3378 = vrot.lane.b32.xlu0 %v3298, 48
        %v3379 = vpop.permute.xlu0 %3378
        %3382 = vrot.lane.b32.xlu0 %v3289, 64
        %v3383 = vpop.permute.xlu0 %3382
        %3386 = vrot.lane.b32.xlu0 %v3299, 80
        %v3387 = vpop.permute.xlu0 %3386
        %3390 = vrot.lane.b32.xlu0 %v3296, 96
        %v3391 = vpop.permute.xlu0 %3390
        %3394 = vrot.lane.b32.xlu0 %v3300, 112
        %v3395 = vpop.permute.xlu0 %3394
        %3398 = vrot.lane.b32.xlu0 %v3365, 16
        %v3399 = vpop.permute.xlu0 %3398
        %3402 = vrot.lane.b32.xlu0 %v3348, 32
        %v3403 = vpop.permute.xlu0 %3402
        %3406 = vrot.lane.b32.xlu0 %v3366, 48
        %v3407 = vpop.permute.xlu0 %3406
        %3410 = vrot.lane.b32.xlu0 %v3357, 64
        %v3411 = vpop.permute.xlu0 %3410
        %3414 = vrot.lane.b32.xlu0 %v3367, 80
        %v3415 = vpop.permute.xlu0 %3414
        %3418 = vrot.lane.b32.xlu0 %v3364, 96
        %v3419 = vpop.permute.xlu0 %3418
        %3422 = vrot.lane.b32.xlu0 %v3368, 112
        %v3423 = vpop.permute.xlu0 %3422
        %v3425 = vsel %vm623, %v3273, %v3371
        %v3426 = vsel %vm625, %v3425, %v3375
        %v3427 = vsel %vm627, %v3426, %v3379
        %v3428 = vsel %vm629, %v3427, %v3383
        %v3429 = vsel %vm631, %v3428, %v3387
        %v3430 = vsel %vm633, %v3429, %v3391
        %v3431 = vsel %vm635, %v3430, %v3395
        %v3432 = vsel %vm623, %v3341, %v3399
        %v3433 = vsel %vm625, %v3432, %v3403
        %v3434 = vsel %vm627, %v3433, %v3407
        %v3435 = vsel %vm629, %v3434, %v3411
        %v3436 = vsel %vm631, %v3435, %v3415
        %v3437 = vsel %vm633, %v3436, %v3419
        %v3438 = vsel %vm635, %v3437, %v3423
        %3439 = vrot.lane.b32.xlu0 %v1107, 124
        %v3440 = vpop.permute.xlu0 %3439
        %3441 = vrot.lane.b32.xlu0 %v1109, 124
        %v3442 = vpop.permute.xlu0 %3441
        %3443 = vrot.lane.b32.xlu0 %v1112, 124
        %v3444 = vpop.permute.xlu0 %3443
        %3445 = vrot.lane.b32.xlu0 %v1114, 124
        %v3446 = vpop.permute.xlu0 %3445
        %3447 = vrot.lane.b32.xlu0 %v1117, 124
        %v3448 = vpop.permute.xlu0 %3447
        %3449 = vrot.lane.b32.xlu0 %v1119, 124
        %v3450 = vpop.permute.xlu0 %3449
        %3451 = vrot.lane.b32.xlu0 %v1122, 124
        %v3452 = vpop.permute.xlu0 %3451
        %3453 = vrot.lane.b32.xlu0 %v1124, 124
        %v3454 = vpop.permute.xlu0 %3453
        %v3463 = vcombine.low %v3440, %v3448
        %v3464 = vcombine.high %v3440, %v3448
        %v3466 = vunpack.c.l.s4 1983009808
        %v3467 = vunpack.c.0.s8 %v3466
        %v3468 = vlaneseq
        %v3469 = vshrl.u32 %v3468, 7
        %v3470 = vsub.s32 %v3467, %v3469
        %v3471 = vrot.slane %v3463, %v3470
        %v3473 = vunpack.c.l.s4 1983009808
        %v3474 = vunpack.c.0.s8 %v3473
        %v3475 = vlaneseq
        %v3476 = vshrl.u32 %v3475, 7
        %v3477 = vsub.s32 %v3474, %v3476
        %v3478 = vrot.slane %v3464, %v3477
        %v3479 = vcombine.low %v3444, %v3452
        %v3480 = vcombine.high %v3444, %v3452
        %v3482 = vunpack.c.l.s4 1983009808
        %v3483 = vunpack.c.0.s8 %v3482
        %v3484 = vlaneseq
        %v3485 = vshrl.u32 %v3484, 7
        %v3486 = vsub.s32 %v3483, %v3485
        %v3487 = vrot.slane %v3479, %v3486
        %v3489 = vunpack.c.l.s4 1983009808
        %v3490 = vunpack.c.0.s8 %v3489
        %v3491 = vlaneseq
        %v3492 = vshrl.u32 %v3491, 7
        %v3493 = vsub.s32 %v3490, %v3492
        %v3494 = vrot.slane %v3480, %v3493
        %v3495 = vcombine.low %v3471, %v3487
        %v3496 = vcombine.high %v3471, %v3487
        %v3498 = vunpack.c.l.s4 1934713408
        %v3499 = vunpack.c.0.s8 %v3498
        %v3500 = vlaneseq
        %v3501 = vshrl.u32 %v3500, 7
        %v3502 = vsub.s32 %v3499, %v3501
        %v3503 = vrot.slane %v3495, %v3502
        %v3505 = vunpack.c.l.s4 1934713408
        %v3506 = vunpack.c.0.s8 %v3505
        %v3507 = vlaneseq
        %v3508 = vshrl.u32 %v3507, 7
        %v3509 = vsub.s32 %v3506, %v3508
        %v3510 = vrot.slane %v3496, %v3509
        %v3511 = vcombine.low %v3478, %v3494
        %v3512 = vcombine.high %v3478, %v3494
        %v3514 = vunpack.c.l.s4 1934713408
        %v3515 = vunpack.c.0.s8 %v3514
        %v3516 = vlaneseq
        %v3517 = vshrl.u32 %v3516, 7
        %v3518 = vsub.s32 %v3515, %v3517
        %v3519 = vrot.slane %v3511, %v3518
        %v3521 = vunpack.c.l.s4 1934713408
        %v3522 = vunpack.c.0.s8 %v3521
        %v3523 = vlaneseq
        %v3524 = vshrl.u32 %v3523, 7
        %v3525 = vsub.s32 %v3522, %v3524
        %v3526 = vrot.slane %v3512, %v3525
        %v3527 = vcombine.high %v3503, 0.0
        %v3528 = vcombine.high %v3510, 0.0
        %v3529 = vcombine.high %v3519, 0.0
        %v3530 = vcombine.high %v3526, 0.0
        %v3531 = vcombine.low %v3442, %v3450
        %v3532 = vcombine.high %v3442, %v3450
        %v3534 = vunpack.c.l.s4 1983009808
        %v3535 = vunpack.c.0.s8 %v3534
        %v3536 = vlaneseq
        %v3537 = vshrl.u32 %v3536, 7
        %v3538 = vsub.s32 %v3535, %v3537
        %v3539 = vrot.slane %v3531, %v3538
        %v3541 = vunpack.c.l.s4 1983009808
        %v3542 = vunpack.c.0.s8 %v3541
        %v3543 = vlaneseq
        %v3544 = vshrl.u32 %v3543, 7
        %v3545 = vsub.s32 %v3542, %v3544
        %v3546 = vrot.slane %v3532, %v3545
        %v3547 = vcombine.low %v3446, %v3454
        %v3548 = vcombine.high %v3446, %v3454
        %v3550 = vunpack.c.l.s4 1983009808
        %v3551 = vunpack.c.0.s8 %v3550
        %v3552 = vlaneseq
        %v3553 = vshrl.u32 %v3552, 7
        %v3554 = vsub.s32 %v3551, %v3553
        %v3555 = vrot.slane %v3547, %v3554
        %v3557 = vunpack.c.l.s4 1983009808
        %v3558 = vunpack.c.0.s8 %v3557
        %v3559 = vlaneseq
        %v3560 = vshrl.u32 %v3559, 7
        %v3561 = vsub.s32 %v3558, %v3560
        %v3562 = vrot.slane %v3548, %v3561
        %v3563 = vcombine.low %v3539, %v3555
        %v3564 = vcombine.high %v3539, %v3555
        %v3566 = vunpack.c.l.s4 1934713408
        %v3567 = vunpack.c.0.s8 %v3566
        %v3568 = vlaneseq
        %v3569 = vshrl.u32 %v3568, 7
        %v3570 = vsub.s32 %v3567, %v3569
        %v3571 = vrot.slane %v3563, %v3570
        %v3573 = vunpack.c.l.s4 1934713408
        %v3574 = vunpack.c.0.s8 %v3573
        %v3575 = vlaneseq
        %v3576 = vshrl.u32 %v3575, 7
        %v3577 = vsub.s32 %v3574, %v3576
        %v3578 = vrot.slane %v3564, %v3577
        %v3579 = vcombine.low %v3546, %v3562
        %v3580 = vcombine.high %v3546, %v3562
        %v3582 = vunpack.c.l.s4 1934713408
        %v3583 = vunpack.c.0.s8 %v3582
        %v3584 = vlaneseq
        %v3585 = vshrl.u32 %v3584, 7
        %v3586 = vsub.s32 %v3583, %v3585
        %v3587 = vrot.slane %v3579, %v3586
        %v3589 = vunpack.c.l.s4 1934713408
        %v3590 = vunpack.c.0.s8 %v3589
        %v3591 = vlaneseq
        %v3592 = vshrl.u32 %v3591, 7
        %v3593 = vsub.s32 %v3590, %v3592
        %v3594 = vrot.slane %v3580, %v3593
        %v3595 = vcombine.high %v3571, 0.0
        %v3596 = vcombine.high %v3578, 0.0
        %v3597 = vcombine.high %v3587, 0.0
        %v3598 = vcombine.high %v3594, 0.0
        %3600 = vrot.lane.b32.xlu0 %v3527, 16
        %v3601 = vpop.permute.xlu0 %3600
        %3604 = vrot.lane.b32.xlu0 %v3510, 32
        %v3605 = vpop.permute.xlu0 %3604
        %3608 = vrot.lane.b32.xlu0 %v3528, 48
        %v3609 = vpop.permute.xlu0 %3608
        %3612 = vrot.lane.b32.xlu0 %v3519, 64
        %v3613 = vpop.permute.xlu0 %3612
        %3616 = vrot.lane.b32.xlu0 %v3529, 80
        %v3617 = vpop.permute.xlu0 %3616
        %3620 = vrot.lane.b32.xlu0 %v3526, 96
        %v3621 = vpop.permute.xlu0 %3620
        %3624 = vrot.lane.b32.xlu0 %v3530, 112
        %v3625 = vpop.permute.xlu0 %3624
        %3628 = vrot.lane.b32.xlu0 %v3595, 16
        %v3629 = vpop.permute.xlu0 %3628
        %3632 = vrot.lane.b32.xlu0 %v3578, 32
        %v3633 = vpop.permute.xlu0 %3632
        %3636 = vrot.lane.b32.xlu0 %v3596, 48
        %v3637 = vpop.permute.xlu0 %3636
        %3640 = vrot.lane.b32.xlu0 %v3587, 64
        %v3641 = vpop.permute.xlu0 %3640
        %3644 = vrot.lane.b32.xlu0 %v3597, 80
        %v3645 = vpop.permute.xlu0 %3644
        %3648 = vrot.lane.b32.xlu0 %v3594, 96
        %v3649 = vpop.permute.xlu0 %3648
        %3652 = vrot.lane.b32.xlu0 %v3598, 112
        %v3653 = vpop.permute.xlu0 %3652
        %v3655 = vsel %vm623, %v3503, %v3601
        %v3656 = vsel %vm625, %v3655, %v3605
        %v3657 = vsel %vm627, %v3656, %v3609
        %v3658 = vsel %vm629, %v3657, %v3613
        %v3659 = vsel %vm631, %v3658, %v3617
        %v3660 = vsel %vm633, %v3659, %v3621
        %v3661 = vsel %vm635, %v3660, %v3625
        %v3662 = vsel %vm623, %v3571, %v3629
        %v3663 = vsel %vm625, %v3662, %v3633
        %v3664 = vsel %vm627, %v3663, %v3637
        %v3665 = vsel %vm629, %v3664, %v3641
        %v3666 = vsel %vm631, %v3665, %v3645
        %v3667 = vsel %vm633, %v3666, %v3649
        %v3668 = vsel %vm635, %v3667, %v3653
        %v3669 = vrot.slane %v362, 4
        %v3670 = vrot.slane %v363, 4
        %v3671 = vsel %vm2550, %v3669, %v3670
        %v3672 = vrot.slane %v364, 4
        %v3673 = vsel %vm2550, %v3670, %v3672
        %v3674 = vrot.slane %v365, 4
        %v3675 = vrot.slane %v366, 4
        %v3676 = vsel %vm2550, %v3674, %v3675
        %v3677 = vrot.slane %v367, 4
        %v3678 = vsel %vm2550, %v3675, %v3677
        %v3679 = vrot.slane %v368, 4
        %v3680 = vrot.slane %v369, 4
        %v3681 = vsel %vm2550, %v3679, %v3680
        %v3682 = vrot.slane %v370, 4
        %v3683 = vsel %vm2550, %v3680, %v3682
        %v3684 = vrot.slane %v371, 4
        %v3685 = vrot.slane %v372, 4
        %v3686 = vsel %vm2550, %v3684, %v3685
        %v3687 = vrot.slane %v373, 4
        %v3688 = vsel %vm2550, %v3685, %v3687
        %v3697 = vcombine.low %v3671, %v3681
        %v3698 = vcombine.high %v3671, %v3681
        %v3700 = vunpack.c.l.s4 1983009808
        %v3701 = vunpack.c.0.s8 %v3700
        %v3702 = vlaneseq
        %v3703 = vshrl.u32 %v3702, 7
        %v3704 = vsub.s32 %v3701, %v3703
        %v3705 = vrot.slane %v3697, %v3704
        %v3707 = vunpack.c.l.s4 1983009808
        %v3708 = vunpack.c.0.s8 %v3707
        %v3709 = vlaneseq
        %v3710 = vshrl.u32 %v3709, 7
        %v3711 = vsub.s32 %v3708, %v3710
        %v3712 = vrot.slane %v3698, %v3711
        %v3713 = vcombine.low %v3676, %v3686
        %v3714 = vcombine.high %v3676, %v3686
        %v3716 = vunpack.c.l.s4 1983009808
        %v3717 = vunpack.c.0.s8 %v3716
        %v3718 = vlaneseq
        %v3719 = vshrl.u32 %v3718, 7
        %v3720 = vsub.s32 %v3717, %v3719
        %v3721 = vrot.slane %v3713, %v3720
        %v3723 = vunpack.c.l.s4 1983009808
        %v3724 = vunpack.c.0.s8 %v3723
        %v3725 = vlaneseq
        %v3726 = vshrl.u32 %v3725, 7
        %v3727 = vsub.s32 %v3724, %v3726
        %v3728 = vrot.slane %v3714, %v3727
        %v3729 = vcombine.low %v3705, %v3721
        %v3730 = vcombine.high %v3705, %v3721
        %v3732 = vunpack.c.l.s4 1934713408
        %v3733 = vunpack.c.0.s8 %v3732
        %v3734 = vlaneseq
        %v3735 = vshrl.u32 %v3734, 7
        %v3736 = vsub.s32 %v3733, %v3735
        %v3737 = vrot.slane %v3729, %v3736
        %v3739 = vunpack.c.l.s4 1934713408
        %v3740 = vunpack.c.0.s8 %v3739
        %v3741 = vlaneseq
        %v3742 = vshrl.u32 %v3741, 7
        %v3743 = vsub.s32 %v3740, %v3742
        %v3744 = vrot.slane %v3730, %v3743
        %v3745 = vcombine.low %v3712, %v3728
        %v3746 = vcombine.high %v3712, %v3728
        %v3748 = vunpack.c.l.s4 1934713408
        %v3749 = vunpack.c.0.s8 %v3748
        %v3750 = vlaneseq
        %v3751 = vshrl.u32 %v3750, 7
        %v3752 = vsub.s32 %v3749, %v3751
        %v3753 = vrot.slane %v3745, %v3752
        %v3755 = vunpack.c.l.s4 1934713408
        %v3756 = vunpack.c.0.s8 %v3755
        %v3757 = vlaneseq
        %v3758 = vshrl.u32 %v3757, 7
        %v3759 = vsub.s32 %v3756, %v3758
        %v3760 = vrot.slane %v3746, %v3759
        %v3761 = vcombine.high %v3737, 0.0
        %v3762 = vcombine.high %v3744, 0.0
        %v3763 = vcombine.high %v3753, 0.0
        %v3764 = vcombine.high %v3760, 0.0
        %v3765 = vcombine.low %v3673, %v3683
        %v3766 = vcombine.high %v3673, %v3683
        %v3768 = vunpack.c.l.s4 1983009808
        %v3769 = vunpack.c.0.s8 %v3768
        %v3770 = vlaneseq
        %v3771 = vshrl.u32 %v3770, 7
        %v3772 = vsub.s32 %v3769, %v3771
        %v3773 = vrot.slane %v3765, %v3772
        %v3775 = vunpack.c.l.s4 1983009808
        %v3776 = vunpack.c.0.s8 %v3775
        %v3777 = vlaneseq
        %v3778 = vshrl.u32 %v3777, 7
        %v3779 = vsub.s32 %v3776, %v3778
        %v3780 = vrot.slane %v3766, %v3779
        %v3781 = vcombine.low %v3678, %v3688
        %v3782 = vcombine.high %v3678, %v3688
        %v3784 = vunpack.c.l.s4 1983009808
        %v3785 = vunpack.c.0.s8 %v3784
        %v3786 = vlaneseq
        %v3787 = vshrl.u32 %v3786, 7
        %v3788 = vsub.s32 %v3785, %v3787
        %v3789 = vrot.slane %v3781, %v3788
        %v3791 = vunpack.c.l.s4 1983009808
        %v3792 = vunpack.c.0.s8 %v3791
        %v3793 = vlaneseq
        %v3794 = vshrl.u32 %v3793, 7
        %v3795 = vsub.s32 %v3792, %v3794
        %v3796 = vrot.slane %v3782, %v3795
        %v3797 = vcombine.low %v3773, %v3789
        %v3798 = vcombine.high %v3773, %v3789
        %v3800 = vunpack.c.l.s4 1934713408
        %v3801 = vunpack.c.0.s8 %v3800
        %v3802 = vlaneseq
        %v3803 = vshrl.u32 %v3802, 7
        %v3804 = vsub.s32 %v3801, %v3803
        %v3805 = vrot.slane %v3797, %v3804
        %v3807 = vunpack.c.l.s4 1934713408
        %v3808 = vunpack.c.0.s8 %v3807
        %v3809 = vlaneseq
        %v3810 = vshrl.u32 %v3809, 7
        %v3811 = vsub.s32 %v3808, %v3810
        %v3812 = vrot.slane %v3798, %v3811
        %v3813 = vcombine.low %v3780, %v3796
        %v3814 = vcombine.high %v3780, %v3796
        %v3816 = vunpack.c.l.s4 1934713408
        %v3817 = vunpack.c.0.s8 %v3816
        %v3818 = vlaneseq
        %v3819 = vshrl.u32 %v3818, 7
        %v3820 = vsub.s32 %v3817, %v3819
        %v3821 = vrot.slane %v3813, %v3820
        %v3823 = vunpack.c.l.s4 1934713408
        %v3824 = vunpack.c.0.s8 %v3823
        %v3825 = vlaneseq
        %v3826 = vshrl.u32 %v3825, 7
        %v3827 = vsub.s32 %v3824, %v3826
        %v3828 = vrot.slane %v3814, %v3827
        %v3829 = vcombine.high %v3805, 0.0
        %v3830 = vcombine.high %v3812, 0.0
        %v3831 = vcombine.high %v3821, 0.0
        %v3832 = vcombine.high %v3828, 0.0
        %3834 = vrot.lane.b32.xlu0 %v3761, 16
        %v3835 = vpop.permute.xlu0 %3834
        %3838 = vrot.lane.b32.xlu0 %v3744, 32
        %v3839 = vpop.permute.xlu0 %3838
        %3842 = vrot.lane.b32.xlu0 %v3762, 48
        %v3843 = vpop.permute.xlu0 %3842
        %3846 = vrot.lane.b32.xlu0 %v3753, 64
        %v3847 = vpop.permute.xlu0 %3846
        %3850 = vrot.lane.b32.xlu0 %v3763, 80
        %v3851 = vpop.permute.xlu0 %3850
        %3854 = vrot.lane.b32.xlu0 %v3760, 96
        %v3855 = vpop.permute.xlu0 %3854
        %3858 = vrot.lane.b32.xlu0 %v3764, 112
        %v3859 = vpop.permute.xlu0 %3858
        %3862 = vrot.lane.b32.xlu0 %v3829, 16
        %v3863 = vpop.permute.xlu0 %3862
        %3866 = vrot.lane.b32.xlu0 %v3812, 32
        %v3867 = vpop.permute.xlu0 %3866
        %3870 = vrot.lane.b32.xlu0 %v3830, 48
        %v3871 = vpop.permute.xlu0 %3870
        %3874 = vrot.lane.b32.xlu0 %v3821, 64
        %v3875 = vpop.permute.xlu0 %3874
        %3878 = vrot.lane.b32.xlu0 %v3831, 80
        %v3879 = vpop.permute.xlu0 %3878
        %3882 = vrot.lane.b32.xlu0 %v3828, 96
        %v3883 = vpop.permute.xlu0 %3882
        %3886 = vrot.lane.b32.xlu0 %v3832, 112
        %v3887 = vpop.permute.xlu0 %3886
        %v3889 = vsel %vm623, %v3737, %v3835
        %v3890 = vsel %vm625, %v3889, %v3839
        %v3891 = vsel %vm627, %v3890, %v3843
        %v3892 = vsel %vm629, %v3891, %v3847
        %v3893 = vsel %vm631, %v3892, %v3851
        %v3894 = vsel %vm633, %v3893, %v3855
        %v3895 = vsel %vm635, %v3894, %v3859
        %v3896 = vsel %vm623, %v3805, %v3863
        %v3897 = vsel %vm625, %v3896, %v3867
        %v3898 = vsel %vm627, %v3897, %v3871
        %v3899 = vsel %vm629, %v3898, %v3875
        %v3900 = vsel %vm631, %v3899, %v3879
        %v3901 = vsel %vm633, %v3900, %v3883
        %v3902 = vsel %vm635, %v3901, %v3887
        %3903 = vrot.lane.b32.xlu0 %v3671, 126
        %v3904 = vpop.permute.xlu0 %3903
        %3905 = vrot.lane.b32.xlu0 %v3673, 126
        %v3906 = vpop.permute.xlu0 %3905
        %3907 = vrot.lane.b32.xlu0 %v3676, 126
        %v3908 = vpop.permute.xlu0 %3907
        %3909 = vrot.lane.b32.xlu0 %v3678, 126
        %v3910 = vpop.permute.xlu0 %3909
        %3911 = vrot.lane.b32.xlu0 %v3681, 126
        %v3912 = vpop.permute.xlu0 %3911
        %3913 = vrot.lane.b32.xlu0 %v3683, 126
        %v3914 = vpop.permute.xlu0 %3913
        %3915 = vrot.lane.b32.xlu0 %v3686, 126
        %v3916 = vpop.permute.xlu0 %3915
        %3917 = vrot.lane.b32.xlu0 %v3688, 126
        %v3918 = vpop.permute.xlu0 %3917
        %v3927 = vcombine.low %v3904, %v3912
        %v3928 = vcombine.high %v3904, %v3912
        %v3930 = vunpack.c.l.s4 1983009808
        %v3931 = vunpack.c.0.s8 %v3930
        %v3932 = vlaneseq
        %v3933 = vshrl.u32 %v3932, 7
        %v3934 = vsub.s32 %v3931, %v3933
        %v3935 = vrot.slane %v3927, %v3934
        %v3937 = vunpack.c.l.s4 1983009808
        %v3938 = vunpack.c.0.s8 %v3937
        %v3939 = vlaneseq
        %v3940 = vshrl.u32 %v3939, 7
        %v3941 = vsub.s32 %v3938, %v3940
        %v3942 = vrot.slane %v3928, %v3941
        %v3943 = vcombine.low %v3908, %v3916
        %v3944 = vcombine.high %v3908, %v3916
        %v3946 = vunpack.c.l.s4 1983009808
        %v3947 = vunpack.c.0.s8 %v3946
        %v3948 = vlaneseq
        %v3949 = vshrl.u32 %v3948, 7
        %v3950 = vsub.s32 %v3947, %v3949
        %v3951 = vrot.slane %v3943, %v3950
        %v3953 = vunpack.c.l.s4 1983009808
        %v3954 = vunpack.c.0.s8 %v3953
        %v3955 = vlaneseq
        %v3956 = vshrl.u32 %v3955, 7
        %v3957 = vsub.s32 %v3954, %v3956
        %v3958 = vrot.slane %v3944, %v3957
        %v3959 = vcombine.low %v3935, %v3951
        %v3960 = vcombine.high %v3935, %v3951
        %v3962 = vunpack.c.l.s4 1934713408
        %v3963 = vunpack.c.0.s8 %v3962
        %v3964 = vlaneseq
        %v3965 = vshrl.u32 %v3964, 7
        %v3966 = vsub.s32 %v3963, %v3965
        %v3967 = vrot.slane %v3959, %v3966
        %v3969 = vunpack.c.l.s4 1934713408
        %v3970 = vunpack.c.0.s8 %v3969
        %v3971 = vlaneseq
        %v3972 = vshrl.u32 %v3971, 7
        %v3973 = vsub.s32 %v3970, %v3972
        %v3974 = vrot.slane %v3960, %v3973
        %v3975 = vcombine.low %v3942, %v3958
        %v3976 = vcombine.high %v3942, %v3958
        %v3978 = vunpack.c.l.s4 1934713408
        %v3979 = vunpack.c.0.s8 %v3978
        %v3980 = vlaneseq
        %v3981 = vshrl.u32 %v3980, 7
        %v3982 = vsub.s32 %v3979, %v3981
        %v3983 = vrot.slane %v3975, %v3982
        %v3985 = vunpack.c.l.s4 1934713408
        %v3986 = vunpack.c.0.s8 %v3985
        %v3987 = vlaneseq
        %v3988 = vshrl.u32 %v3987, 7
        %v3989 = vsub.s32 %v3986, %v3988
        %v3990 = vrot.slane %v3976, %v3989
        %v3991 = vcombine.high %v3967, 0.0
        %v3992 = vcombine.high %v3974, 0.0
        %v3993 = vcombine.high %v3983, 0.0
        %v3994 = vcombine.high %v3990, 0.0
        %v3995 = vcombine.low %v3906, %v3914
        %v3996 = vcombine.high %v3906, %v3914
        %v3998 = vunpack.c.l.s4 1983009808
        %v3999 = vunpack.c.0.s8 %v3998
        %v4000 = vlaneseq
        %v4001 = vshrl.u32 %v4000, 7
        %v4002 = vsub.s32 %v3999, %v4001
        %v4003 = vrot.slane %v3995, %v4002
        %v4005 = vunpack.c.l.s4 1983009808
        %v4006 = vunpack.c.0.s8 %v4005
        %v4007 = vlaneseq
        %v4008 = vshrl.u32 %v4007, 7
        %v4009 = vsub.s32 %v4006, %v4008
        %v4010 = vrot.slane %v3996, %v4009
        %v4011 = vcombine.low %v3910, %v3918
        %v4012 = vcombine.high %v3910, %v3918
        %v4014 = vunpack.c.l.s4 1983009808
        %v4015 = vunpack.c.0.s8 %v4014
        %v4016 = vlaneseq
        %v4017 = vshrl.u32 %v4016, 7
        %v4018 = vsub.s32 %v4015, %v4017
        %v4019 = vrot.slane %v4011, %v4018
        %v4021 = vunpack.c.l.s4 1983009808
        %v4022 = vunpack.c.0.s8 %v4021
        %v4023 = vlaneseq
        %v4024 = vshrl.u32 %v4023, 7
        %v4025 = vsub.s32 %v4022, %v4024
        %v4026 = vrot.slane %v4012, %v4025
        %v4027 = vcombine.low %v4003, %v4019
        %v4028 = vcombine.high %v4003, %v4019
        %v4030 = vunpack.c.l.s4 1934713408
        %v4031 = vunpack.c.0.s8 %v4030
        %v4032 = vlaneseq
        %v4033 = vshrl.u32 %v4032, 7
        %v4034 = vsub.s32 %v4031, %v4033
        %v4035 = vrot.slane %v4027, %v4034
        %v4037 = vunpack.c.l.s4 1934713408
        %v4038 = vunpack.c.0.s8 %v4037
        %v4039 = vlaneseq
        %v4040 = vshrl.u32 %v4039, 7
        %v4041 = vsub.s32 %v4038, %v4040
        %v4042 = vrot.slane %v4028, %v4041
        %v4043 = vcombine.low %v4010, %v4026
        %v4044 = vcombine.high %v4010, %v4026
        %v4046 = vunpack.c.l.s4 1934713408
        %v4047 = vunpack.c.0.s8 %v4046
        %v4048 = vlaneseq
        %v4049 = vshrl.u32 %v4048, 7
        %v4050 = vsub.s32 %v4047, %v4049
        %v4051 = vrot.slane %v4043, %v4050
        %v4053 = vunpack.c.l.s4 1934713408
        %v4054 = vunpack.c.0.s8 %v4053
        %v4055 = vlaneseq
        %v4056 = vshrl.u32 %v4055, 7
        %v4057 = vsub.s32 %v4054, %v4056
        %v4058 = vrot.slane %v4044, %v4057
        %v4059 = vcombine.high %v4035, 0.0
        %v4060 = vcombine.high %v4042, 0.0
        %v4061 = vcombine.high %v4051, 0.0
        %v4062 = vcombine.high %v4058, 0.0
        %4064 = vrot.lane.b32.xlu0 %v3991, 16
        %v4065 = vpop.permute.xlu0 %4064
        %4068 = vrot.lane.b32.xlu0 %v3974, 32
        %v4069 = vpop.permute.xlu0 %4068
        %4072 = vrot.lane.b32.xlu0 %v3992, 48
        %v4073 = vpop.permute.xlu0 %4072
        %4076 = vrot.lane.b32.xlu0 %v3983, 64
        %v4077 = vpop.permute.xlu0 %4076
        %4080 = vrot.lane.b32.xlu0 %v3993, 80
        %v4081 = vpop.permute.xlu0 %4080
        %4084 = vrot.lane.b32.xlu0 %v3990, 96
        %v4085 = vpop.permute.xlu0 %4084
        %4088 = vrot.lane.b32.xlu0 %v3994, 112
        %v4089 = vpop.permute.xlu0 %4088
        %4092 = vrot.lane.b32.xlu0 %v4059, 16
        %v4093 = vpop.permute.xlu0 %4092
        %4096 = vrot.lane.b32.xlu0 %v4042, 32
        %v4097 = vpop.permute.xlu0 %4096
        %4100 = vrot.lane.b32.xlu0 %v4060, 48
        %v4101 = vpop.permute.xlu0 %4100
        %4104 = vrot.lane.b32.xlu0 %v4051, 64
        %v4105 = vpop.permute.xlu0 %4104
        %4108 = vrot.lane.b32.xlu0 %v4061, 80
        %v4109 = vpop.permute.xlu0 %4108
        %4112 = vrot.lane.b32.xlu0 %v4058, 96
        %v4113 = vpop.permute.xlu0 %4112
        %4116 = vrot.lane.b32.xlu0 %v4062, 112
        %v4117 = vpop.permute.xlu0 %4116
        %v4119 = vsel %vm623, %v3967, %v4065
        %v4120 = vsel %vm625, %v4119, %v4069
        %v4121 = vsel %vm627, %v4120, %v4073
        %v4122 = vsel %vm629, %v4121, %v4077
        %v4123 = vsel %vm631, %v4122, %v4081
        %v4124 = vsel %vm633, %v4123, %v4085
        %v4125 = vsel %vm635, %v4124, %v4089
        %v4126 = vsel %vm623, %v4035, %v4093
        %v4127 = vsel %vm625, %v4126, %v4097
        %v4128 = vsel %vm627, %v4127, %v4101
        %v4129 = vsel %vm629, %v4128, %v4105
        %v4130 = vsel %vm631, %v4129, %v4109
        %v4131 = vsel %vm633, %v4130, %v4113
        %v4132 = vsel %vm635, %v4131, %v4117
        %4133 = vrot.lane.b32.xlu0 %v3671, 124
        %v4134 = vpop.permute.xlu0 %4133
        %4135 = vrot.lane.b32.xlu0 %v3673, 124
        %v4136 = vpop.permute.xlu0 %4135
        %4137 = vrot.lane.b32.xlu0 %v3676, 124
        %v4138 = vpop.permute.xlu0 %4137
        %4139 = vrot.lane.b32.xlu0 %v3678, 124
        %v4140 = vpop.permute.xlu0 %4139
        %4141 = vrot.lane.b32.xlu0 %v3681, 124
        %v4142 = vpop.permute.xlu0 %4141
        %4143 = vrot.lane.b32.xlu0 %v3683, 124
        %v4144 = vpop.permute.xlu0 %4143
        %4145 = vrot.lane.b32.xlu0 %v3686, 124
        %v4146 = vpop.permute.xlu0 %4145
        %4147 = vrot.lane.b32.xlu0 %v3688, 124
        %v4148 = vpop.permute.xlu0 %4147
        %v4157 = vcombine.low %v4134, %v4142
        %v4158 = vcombine.high %v4134, %v4142
        %v4160 = vunpack.c.l.s4 1983009808
        %v4161 = vunpack.c.0.s8 %v4160
        %v4162 = vlaneseq
        %v4163 = vshrl.u32 %v4162, 7
        %v4164 = vsub.s32 %v4161, %v4163
        %v4165 = vrot.slane %v4157, %v4164
        %v4167 = vunpack.c.l.s4 1983009808
        %v4168 = vunpack.c.0.s8 %v4167
        %v4169 = vlaneseq
        %v4170 = vshrl.u32 %v4169, 7
        %v4171 = vsub.s32 %v4168, %v4170
        %v4172 = vrot.slane %v4158, %v4171
        %v4173 = vcombine.low %v4138, %v4146
        %v4174 = vcombine.high %v4138, %v4146
        %v4176 = vunpack.c.l.s4 1983009808
        %v4177 = vunpack.c.0.s8 %v4176
        %v4178 = vlaneseq
        %v4179 = vshrl.u32 %v4178, 7
        %v4180 = vsub.s32 %v4177, %v4179
        %v4181 = vrot.slane %v4173, %v4180
        %v4183 = vunpack.c.l.s4 1983009808
        %v4184 = vunpack.c.0.s8 %v4183
        %v4185 = vlaneseq
        %v4186 = vshrl.u32 %v4185, 7
        %v4187 = vsub.s32 %v4184, %v4186
        %v4188 = vrot.slane %v4174, %v4187
        %v4189 = vcombine.low %v4165, %v4181
        %v4190 = vcombine.high %v4165, %v4181
        %v4192 = vunpack.c.l.s4 1934713408
        %v4193 = vunpack.c.0.s8 %v4192
        %v4194 = vlaneseq
        %v4195 = vshrl.u32 %v4194, 7
        %v4196 = vsub.s32 %v4193, %v4195
        %v4197 = vrot.slane %v4189, %v4196
        %v4199 = vunpack.c.l.s4 1934713408
        %v4200 = vunpack.c.0.s8 %v4199
        %v4201 = vlaneseq
        %v4202 = vshrl.u32 %v4201, 7
        %v4203 = vsub.s32 %v4200, %v4202
        %v4204 = vrot.slane %v4190, %v4203
        %v4205 = vcombine.low %v4172, %v4188
        %v4206 = vcombine.high %v4172, %v4188
        %v4208 = vunpack.c.l.s4 1934713408
        %v4209 = vunpack.c.0.s8 %v4208
        %v4210 = vlaneseq
        %v4211 = vshrl.u32 %v4210, 7
        %v4212 = vsub.s32 %v4209, %v4211
        %v4213 = vrot.slane %v4205, %v4212
        %v4215 = vunpack.c.l.s4 1934713408
        %v4216 = vunpack.c.0.s8 %v4215
        %v4217 = vlaneseq
        %v4218 = vshrl.u32 %v4217, 7
        %v4219 = vsub.s32 %v4216, %v4218
        %v4220 = vrot.slane %v4206, %v4219
        %v4221 = vcombine.high %v4197, 0.0
        %v4222 = vcombine.high %v4204, 0.0
        %v4223 = vcombine.high %v4213, 0.0
        %v4224 = vcombine.high %v4220, 0.0
        %v4225 = vcombine.low %v4136, %v4144
        %v4226 = vcombine.high %v4136, %v4144
        %v4228 = vunpack.c.l.s4 1983009808
        %v4229 = vunpack.c.0.s8 %v4228
        %v4230 = vlaneseq
        %v4231 = vshrl.u32 %v4230, 7
        %v4232 = vsub.s32 %v4229, %v4231
        %v4233 = vrot.slane %v4225, %v4232
        %v4235 = vunpack.c.l.s4 1983009808
        %v4236 = vunpack.c.0.s8 %v4235
        %v4237 = vlaneseq
        %v4238 = vshrl.u32 %v4237, 7
        %v4239 = vsub.s32 %v4236, %v4238
        %v4240 = vrot.slane %v4226, %v4239
        %v4241 = vcombine.low %v4140, %v4148
        %v4242 = vcombine.high %v4140, %v4148
        %v4244 = vunpack.c.l.s4 1983009808
        %v4245 = vunpack.c.0.s8 %v4244
        %v4246 = vlaneseq
        %v4247 = vshrl.u32 %v4246, 7
        %v4248 = vsub.s32 %v4245, %v4247
        %v4249 = vrot.slane %v4241, %v4248
        %v4251 = vunpack.c.l.s4 1983009808
        %v4252 = vunpack.c.0.s8 %v4251
        %v4253 = vlaneseq
        %v4254 = vshrl.u32 %v4253, 7
        %v4255 = vsub.s32 %v4252, %v4254
        %v4256 = vrot.slane %v4242, %v4255
        %v4257 = vcombine.low %v4233, %v4249
        %v4258 = vcombine.high %v4233, %v4249
        %v4260 = vunpack.c.l.s4 1934713408
        %v4261 = vunpack.c.0.s8 %v4260
        %v4262 = vlaneseq
        %v4263 = vshrl.u32 %v4262, 7
        %v4264 = vsub.s32 %v4261, %v4263
        %v4265 = vrot.slane %v4257, %v4264
        %v4267 = vunpack.c.l.s4 1934713408
        %v4268 = vunpack.c.0.s8 %v4267
        %v4269 = vlaneseq
        %v4270 = vshrl.u32 %v4269, 7
        %v4271 = vsub.s32 %v4268, %v4270
        %v4272 = vrot.slane %v4258, %v4271
        %v4273 = vcombine.low %v4240, %v4256
        %v4274 = vcombine.high %v4240, %v4256
        %v4276 = vunpack.c.l.s4 1934713408
        %v4277 = vunpack.c.0.s8 %v4276
        %v4278 = vlaneseq
        %v4279 = vshrl.u32 %v4278, 7
        %v4280 = vsub.s32 %v4277, %v4279
        %v4281 = vrot.slane %v4273, %v4280
        %v4283 = vunpack.c.l.s4 1934713408
        %v4284 = vunpack.c.0.s8 %v4283
        %v4285 = vlaneseq
        %v4286 = vshrl.u32 %v4285, 7
        %v4287 = vsub.s32 %v4284, %v4286
        %v4288 = vrot.slane %v4274, %v4287
        %v4289 = vcombine.high %v4265, 0.0
        %v4290 = vcombine.high %v4272, 0.0
        %v4291 = vcombine.high %v4281, 0.0
        %v4292 = vcombine.high %v4288, 0.0
        %4294 = vrot.lane.b32.xlu0 %v4221, 16
        %v4295 = vpop.permute.xlu0 %4294
        %4298 = vrot.lane.b32.xlu0 %v4204, 32
        %v4299 = vpop.permute.xlu0 %4298
        %4302 = vrot.lane.b32.xlu0 %v4222, 48
        %v4303 = vpop.permute.xlu0 %4302
        %4306 = vrot.lane.b32.xlu0 %v4213, 64
        %v4307 = vpop.permute.xlu0 %4306
        %4310 = vrot.lane.b32.xlu0 %v4223, 80
        %v4311 = vpop.permute.xlu0 %4310
        %4314 = vrot.lane.b32.xlu0 %v4220, 96
        %v4315 = vpop.permute.xlu0 %4314
        %4318 = vrot.lane.b32.xlu0 %v4224, 112
        %v4319 = vpop.permute.xlu0 %4318
        %4322 = vrot.lane.b32.xlu0 %v4289, 16
        %v4323 = vpop.permute.xlu0 %4322
        %4326 = vrot.lane.b32.xlu0 %v4272, 32
        %v4327 = vpop.permute.xlu0 %4326
        %4330 = vrot.lane.b32.xlu0 %v4290, 48
        %v4331 = vpop.permute.xlu0 %4330
        %4334 = vrot.lane.b32.xlu0 %v4281, 64
        %v4335 = vpop.permute.xlu0 %4334
        %4338 = vrot.lane.b32.xlu0 %v4291, 80
        %v4339 = vpop.permute.xlu0 %4338
        %4342 = vrot.lane.b32.xlu0 %v4288, 96
        %v4343 = vpop.permute.xlu0 %4342
        %4346 = vrot.lane.b32.xlu0 %v4292, 112
        %v4347 = vpop.permute.xlu0 %4346
        %v4349 = vsel %vm623, %v4197, %v4295
        %v4350 = vsel %vm625, %v4349, %v4299
        %v4351 = vsel %vm627, %v4350, %v4303
        %v4352 = vsel %vm629, %v4351, %v4307
        %v4353 = vsel %vm631, %v4352, %v4311
        %v4354 = vsel %vm633, %v4353, %v4315
        %v4355 = vsel %vm635, %v4354, %v4319
        %v4356 = vsel %vm623, %v4265, %v4323
        %v4357 = vsel %vm625, %v4356, %v4327
        %v4358 = vsel %vm627, %v4357, %v4331
        %v4359 = vsel %vm629, %v4358, %v4335
        %v4360 = vsel %vm631, %v4359, %v4339
        %v4361 = vsel %vm633, %v4360, %v4343
        %v4362 = vsel %vm635, %v4361, %v4347
        %v4365 = vrot.slane %v2987, 4
        %v4366 = vrot.slane %v2994, 4
        %v4371 = vrot.slane %v3431, 4
        %v4372 = vrot.slane %v3438, 4
        %v4377 = vrot.slane %v3661, 4
        %v4378 = vrot.slane %v3668, 4
        %v4383 = vrot.slane %v4125, 4
        %v4384 = vrot.slane %v4132, 4
        %v4387 = vsel %vm2550, %v2757, %v4365
        %v4388 = vsel %vm2550, %v2764, %v4366
        %v4389 = vsel %vm2550, %v3217, %v4371
        %v4390 = vsel %vm2550, %v3224, %v4372
        %v4391 = vsel %vm2550, %v1577, %v4377
        %v4392 = vsel %vm2550, %v1584, %v4378
        %v4393 = vsel %vm2550, %v3895, %v4383
        %v4394 = vsel %vm2550, %v3902, %v4384
        %v4395 = vld [vmem:[%s1] sm:$0xf]
        %v4396 = vld [vmem:[%s2] sm:$0xf]
        %4398 = vset.pattern.permute.xlu0 0
        %4399 = vperm.xlu0 %4398, %v4396
        %v4400 = vpop.permute.xlu0 %4399
        %vm4402 = vcmask 293888
        %v4404 = vsel %vm4402, %v4395, 0
        %v4407 = vsel %vm2550, %v2518, 0
        %v4410 = vsel %vm2550, %v2525, 0
        %4412 = vmatprep.subr.mxu0 %v2552
        %4413 = vmatpush1.msra.mxu0 %v2551
        %4414 = vmatprep.subr.mxu0 %v2554
        %4415 = vmatpush1.msra.mxu0 %v2553
        %4416 = vmatprep.subr.mxu0 %v2556
        %4417 = vmatpush1.msra.mxu0 %v2555
        %4418 = vmatprep.subr.mxu0 %v2558
        %4419 = vmatpush1.msra.mxu0 %v2557
        %4420 = vmatprep.subr.mxu0 %v4410
        %4421 = vmatpush1.msra.mxu0 %v4407
        %4422 = vmatprep.subr.mxu0 0.0
        %4423 = vmatpush1.msra.mxu0 0.0
        %4424 = vmatprep.subr.mxu0 0.0
        %4425 = vmatpush1.msra.mxu0 0.0
        %4426 = vmatprep.subr.mxu0 0.0
        %4427 = vmatpush1.msra.mxu0 0.0
        %4428 = vmatprep.subr.mxu0 0.0
        %4429 = vmatpush1.msra.mxu0 0.0
        %4430 = vmatprep.subr.mxu0 0.0
        %4431 = vmatpush1.msra.mxu0 0.0
        %4432 = vmatprep.subr.mxu0 0.0
        %4433 = vmatpush1.msra.mxu0 0.0
        %4434 = vmatprep.subr.mxu0 0.0
        %4435 = vmatpush1.msra.mxu0 0.0
        %4436 = vmatprep.subr.mxu0 0.0
        %4437 = vmatpush1.msra.mxu0 0.0
        %4438 = vmatprep.subr.mxu0 0.0
        %4439 = vmatpush1.msra.mxu0 0.0
        %4440 = vmatprep.subr.mxu0 0.0
        %4441 = vmatpush1.msra.mxu0 0.0
        %4442 = vmatprep.subr.mxu0 0.0
        %4443 = vmatpush1.msra.mxu0 0.0
        %4444 = vmatprep.subr.mxu0 0.0
        %4445 = vmatpush1.msra.mxu0 0.0
        %4446 = vmatprep.subr.mxu0 0.0
        %4447 = vmatpush1.msra.mxu0 0.0
        %4448 = vmatprep.subr.mxu0 0.0
        %4449 = vmatpush1.msra.mxu0 0.0
        %4450 = vmatprep.subr.mxu0 0.0
        %4451 = vmatpush1.msra.mxu0 0.0
        %4452 = vmatprep.subr.mxu0 0.0
        %4453 = vmatpush1.msra.mxu0 0.0
        %4454 = vmatprep.subr.mxu0 0.0
        %4455 = vmatpush1.msra.mxu0 0.0
        %4456 = vmatprep.subr.mxu0 0.0
        %4457 = vmatpush1.msra.mxu0 0.0
        %4458 = vmatprep.subr.mxu0 0.0
        %4459 = vmatpush1.msra.mxu0 0.0
        %4460 = vmatprep.subr.mxu0 0.0
        %4461 = vmatpush1.msra.mxu0 0.0
        %4462 = vmatprep.subr.mxu0 0.0
        %4463 = vmatpush1.msra.mxu0 0.0
        %4464 = vmatprep.subr.mxu0 0.0
        %4465 = vmatpush1.msra.mxu0 0.0
        %4466 = vmatprep.subr.mxu0 0.0
        %4467 = vmatpush1.msra.mxu0 0.0
        %4468 = vmatprep.subr.mxu0 0.0
        %4469 = vmatpush1.msra.mxu0 0.0
        %4470 = vmatprep.subr.mxu0 0.0
        %4471 = vmatpush1.msra.mxu0 0.0
        %4472 = vmatprep.subr.mxu0 0.0
        %4473 = vmatpush1.msra.mxu0 0.0
        %4474 = vmatprep.subr.mxu0 0.0
        %4475 = vmatpush1.msra.mxu0 0.0
        %4476 = vmatprep.mubr.f32.mxu0 0.0
        %4477 = vmatmul.mubr.f32.gmra.mrb[0].mxu0 %v4404
        %v4478 = vpop.f32.mrb[0].mxu0
        %v4479 = vadd.f32 %v4400, %v4478
        %v4480 = vpop.f32.mrb[0].mxu0
        %v4481 = vadd.f32 %v4400, %v4480
        %4482 = vdwg.mxu0
        %v4483 = vld [vmem:[%s3] sm:$0xf]
        %v4484 = vld [vmem:[%s4] sm:$0xf]
        %4486 = vset.pattern.permute.xlu0 0
        %4487 = vperm.xlu0 %4486, %v4484
        %v4488 = vpop.permute.xlu0 %4487
        %v4491 = vsel %vm4402, %v4483, 0
        %v4494 = vsel %vm2550, %v4355, 0
        %v4497 = vsel %vm2550, %v4362, 0
        %4499 = vmatprep.subr.mxu0 %v4388
        %4500 = vmatpush1.msra.mxu0 %v4387
        %4501 = vmatprep.subr.mxu0 %v4390
        %4502 = vmatpush1.msra.mxu0 %v4389
        %4503 = vmatprep.subr.mxu0 %v4392
        %4504 = vmatpush1.msra.mxu0 %v4391
        %4505 = vmatprep.subr.mxu0 %v4394
        %4506 = vmatpush1.msra.mxu0 %v4393
        %4507 = vmatprep.subr.mxu0 %v4497
        %4508 = vmatpush1.msra.mxu0 %v4494
        %4509 = vmatprep.subr.mxu0 0.0
        %4510 = vmatpush1.msra.mxu0 0.0
        %4511 = vmatprep.subr.mxu0 0.0
        %4512 = vmatpush1.msra.mxu0 0.0
        %4513 = vmatprep.subr.mxu0 0.0
        %4514 = vmatpush1.msra.mxu0 0.0
        %4515 = vmatprep.subr.mxu0 0.0
        %4516 = vmatpush1.msra.mxu0 0.0
        %4517 = vmatprep.subr.mxu0 0.0
        %4518 = vmatpush1.msra.mxu0 0.0
        %4519 = vmatprep.subr.mxu0 0.0
        %4520 = vmatpush1.msra.mxu0 0.0
        %4521 = vmatprep.subr.mxu0 0.0
        %4522 = vmatpush1.msra.mxu0 0.0
        %4523 = vmatprep.subr.mxu0 0.0
        %4524 = vmatpush1.msra.mxu0 0.0
        %4525 = vmatprep.subr.mxu0 0.0
        %4526 = vmatpush1.msra.mxu0 0.0
        %4527 = vmatprep.subr.mxu0 0.0
        %4528 = vmatpush1.msra.mxu0 0.0
        %4529 = vmatprep.subr.mxu0 0.0
        %4530 = vmatpush1.msra.mxu0 0.0
        %4531 = vmatprep.subr.mxu0 0.0
        %4532 = vmatpush1.msra.mxu0 0.0
        %4533 = vmatprep.subr.mxu0 0.0
        %4534 = vmatpush1.msra.mxu0 0.0
        %4535 = vmatprep.subr.mxu0 0.0
        %4536 = vmatpush1.msra.mxu0 0.0
        %4537 = vmatprep.subr.mxu0 0.0
        %4538 = vmatpush1.msra.mxu0 0.0
        %4539 = vmatprep.subr.mxu0 0.0
        %4540 = vmatpush1.msra.mxu0 0.0
        %4541 = vmatprep.subr.mxu0 0.0
        %4542 = vmatpush1.msra.mxu0 0.0
        %4543 = vmatprep.subr.mxu0 0.0
        %4544 = vmatpush1.msra.mxu0 0.0
        %4545 = vmatprep.subr.mxu0 0.0
        %4546 = vmatpush1.msra.mxu0 0.0
        %4547 = vmatprep.subr.mxu0 0.0
        %4548 = vmatpush1.msra.mxu0 0.0
        %4549 = vmatprep.subr.mxu0 0.0
        %4550 = vmatpush1.msra.mxu0 0.0
        %4551 = vmatprep.subr.mxu0 0.0
        %4552 = vmatpush1.msra.mxu0 0.0
        %4553 = vmatprep.subr.mxu0 0.0
        %4554 = vmatpush1.msra.mxu0 0.0
        %4555 = vmatprep.subr.mxu0 0.0
        %4556 = vmatpush1.msra.mxu0 0.0
        %4557 = vmatprep.subr.mxu0 0.0
        %4558 = vmatpush1.msra.mxu0 0.0
        %4559 = vmatprep.subr.mxu0 0.0
        %4560 = vmatpush1.msra.mxu0 0.0
        %4561 = vmatprep.subr.mxu0 0.0
        %4562 = vmatpush1.msra.mxu0 0.0
        %4563 = vmatprep.mubr.f32.mxu0 0.0
        %4564 = vmatmul.mubr.f32.gmra.mrb[0].mxu0 %v4491
        %v4565 = vpop.f32.mrb[0].mxu0
        %v4566 = vadd.f32 %v4488, %v4565
        %v4567 = vpop.f32.mrb[0].mxu0
        %v4568 = vadd.f32 %v4488, %v4567
        %4569 = vdwg.mxu0
        %vm4570 = vcmp.gt.f32.partialorder %v4479, 0.0
        %vm4571 = vcmp.gt.f32.partialorder %v4481, 0.0
        %v4572 = vmul.f32 %v4479, 0.01
        %v4573 = vmul.f32 %v4481, 0.01
        %v4574 = vsel %vm4570, %v4479, %v4572
        %v4575 = vsel %vm4571, %v4481, %v4573
        %vm4576 = vcmp.gt.f32.partialorder %v4566, 0.0
        %vm4577 = vcmp.gt.f32.partialorder %v4568, 0.0
        %v4578 = vmul.f32 %v4566, 0.01
        %v4579 = vmul.f32 %v4568, 0.01
        %v4580 = vsel %vm4576, %v4566, %v4578
        %v4581 = vsel %vm4577, %v4568, %v4579
        %v4582 = vadd.f32 %v4574, %v4580
        %v4583 = vadd.f32 %v4575, %v4581
        %v4584 = vld [vmem:[%s5] sm:$0xf]
        %v4585 = vld [vmem:[%s6] sm:$0xf]
        %4587 = vset.pattern.permute.xlu0 0
        %4588 = vperm.xlu0 %4587, %v4585
        %v4589 = vpop.permute.xlu0 %4588
        %vm4591 = vcmask 31744
        %v4593 = vsel %vm4591, %v4584, 0
        %v4596 = vsel %vm2550, %v4582, 0
        %v4599 = vsel %vm2550, %v4583, 0
        %4601 = vmatprep.subr.mxu0 %v4599
        %4602 = vmatpush1.msra.mxu0 %v4596
        %4603 = vmatprep.subr.mxu0 0.0
        %4604 = vmatpush1.msra.mxu0 0.0
        %4605 = vmatprep.subr.mxu0 0.0
        %4606 = vmatpush1.msra.mxu0 0.0
        %4607 = vmatprep.subr.mxu0 0.0
        %4608 = vmatpush1.msra.mxu0 0.0
        %4609 = vmatprep.subr.mxu0 0.0
        %4610 = vmatpush1.msra.mxu0 0.0
        %4611 = vmatprep.subr.mxu0 0.0
        %4612 = vmatpush1.msra.mxu0 0.0
        %4613 = vmatprep.subr.mxu0 0.0
        %4614 = vmatpush1.msra.mxu0 0.0
        %4615 = vmatprep.subr.mxu0 0.0
        %4616 = vmatpush1.msra.mxu0 0.0
        %4617 = vmatprep.subr.mxu0 0.0
        %4618 = vmatpush1.msra.mxu0 0.0
        %4619 = vmatprep.subr.mxu0 0.0
        %4620 = vmatpush1.msra.mxu0 0.0
        %4621 = vmatprep.subr.mxu0 0.0
        %4622 = vmatpush1.msra.mxu0 0.0
        %4623 = vmatprep.subr.mxu0 0.0
        %4624 = vmatpush1.msra.mxu0 0.0
        %4625 = vmatprep.subr.mxu0 0.0
        %4626 = vmatpush1.msra.mxu0 0.0
        %4627 = vmatprep.subr.mxu0 0.0
        %4628 = vmatpush1.msra.mxu0 0.0
        %4629 = vmatprep.subr.mxu0 0.0
        %4630 = vmatpush1.msra.mxu0 0.0
        %4631 = vmatprep.subr.mxu0 0.0
        %4632 = vmatpush1.msra.mxu0 0.0
        %4633 = vmatprep.subr.mxu0 0.0
        %4634 = vmatpush1.msra.mxu0 0.0
        %4635 = vmatprep.subr.mxu0 0.0
        %4636 = vmatpush1.msra.mxu0 0.0
        %4637 = vmatprep.subr.mxu0 0.0
        %4638 = vmatpush1.msra.mxu0 0.0
        %4639 = vmatprep.subr.mxu0 0.0
        %4640 = vmatpush1.msra.mxu0 0.0
        %4641 = vmatprep.subr.mxu0 0.0
        %4642 = vmatpush1.msra.mxu0 0.0
        %4643 = vmatprep.subr.mxu0 0.0
        %4644 = vmatpush1.msra.mxu0 0.0
        %4645 = vmatprep.subr.mxu0 0.0
        %4646 = vmatpush1.msra.mxu0 0.0
        %4647 = vmatprep.subr.mxu0 0.0
        %4648 = vmatpush1.msra.mxu0 0.0
        %4649 = vmatprep.subr.mxu0 0.0
        %4650 = vmatpush1.msra.mxu0 0.0
        %4651 = vmatprep.subr.mxu0 0.0
        %4652 = vmatpush1.msra.mxu0 0.0
        %4653 = vmatprep.subr.mxu0 0.0
        %4654 = vmatpush1.msra.mxu0 0.0
        %4655 = vmatprep.subr.mxu0 0.0
        %4656 = vmatpush1.msra.mxu0 0.0
        %4657 = vmatprep.subr.mxu0 0.0
        %4658 = vmatpush1.msra.mxu0 0.0
        %4659 = vmatprep.subr.mxu0 0.0
        %4660 = vmatpush1.msra.mxu0 0.0
        %4661 = vmatprep.subr.mxu0 0.0
        %4662 = vmatpush1.msra.mxu0 0.0
        %4663 = vmatprep.subr.mxu0 0.0
        %4664 = vmatpush1.msra.mxu0 0.0
        %4665 = vmatprep.mubr.f32.mxu0 0.0
        %4666 = vmatmul.mubr.f32.gmra.mrb[0].mxu0 %v4593
        %v4667 = vpop.f32.mrb[0].mxu0
        %v4668 = vadd.f32 %v4589, %v4667
        %v4669 = vpop.f32.mrb[0].mxu0
        %v4670 = vadd.f32 %v4589, %v4669
        %4671 = vdwg.mxu0
        %v4672 = vcombine.low %v299, %v303
        %v4673 = vcombine.high %v299, %v303
        %v4675 = vunpack.c.l.s4 1983009808
        %v4676 = vunpack.c.0.s8 %v4675
        %v4677 = vlaneseq
        %v4678 = vshrl.u32 %v4677, 7
        %v4679 = vsub.s32 %v4676, %v4678
        %v4680 = vrot.slane %v4672, %v4679
        %v4682 = vunpack.c.l.s4 1983009808
        %v4683 = vunpack.c.0.s8 %v4682
        %v4684 = vlaneseq
        %v4685 = vshrl.u32 %v4684, 7
        %v4686 = vsub.s32 %v4683, %v4685
        %v4687 = vrot.slane %v4673, %v4686
        %v4688 = vcombine.low %v301, %v305
        %v4689 = vcombine.high %v301, %v305
        %v4691 = vunpack.c.l.s4 1983009808
        %v4692 = vunpack.c.0.s8 %v4691
        %v4693 = vlaneseq
        %v4694 = vshrl.u32 %v4693, 7
        %v4695 = vsub.s32 %v4692, %v4694
        %v4696 = vrot.slane %v4688, %v4695
        %v4698 = vunpack.c.l.s4 1983009808
        %v4699 = vunpack.c.0.s8 %v4698
        %v4700 = vlaneseq
        %v4701 = vshrl.u32 %v4700, 7
        %v4702 = vsub.s32 %v4699, %v4701
        %v4703 = vrot.slane %v4689, %v4702
        %v4704 = vcombine.low %v4680, %v4696
        %v4705 = vcombine.high %v4680, %v4696
        %v4707 = vunpack.c.l.s4 1934713408
        %v4708 = vunpack.c.0.s8 %v4707
        %v4709 = vlaneseq
        %v4710 = vshrl.u32 %v4709, 7
        %v4711 = vsub.s32 %v4708, %v4710
        %v4712 = vrot.slane %v4704, %v4711
        %v4714 = vunpack.c.l.s4 1934713408
        %v4715 = vunpack.c.0.s8 %v4714
        %v4716 = vlaneseq
        %v4717 = vshrl.u32 %v4716, 7
        %v4718 = vsub.s32 %v4715, %v4717
        %v4719 = vrot.slane %v4705, %v4718
        %v4720 = vcombine.low %v4687, %v4703
        %v4721 = vcombine.high %v4687, %v4703
        %v4723 = vunpack.c.l.s4 1934713408
        %v4724 = vunpack.c.0.s8 %v4723
        %v4725 = vlaneseq
        %v4726 = vshrl.u32 %v4725, 7
        %v4727 = vsub.s32 %v4724, %v4726
        %v4728 = vrot.slane %v4720, %v4727
        %v4730 = vunpack.c.l.s4 1934713408
        %v4731 = vunpack.c.0.s8 %v4730
        %v4732 = vlaneseq
        %v4733 = vshrl.u32 %v4732, 7
        %v4734 = vsub.s32 %v4731, %v4733
        %v4735 = vrot.slane %v4721, %v4734
        %v4736 = vcombine.high %v4712, 0.0
        %v4737 = vcombine.high %v4719, 0.0
        %v4738 = vcombine.high %v4728, 0.0
        %v4739 = vcombine.high %v4735, 0.0
        %v4740 = vcombine.low %v300, %v304
        %v4741 = vcombine.high %v300, %v304
        %v4743 = vunpack.c.l.s4 1983009808
        %v4744 = vunpack.c.0.s8 %v4743
        %v4745 = vlaneseq
        %v4746 = vshrl.u32 %v4745, 7
        %v4747 = vsub.s32 %v4744, %v4746
        %v4748 = vrot.slane %v4740, %v4747
        %v4750 = vunpack.c.l.s4 1983009808
        %v4751 = vunpack.c.0.s8 %v4750
        %v4752 = vlaneseq
        %v4753 = vshrl.u32 %v4752, 7
        %v4754 = vsub.s32 %v4751, %v4753
        %v4755 = vrot.slane %v4741, %v4754
        %v4756 = vcombine.low %v302, %v306
        %v4757 = vcombine.high %v302, %v306
        %v4759 = vunpack.c.l.s4 1983009808
        %v4760 = vunpack.c.0.s8 %v4759
        %v4761 = vlaneseq
        %v4762 = vshrl.u32 %v4761, 7
        %v4763 = vsub.s32 %v4760, %v4762
        %v4764 = vrot.slane %v4756, %v4763
        %v4766 = vunpack.c.l.s4 1983009808
        %v4767 = vunpack.c.0.s8 %v4766
        %v4768 = vlaneseq
        %v4769 = vshrl.u32 %v4768, 7
        %v4770 = vsub.s32 %v4767, %v4769
        %v4771 = vrot.slane %v4757, %v4770
        %v4772 = vcombine.low %v4748, %v4764
        %v4773 = vcombine.high %v4748, %v4764
        %v4775 = vunpack.c.l.s4 1934713408
        %v4776 = vunpack.c.0.s8 %v4775
        %v4777 = vlaneseq
        %v4778 = vshrl.u32 %v4777, 7
        %v4779 = vsub.s32 %v4776, %v4778
        %v4780 = vrot.slane %v4772, %v4779
        %v4782 = vunpack.c.l.s4 1934713408
        %v4783 = vunpack.c.0.s8 %v4782
        %v4784 = vlaneseq
        %v4785 = vshrl.u32 %v4784, 7
        %v4786 = vsub.s32 %v4783, %v4785
        %v4787 = vrot.slane %v4773, %v4786
        %v4788 = vcombine.low %v4755, %v4771
        %v4789 = vcombine.high %v4755, %v4771
        %v4791 = vunpack.c.l.s4 1934713408
        %v4792 = vunpack.c.0.s8 %v4791
        %v4793 = vlaneseq
        %v4794 = vshrl.u32 %v4793, 7
        %v4795 = vsub.s32 %v4792, %v4794
        %v4796 = vrot.slane %v4788, %v4795
        %v4798 = vunpack.c.l.s4 1934713408
        %v4799 = vunpack.c.0.s8 %v4798
        %v4800 = vlaneseq
        %v4801 = vshrl.u32 %v4800, 7
        %v4802 = vsub.s32 %v4799, %v4801
        %v4803 = vrot.slane %v4789, %v4802
        %v4804 = vcombine.high %v4780, 0.0
        %v4805 = vcombine.high %v4787, 0.0
        %v4806 = vcombine.high %v4796, 0.0
        %v4807 = vcombine.high %v4803, 0.0
        %4809 = vrot.lane.b32.xlu0 %v4736, 16
        %v4810 = vpop.permute.xlu0 %4809
        %4813 = vrot.lane.b32.xlu0 %v4719, 32
        %v4814 = vpop.permute.xlu0 %4813
        %4817 = vrot.lane.b32.xlu0 %v4737, 48
        %v4818 = vpop.permute.xlu0 %4817
        %4821 = vrot.lane.b32.xlu0 %v4728, 64
        %v4822 = vpop.permute.xlu0 %4821
        %4825 = vrot.lane.b32.xlu0 %v4738, 80
        %v4826 = vpop.permute.xlu0 %4825
        %4829 = vrot.lane.b32.xlu0 %v4735, 96
        %v4830 = vpop.permute.xlu0 %4829
        %4833 = vrot.lane.b32.xlu0 %v4739, 112
        %v4834 = vpop.permute.xlu0 %4833
        %4837 = vrot.lane.b32.xlu0 %v4804, 16
        %v4838 = vpop.permute.xlu0 %4837
        %4841 = vrot.lane.b32.xlu0 %v4787, 32
        %v4842 = vpop.permute.xlu0 %4841
        %4845 = vrot.lane.b32.xlu0 %v4805, 48
        %v4846 = vpop.permute.xlu0 %4845
        %4849 = vrot.lane.b32.xlu0 %v4796, 64
        %v4850 = vpop.permute.xlu0 %4849
        %4853 = vrot.lane.b32.xlu0 %v4806, 80
        %v4854 = vpop.permute.xlu0 %4853
        %4857 = vrot.lane.b32.xlu0 %v4803, 96
        %v4858 = vpop.permute.xlu0 %4857
        %4861 = vrot.lane.b32.xlu0 %v4807, 112
        %v4862 = vpop.permute.xlu0 %4861
        %v4864 = vsel %vm623, %v4712, %v4810
        %v4865 = vsel %vm625, %v4864, %v4814
        %v4866 = vsel %vm627, %v4865, %v4818
        %v4867 = vsel %vm629, %v4866, %v4822
        %v4868 = vsel %vm631, %v4867, %v4826
        %v4869 = vsel %vm633, %v4868, %v4830
        %v4870 = vsel %vm635, %v4869, %v4834
        %v4871 = vsel %vm623, %v4780, %v4838
        %v4872 = vsel %vm625, %v4871, %v4842
        %v4873 = vsel %vm627, %v4872, %v4846
        %v4874 = vsel %vm629, %v4873, %v4850
        %v4875 = vsel %vm631, %v4874, %v4854
        %v4876 = vsel %vm633, %v4875, %v4858
        %v4877 = vsel %vm635, %v4876, %v4862
        %v4878 = vadd.f32 %v4668, %v4870
        %v4879 = vadd.f32 %v4670, %v4877
        %v4882 = vcombine.low %v4878, %v4879
        %4884 = vst [vmem:[%s298] sm:$0xff] %v4882
        %p4885 = scmp.lt.s32.totalorder %s21, 1
        %s4886 = scalar_select %p4885, %s21, 1
        %s4887 = smul.addr %s4886, 2
        %s4888 = smul.addr %s4887, 4
        %s4889 = scalar_lea.vmem %s7, %s4888
        // Predicated region
        $region53: #{ms_rb_forward.1} parent=47 // pred_check
          %p4890 = pneg %p191
        $region54: #{ms_rb_forward.1} parent=47 // pred_check_branch
          %4892 = sbr.rel (%p4890) target = $region56
        $region55: #{ms_rb_forward.1} parent=47 // pred_region
          _
        $region56: #{ms_rb_forward.1} parent=47 // pred_fallthru
          _
      $region48: #{ms_rb_forward.1} parent=5 // pred_fallthru
        _
      %p4893 = scmp.le.s32.totalorder 2, %s16
      // Predicated region
      $region57: #{ms_rb_forward.1} parent=5 // pred_check
        %p4894 = pneg %p4893
      $region58: #{ms_rb_forward.1} parent=5 // pred_check_branch
        %4896 = sbr.rel (%p4894) target = $region60
      $region59: #{ms_rb_forward.1} parent=5 // pred_region
        %s4897 = ssub.s32 %s16, 2
        // Predicated region
        $region61: #{ms_rb_forward.1} parent=59 // pred_check
          %p4898 = pneg %p197
        $region62: #{ms_rb_forward.1} parent=59 // pred_check_branch
          %4900 = sbr.rel (%p4898) target = $region64
        $region63: #{ms_rb_forward.1} parent=59 // pred_region
          %p4901 = scmp.lt.s32.totalorder %s22, 1
          %s4902 = scalar_select %p4901, %s22, 1
          %s4903 = smul.addr %s4902, 2
          %s4904 = smul.addr %s4903, 4
          %s4905 = scalar_lea.vmem %s7, %s4904
        $region64: #{ms_rb_forward.1} parent=59 // pred_fallthru
          _
      $region60: #{ms_rb_forward.1} parent=5 // pred_fallthru
        _
    $region6: #{ms_rb_forward.1} parent=1 // loop_footer
      %s20 = sadd.s32 1, %s16
    $region7: #{ms_rb_forward.1} parent=1 // loop_footer_branch
      %15 = sbr.rel target = $region3
    $region8: #{ms_rb_forward.1} parent=1 // loop_exit
      _
    %4906 = vsyncpa [#allocation4], 1
    %s4907 = scalar_lea.sflag [#allocation4], 1
    %4908 = vsyncpa %s4907, 1

</llo_original>
